<compile_context>
chip_gen: v6e
topology: v6e:2x2x1
jax: 0.10.0
libtpu: 0.0.40
codegen_flags: <defaults>
</compile_context>

<pallas_src>
import math
import functools

import jax
import jax.numpy as jnp
import numpy as np
from jax.experimental import pallas as pl
from jax.experimental.pallas import tpu as pltpu


def _l2_attn_kernel(*refs, num_heads, head_dim_padded, scale_q, scale_k,
                    tiled_q, lp_exp):
    """One grid step = one (batch b, query-block qi) pair; all heads in-kernel.

    refs (tiled_q=True):  xq_ref (1,TQ,E), xk_ref (1,T,E), wq_ref (E,H*Dp),
                          b_ref (H,E,E), bias_ref (1,E), out_ref (1,TQ,E)
    refs (tiled_q=False): xk_ref (1,T,E),  wq_ref, b_ref, bias_ref, out_ref (1,T,E)
    """
    if tiled_q:
        xq_ref, xk_ref, wq_ref, b_ref, bias_ref, out_ref = refs
    else:
        xk_ref, wq_ref, b_ref, bias_ref, out_ref = refs

    H, Dp = num_heads, head_dim_padded
    xk = xk_ref[0]                               # (T, E), caller dtype (f32 or bf16)
    dtype = xk.dtype
    wq = wq_ref[...]                             # (E, H*Dp), head-folded, lane-padded

    # ---- head-invariant preamble (once per grid step) ----
    # One dense projection for all heads (q and k share weights in this module).
    k_all = jnp.dot(xk, wq, preferred_element_type=jnp.float32)       # (T, H*Dp) f32
    k_lp = k_all.astype(dtype)                                        # MXU operand copy

    # Per-head |k_s|^2 rows, pre-scaled by 1/sqrt(D).  The |q_t|^2 row term is a
    # per-query constant and drops out of the softmax, so it is omitted.
    # Slices are 128-lane aligned because Dp is a multiple of 128.
    ksq_rows = [
        jnp.transpose(
            jnp.sum(jnp.square(k_all[:, h * Dp:(h + 1) * Dp]),
                    axis=-1, keepdims=True)) * scale_k                 # (1, T) f32
        for h in range(H)
    ]

    if tiled_q:
        q_all = jnp.dot(xq_ref[0], wq, preferred_element_type=jnp.float32)
    else:
        q_all = k_all
    # Fold the 2/sqrt(D) logits scale into q: a (TQ,H*Dp) multiply instead of a
    # (TQ,T) multiply per head.
    q_lp = (q_all * scale_q).astype(dtype)                             # (TQ, H*Dp)

    tq = q_lp.shape[0]
    E = xk.shape[1]
    acc = jnp.zeros((tq, E), jnp.float32)

    # TODO(synk): for very large H a fori_loop over heads (with q/k staged per-head in
    # VMEM scratch) would bound live ranges; the static unroll is fine for typical H.
    for h in range(H):
        sl = slice(h * Dp, (h + 1) * Dp)
        # logits = (2 q.k - |k|^2) / sqrt(D); scales already folded into q / ksq_rows.
        gram = jax.lax.dot_general(q_lp[:, sl], k_lp[:, sl],
                                   (((1,), (1,)), ((), ())),
                                   preferred_element_type=jnp.float32)  # (TQ, T) f32
        logits = gram - ksq_rows[h]
        m = jnp.max(logits, axis=-1, keepdims=True)
        z = logits - m
        if lp_exp:
            # bf16 EUP rate on v6e/v7x; e is fed to the MXU in bf16 anyway.
            e = jnp.exp(z.astype(jnp.bfloat16))
            denom = jnp.sum(e, axis=-1, keepdims=True, dtype=jnp.float32)
        else:
            e = jnp.exp(z)
            denom = jnp.sum(e, axis=-1, keepdims=True)

        # Value path reordered to (attn @ x) @ B_h -- no query-block-invariant
        # x @ B_h recompute.  Softmax normalization deferred to the (TQ,E) plane.
        pxa = jnp.dot(e.astype(dtype), xk,
                      preferred_element_type=jnp.float32)               # (TQ, E) f32
        pxa = pxa * pl.reciprocal(denom, approx=True)
        acc = acc + jnp.dot(pxa.astype(dtype), b_ref[h],
                            preferred_element_type=jnp.float32)         # (TQ, E) f32

    out_ref[0] = (acc + bias_ref[...]).astype(out_ref.dtype)


def _vmem_capacity_bytes(default=64 * 1024 * 1024):
    """Physical VMEM per core; conservative default if the query fails."""
    try:
        info = pltpu.get_tpu_info()
        cap = int(getattr(info, "vmem_capacity_bytes", 0))
        if cap > 0:
            return cap
    except Exception:
        pass
    return default


def _estimate_vmem_bytes(T, tq, E, HDp, H, itemsize, tiled_q,
                         const_bufs=1, key_bufs=2):
    """Rough per-grid-step VMEM footprint (pipelined blocks + in-kernel temporaries)."""
    f32 = 4
    pipe = key_bufs * T * E * itemsize                       # key/value slab
    pipe += 2 * tq * E * itemsize                            # output block
    if tiled_q:
        pipe += 2 * tq * E * itemsize                        # query block
    pipe += const_bufs * (E * HDp + H * E * E + E) * itemsize  # wq, B, bias
    tmp = T * HDp * (f32 + itemsize)                         # k_all f32 + k_lp
    tmp += tq * HDp * (itemsize + (f32 if tiled_q else 0))   # q_lp (+ q_all f32)
    tmp += H * T * f32                                       # |k|^2 rows
    tmp += 3 * tq * T * f32                                  # logits / exp plane + slack
    tmp += 3 * tq * E * f32                                  # pxa / acc
    return pipe + tmp


def l2_multihead_attention(x_tne, q_weight, v_weight, out_w, out_b, num_heads,
                           *, q_block=None, lp_exp=None):
    """Pallas implementation of L2MultiheadAttention.forward.

    x_tne    : (T, N, E)   -- PyTorch layout (seq, batch, embed)
    q_weight : (E, H, D)
    v_weight : (E, H, D)
    out_w    : (E, E)      -- nn.Linear weight (y = z @ W^T + b)
    out_b    : (E,)
    """
    T, N, E = x_tne.shape
    H = num_heads
    D = E // H
    assert D * H == E, "embed_dim must be divisible by num_heads"

    dtype = x_tne.dtype
    itemsize = jnp.dtype(dtype).itemsize
    if lp_exp is None:
        # TODO(synk): keep f32 exp on v5e (no bf16 EUP) when the generation is known.
        lp_exp = jnp.dtype(dtype) == jnp.dtype(jnp.bfloat16)

    # ---- head-constant weight prep (tiny; hoisted out of the kernel) ----
    qw = q_weight.astype(jnp.float32)                                  # (E, H, D)
    vw = v_weight.astype(jnp.float32)
    wo = jnp.transpose(out_w.astype(jnp.float32)).reshape(H, D, E)     # W_out^T per head
    A = jnp.einsum('mhd,nhd->hmn', qw, qw) / math.sqrt(D)              # (H, E, E)
    C = jnp.einsum('nhd,hde->hne', vw, wo)                             # (H, E, E) Wv_h @ Wo_h
    B = jnp.einsum('hmn,hne->hme', A, C).astype(dtype)                 # fused value weights

    # Lane-align per-head slices: pad head_dim to a multiple of 128 (zero columns are
    # exact no-ops for the gram and |k|^2 terms).
    Dp = D if D % 128 == 0 else ((D + 127) // 128) * 128
    qw_pad = qw if Dp == D else jnp.pad(qw, ((0, 0), (0, 0), (0, Dp - D)))
    wq_full = qw_pad.reshape(E, H * Dp).astype(dtype)                  # head-folded q/k proj
    bias = out_b.astype(jnp.float32).reshape(1, E)

    # Batch-major for the kernel.
    # TODO(synk): drop both transposes if the surrounding model is already batch-major.
    x_nte = jnp.transpose(x_tne, (1, 0, 2))                            # (N, T, E)

    # ---- VMEM-aware query-block planning (v7x: 64 MiB, v5e/v6e: 128 MiB) ----
    vmem_cap = _vmem_capacity_bytes()
    vmem_limit = max(32 * 1024 * 1024,
                     min(vmem_cap - 2 * 1024 * 1024, int(vmem_cap * 0.95)))
    budget = int(vmem_limit * 0.8)
    if (q_block is not None and q_block <= T and T % q_block == 0
            and (q_block == T or q_block % 8 == 0)):
        tq = q_block
    else:
        cands = sorted({c for c in (T, 512, 256, 128) if c <= T and T % c == 0},
                       reverse=True)
        tq = cands[-1]
        for c in cands:
            if _estimate_vmem_bytes(T, c, E, H * Dp, H, itemsize, c != T) <= budget:
                tq = c
                break
        # TODO(synk): if even the smallest tq exceeds the budget (very long T on v7x),
        # key-axis online-softmax tiling is required; not implemented.
    tiled_q = tq != T
    n_q = T // tq

    kernel = functools.partial(
        _l2_attn_kernel, num_heads=H, head_dim_padded=Dp,
        scale_q=2.0 / math.sqrt(D), scale_k=1.0 / math.sqrt(D),
        tiled_q=tiled_q, lp_exp=lp_exp)

    def build_call(buffered_consts):
        # Constant-index operands: their block index never changes, so single-buffer
        # them (halves B's VMEM footprint -- the difference maker on v7x's 64 MiB).
        ckw = dict(pipeline_mode=pl.Buffered(1)) if buffered_consts else {}
        in_specs = []
        if tiled_q:
            in_specs.append(pl.BlockSpec((1, tq, E), lambda b, qi: (b, qi, 0)))
        in_specs += [
            pl.BlockSpec((1, T, E), lambda b, qi: (b, 0, 0)),           # keys, per batch
            pl.BlockSpec((E, H * Dp), lambda b, qi: (0, 0), **ckw),     # wq (head-folded)
            pl.BlockSpec((H, E, E), lambda b, qi: (0, 0, 0), **ckw),    # fused B_h
            pl.BlockSpec((1, E), lambda b, qi: (0, 0), **ckw),          # out-proj bias
        ]
        return pl.pallas_call(
            kernel,
            out_shape=jax.ShapeDtypeStruct((N, T, E), dtype),
            grid_spec=pltpu.PrefetchScalarGridSpec(
                num_scalar_prefetch=0,
                grid=(N, n_q),
                in_specs=in_specs,
                out_specs=pl.BlockSpec((1, tq, E), lambda b, qi: (b, qi, 0)),
            ),
            compiler_params=pltpu.CompilerParams(
                dimension_semantics=("parallel", "parallel"),
                vmem_limit_bytes=vmem_limit),
        )

    inputs = ([x_nte] if tiled_q else []) + [x_nte, wq_full, B, bias]
    try:
        out_nte = build_call(True)(*inputs)
    except Exception:
        # pipeline_mode=pl.Buffered(1) unsupported on this jax/Mosaic build -> fall back
        # to default (double) buffering; correctness is unaffected.
        out_nte = build_call(False)(*inputs)

    return jnp.transpose(out_nte, (1, 0, 2))                           # (T, N, E)


def l2_multihead_attention_ref(x, q_weight, v_weight, out_w, out_b, num_heads):
    """Pure-JAX mirror of the PyTorch forward (for correctness check)."""
    T, N, E = x.shape
    D = E // num_heads
    q = jnp.einsum('tbm,mhd->tbhd', x, q_weight)
    k = jnp.einsum('tbm,mhd->tbhd', x, q_weight)
    sq = (jnp.einsum('tbhd,tbhd->tbh', q, q)[:, None] +
          jnp.einsum('sbhd,sbhd->sbh', k, k)[None, :] -
          2.0 * jnp.einsum('tbhd,sbhd->tsbh', q, k))
    logits = -sq / math.sqrt(D)
    attn = jax.nn.softmax(logits, axis=1)
    A = jnp.einsum('mhd,nhd->hmn', q_weight, q_weight) / math.sqrt(D)
    XA = jnp.einsum('tbm,hmn->tbhn', x, A)
    PXA = jnp.einsum('tsbh,sbhm->tbhm', attn, XA)
    PXAV = jnp.einsum('tbhm,mhd->tbhd', PXA, v_weight).reshape(T, N, E)
    return PXAV @ out_w.T + out_b


if __name__ == "__main__":
    def run_case(T, N, E, H, dtype, rtol, atol, q_block=None):
        D = E // H
        key = jax.random.PRNGKey(0)
        kx, kq, kv, kw, kb = jax.random.split(key, 5)
        # NOTE: the PyTorch __init__ zero-inits all params (degenerate output);
        # deterministic non-zero values are used so the kernel is actually exercised.
        x = jax.random.normal(kx, (T, N, E), dtype=jnp.float32)
        q_weight = 0.1 * jax.random.normal(kq, (E, H, D), dtype=jnp.float32)
        v_weight = 0.1 * jax.random.normal(kv, (E, H, D), dtype=jnp.float32)
        out_w = 0.1 * jax.random.normal(kw, (E, E), dtype=jnp.float32)
        out_b = 0.1 * jax.random.normal(kb, (E,), dtype=jnp.float32)

        ref = l2_multihead_attention_ref(x, q_weight, v_weight, out_w, out_b, H)
        out = l2_multihead_attention(x.astype(dtype), q_weight, v_weight,
                                     out_w, out_b, H, q_block=q_block)
        out = jax.block_until_ready(out)
        np.testing.assert_allclose(np.asarray(out, dtype=np.float32),
                                   np.asarray(ref), rtol=rtol, atol=atol)

    # Small shapes consistent with the module: (seq, batch, embed), heads.
    run_case(T=16, N=2, E=32, H=4, dtype=jnp.float32, rtol=2e-3, atol=2e-3)
    # bf16 path (bf16 MXU operands, bf16 exp; f32 accumulation throughout).
    run_case(T=16, N=2, E=32, H=4, dtype=jnp.bfloat16, rtol=5e-2, atol=2e-2)
    # Exercises the query-block-tiled path (tq=128 < T) and 8-head padding (D=8 -> 128).
    run_case(T=256, N=1, E=64, H=8, dtype=jnp.float32, rtol=3e-3, atol=3e-3,
             q_block=128)

    print("KERNEL_OK")
</pallas_src>

<mosaic_0001>
module attributes {stable_mosaic.version = 11 : i64} {
  func.func @_l2_attn_kernel(%arg0: i32, %arg1: i32, %arg2: memref<1x16x32xf32, #tpu.memory_space<vmem>>, %arg3: memref<32x512xf32, #tpu.memory_space<vmem>>, %arg4: memref<4x32x32xf32, #tpu.memory_space<vmem>>, %arg5: memref<1x32xf32, #tpu.memory_space<vmem>>, %arg6: memref<1x16x32xf32, #tpu.memory_space<vmem>>) attributes {dimension_semantics = [#tpu.dimension_semantics<parallel>, #tpu.dimension_semantics<parallel>], iteration_bounds = array<i64: 2, 1>, scalar_prefetch = 0 : i64, scratch_operands = 0 : i64, tpu.core_type = #tpu.core_type<tc>, window_params = [{transform_indices = @transform_0, window_bounds = array<i64: 1, 16, 32>}, {pipeline_mode = #tpu.pipeline_mode<synchronous>, transform_indices = @transform_1, window_bounds = array<i64: 32, 512>}, {pipeline_mode = #tpu.pipeline_mode<synchronous>, transform_indices = @transform_2, window_bounds = array<i64: 4, 32, 32>}, {pipeline_mode = #tpu.pipeline_mode<synchronous>, transform_indices = @transform_3, window_bounds = array<i64: 1, 32>}, {transform_indices = @transform_4, window_bounds = array<i64: 1, 16, 32>}]} {
    %c0 = arith.constant 0 : index
    %c0_0 = arith.constant 0 : index
    %c0_1 = arith.constant 0 : index
    %0 = vector.load %arg2[%c0, %c0_0, %c0_1] : memref<1x16x32xf32, #tpu.memory_space<vmem>>, vector<1x16x32xf32>
    %1 = vector.shape_cast %0 : vector<1x16x32xf32> to vector<16x32xf32>
    %c0_2 = arith.constant 0 : index
    %c0_3 = arith.constant 0 : index
    %2 = vector.load %arg3[%c0_2, %c0_3] : memref<32x512xf32, #tpu.memory_space<vmem>>, vector<32x512xf32>
    %cst = arith.constant dense<0.000000e+00> : vector<16x512xf32>
    %3 = tpu.matmul %1, %2, %cst {dimension_numbers = #tpu.dot_dimension_numbers<[1], [0], [0], [1], [0, 0, 1, 1], [], []>} : vector<16x32xf32>, vector<32x512xf32>, vector<16x512xf32> -> vector<16x512xf32>
    %4 = vector.extract_strided_slice %3 {offsets = [0, 0], sizes = [16, 128], strides = [1, 1]} : vector<16x512xf32> to vector<16x128xf32>
    %5 = arith.mulf %4, %4 : vector<16x128xf32>
    %cst_4 = arith.constant dense<0.000000e+00> : vector<16xf32>
    %6 = vector.multi_reduction <add>, %5, %cst_4 [1] : vector<16x128xf32> to vector<16xf32>
    %7 = vector.shape_cast %6 : vector<16xf32> to vector<16x1xf32>
    %8 = tpu.transpose %7, [1, 0] : vector<16x1xf32> -> vector<1x16xf32>
    %cst_5 = arith.constant 0.353553385 : f32
    %9 = vector.broadcast %cst_5 : f32 to vector<1x16xf32>
    %10 = arith.mulf %8, %9 : vector<1x16xf32>
    %11 = vector.extract_strided_slice %3 {offsets = [0, 128], sizes = [16, 128], strides = [1, 1]} : vector<16x512xf32> to vector<16x128xf32>
    %12 = arith.mulf %11, %11 : vector<16x128xf32>
    %cst_6 = arith.constant dense<0.000000e+00> : vector<16xf32>
    %13 = vector.multi_reduction <add>, %12, %cst_6 [1] : vector<16x128xf32> to vector<16xf32>
    %14 = vector.shape_cast %13 : vector<16xf32> to vector<16x1xf32>
    %15 = tpu.transpose %14, [1, 0] : vector<16x1xf32> -> vector<1x16xf32>
    %cst_7 = arith.constant 0.353553385 : f32
    %16 = vector.broadcast %cst_7 : f32 to vector<1x16xf32>
    %17 = arith.mulf %15, %16 : vector<1x16xf32>
    %18 = vector.extract_strided_slice %3 {offsets = [0, 256], sizes = [16, 128], strides = [1, 1]} : vector<16x512xf32> to vector<16x128xf32>
    %19 = arith.mulf %18, %18 : vector<16x128xf32>
    %cst_8 = arith.constant dense<0.000000e+00> : vector<16xf32>
    %20 = vector.multi_reduction <add>, %19, %cst_8 [1] : vector<16x128xf32> to vector<16xf32>
    %21 = vector.shape_cast %20 : vector<16xf32> to vector<16x1xf32>
    %22 = tpu.transpose %21, [1, 0] : vector<16x1xf32> -> vector<1x16xf32>
    %cst_9 = arith.constant 0.353553385 : f32
    %23 = vector.broadcast %cst_9 : f32 to vector<1x16xf32>
    %24 = arith.mulf %22, %23 : vector<1x16xf32>
    %25 = vector.extract_strided_slice %3 {offsets = [0, 384], sizes = [16, 128], strides = [1, 1]} : vector<16x512xf32> to vector<16x128xf32>
    %26 = arith.mulf %25, %25 : vector<16x128xf32>
    %cst_10 = arith.constant dense<0.000000e+00> : vector<16xf32>
    %27 = vector.multi_reduction <add>, %26, %cst_10 [1] : vector<16x128xf32> to vector<16xf32>
    %28 = vector.shape_cast %27 : vector<16xf32> to vector<16x1xf32>
    %29 = tpu.transpose %28, [1, 0] : vector<16x1xf32> -> vector<1x16xf32>
    %cst_11 = arith.constant 0.353553385 : f32
    %30 = vector.broadcast %cst_11 : f32 to vector<1x16xf32>
    %31 = arith.mulf %29, %30 : vector<1x16xf32>
    %cst_12 = arith.constant 0.707106769 : f32
    %32 = vector.broadcast %cst_12 : f32 to vector<16x512xf32>
    %33 = arith.mulf %3, %32 : vector<16x512xf32>
    %cst_13 = arith.constant 0.000000e+00 : f32
    %34 = vector.broadcast %cst_13 : f32 to vector<16x32xf32>
    %35 = vector.extract_strided_slice %33 {offsets = [0, 0], sizes = [16, 128], strides = [1, 1]} : vector<16x512xf32> to vector<16x128xf32>
    %36 = vector.extract_strided_slice %3 {offsets = [0, 0], sizes = [16, 128], strides = [1, 1]} : vector<16x512xf32> to vector<16x128xf32>
    %cst_14 = arith.constant dense<0.000000e+00> : vector<16x16xf32>
    %37 = tpu.matmul %35, %36, %cst_14 {dimension_numbers = #tpu.dot_dimension_numbers<[1], [1], [0], [0], [0, 0, 1, 0], [], []>} : vector<16x128xf32>, vector<16x128xf32>, vector<16x16xf32> -> vector<16x16xf32>
    %38 = vector.broadcast %10 : vector<1x16xf32> to vector<16x16xf32>
    %39 = arith.subf %37, %38 : vector<16x16xf32>
    %cst_15 = arith.constant dense<0xFF800000> : vector<16xf32>
    %40 = vector.multi_reduction <maximumf>, %39, %cst_15 [1] : vector<16x16xf32> to vector<16xf32>
    %41 = vector.shape_cast %40 : vector<16xf32> to vector<16x1xf32>
    %42 = vector.broadcast %41 : vector<16x1xf32> to vector<16x16xf32>
    %43 = arith.subf %39, %42 : vector<16x16xf32>
    %44 = math.exp %43 : vector<16x16xf32>
    %cst_16 = arith.constant dense<0.000000e+00> : vector<16xf32>
    %45 = vector.multi_reduction <add>, %44, %cst_16 [1] : vector<16x16xf32> to vector<16xf32>
    %46 = vector.shape_cast %45 : vector<16xf32> to vector<16x1xf32>
    %cst_17 = arith.constant dense<0.000000e+00> : vector<16x32xf32>
    %47 = tpu.matmul %44, %1, %cst_17 {dimension_numbers = #tpu.dot_dimension_numbers<[1], [0], [0], [1], [0, 0, 1, 1], [], []>} : vector<16x16xf32>, vector<16x32xf32>, vector<16x32xf32> -> vector<16x32xf32>
    %48 = tpu.reciprocal %46 {approx = true} : vector<16x1xf32> -> vector<16x1xf32>
    %49 = vector.broadcast %48 : vector<16x1xf32> to vector<16x32xf32>
    %50 = arith.mulf %47, %49 : vector<16x32xf32>
    %c0_18 = arith.constant 0 : index
    %c0_19 = arith.constant 0 : index
    %c0_20 = arith.constant 0 : index
    %51 = vector.load %arg4[%c0_18, %c0_19, %c0_20] : memref<4x32x32xf32, #tpu.memory_space<vmem>>, vector<1x32x32xf32>
    %52 = vector.shape_cast %51 : vector<1x32x32xf32> to vector<32x32xf32>
    %cst_21 = arith.constant dense<0.000000e+00> : vector<16x32xf32>
    %53 = tpu.matmul %50, %52, %cst_21 {dimension_numbers = #tpu.dot_dimension_numbers<[1], [0], [0], [1], [0, 0, 1, 1], [], []>} : vector<16x32xf32>, vector<32x32xf32>, vector<16x32xf32> -> vector<16x32xf32>
    %54 = arith.addf %34, %53 : vector<16x32xf32>
    %55 = vector.extract_strided_slice %33 {offsets = [0, 128], sizes = [16, 128], strides = [1, 1]} : vector<16x512xf32> to vector<16x128xf32>
    %56 = vector.extract_strided_slice %3 {offsets = [0, 128], sizes = [16, 128], strides = [1, 1]} : vector<16x512xf32> to vector<16x128xf32>
    %cst_22 = arith.constant dense<0.000000e+00> : vector<16x16xf32>
    %57 = tpu.matmul %55, %56, %cst_22 {dimension_numbers = #tpu.dot_dimension_numbers<[1], [1], [0], [0], [0, 0, 1, 0], [], []>} : vector<16x128xf32>, vector<16x128xf32>, vector<16x16xf32> -> vector<16x16xf32>
    %58 = vector.broadcast %17 : vector<1x16xf32> to vector<16x16xf32>
    %59 = arith.subf %57, %58 : vector<16x16xf32>
    %cst_23 = arith.constant dense<0xFF800000> : vector<16xf32>
    %60 = vector.multi_reduction <maximumf>, %59, %cst_23 [1] : vector<16x16xf32> to vector<16xf32>
    %61 = vector.shape_cast %60 : vector<16xf32> to vector<16x1xf32>
    %62 = vector.broadcast %61 : vector<16x1xf32> to vector<16x16xf32>
    %63 = arith.subf %59, %62 : vector<16x16xf32>
    %64 = math.exp %63 : vector<16x16xf32>
    %cst_24 = arith.constant dense<0.000000e+00> : vector<16xf32>
    %65 = vector.multi_reduction <add>, %64, %cst_24 [1] : vector<16x16xf32> to vector<16xf32>
    %66 = vector.shape_cast %65 : vector<16xf32> to vector<16x1xf32>
    %cst_25 = arith.constant dense<0.000000e+00> : vector<16x32xf32>
    %67 = tpu.matmul %64, %1, %cst_25 {dimension_numbers = #tpu.dot_dimension_numbers<[1], [0], [0], [1], [0, 0, 1, 1], [], []>} : vector<16x16xf32>, vector<16x32xf32>, vector<16x32xf32> -> vector<16x32xf32>
    %68 = tpu.reciprocal %66 {approx = true} : vector<16x1xf32> -> vector<16x1xf32>
    %69 = vector.broadcast %68 : vector<16x1xf32> to vector<16x32xf32>
    %70 = arith.mulf %67, %69 : vector<16x32xf32>
    %c1 = arith.constant 1 : index
    %c0_26 = arith.constant 0 : index
    %c0_27 = arith.constant 0 : index
    %71 = vector.load %arg4[%c1, %c0_26, %c0_27] : memref<4x32x32xf32, #tpu.memory_space<vmem>>, vector<1x32x32xf32>
    %72 = vector.shape_cast %71 : vector<1x32x32xf32> to vector<32x32xf32>
    %cst_28 = arith.constant dense<0.000000e+00> : vector<16x32xf32>
    %73 = tpu.matmul %70, %72, %cst_28 {dimension_numbers = #tpu.dot_dimension_numbers<[1], [0], [0], [1], [0, 0, 1, 1], [], []>} : vector<16x32xf32>, vector<32x32xf32>, vector<16x32xf32> -> vector<16x32xf32>
    %74 = arith.addf %54, %73 : vector<16x32xf32>
    %75 = vector.extract_strided_slice %33 {offsets = [0, 256], sizes = [16, 128], strides = [1, 1]} : vector<16x512xf32> to vector<16x128xf32>
    %76 = vector.extract_strided_slice %3 {offsets = [0, 256], sizes = [16, 128], strides = [1, 1]} : vector<16x512xf32> to vector<16x128xf32>
    %cst_29 = arith.constant dense<0.000000e+00> : vector<16x16xf32>
    %77 = tpu.matmul %75, %76, %cst_29 {dimension_numbers = #tpu.dot_dimension_numbers<[1], [1], [0], [0], [0, 0, 1, 0], [], []>} : vector<16x128xf32>, vector<16x128xf32>, vector<16x16xf32> -> vector<16x16xf32>
    %78 = vector.broadcast %24 : vector<1x16xf32> to vector<16x16xf32>
    %79 = arith.subf %77, %78 : vector<16x16xf32>
    %cst_30 = arith.constant dense<0xFF800000> : vector<16xf32>
    %80 = vector.multi_reduction <maximumf>, %79, %cst_30 [1] : vector<16x16xf32> to vector<16xf32>
    %81 = vector.shape_cast %80 : vector<16xf32> to vector<16x1xf32>
    %82 = vector.broadcast %81 : vector<16x1xf32> to vector<16x16xf32>
    %83 = arith.subf %79, %82 : vector<16x16xf32>
    %84 = math.exp %83 : vector<16x16xf32>
    %cst_31 = arith.constant dense<0.000000e+00> : vector<16xf32>
    %85 = vector.multi_reduction <add>, %84, %cst_31 [1] : vector<16x16xf32> to vector<16xf32>
    %86 = vector.shape_cast %85 : vector<16xf32> to vector<16x1xf32>
    %cst_32 = arith.constant dense<0.000000e+00> : vector<16x32xf32>
    %87 = tpu.matmul %84, %1, %cst_32 {dimension_numbers = #tpu.dot_dimension_numbers<[1], [0], [0], [1], [0, 0, 1, 1], [], []>} : vector<16x16xf32>, vector<16x32xf32>, vector<16x32xf32> -> vector<16x32xf32>
    %88 = tpu.reciprocal %86 {approx = true} : vector<16x1xf32> -> vector<16x1xf32>
    %89 = vector.broadcast %88 : vector<16x1xf32> to vector<16x32xf32>
    %90 = arith.mulf %87, %89 : vector<16x32xf32>
    %c2 = arith.constant 2 : index
    %c0_33 = arith.constant 0 : index
    %c0_34 = arith.constant 0 : index
    %91 = vector.load %arg4[%c2, %c0_33, %c0_34] : memref<4x32x32xf32, #tpu.memory_space<vmem>>, vector<1x32x32xf32>
    %92 = vector.shape_cast %91 : vector<1x32x32xf32> to vector<32x32xf32>
    %cst_35 = arith.constant dense<0.000000e+00> : vector<16x32xf32>
    %93 = tpu.matmul %90, %92, %cst_35 {dimension_numbers = #tpu.dot_dimension_numbers<[1], [0], [0], [1], [0, 0, 1, 1], [], []>} : vector<16x32xf32>, vector<32x32xf32>, vector<16x32xf32> -> vector<16x32xf32>
    %94 = arith.addf %74, %93 : vector<16x32xf32>
    %95 = vector.extract_strided_slice %33 {offsets = [0, 384], sizes = [16, 128], strides = [1, 1]} : vector<16x512xf32> to vector<16x128xf32>
    %96 = vector.extract_strided_slice %3 {offsets = [0, 384], sizes = [16, 128], strides = [1, 1]} : vector<16x512xf32> to vector<16x128xf32>
    %cst_36 = arith.constant dense<0.000000e+00> : vector<16x16xf32>
    %97 = tpu.matmul %95, %96, %cst_36 {dimension_numbers = #tpu.dot_dimension_numbers<[1], [1], [0], [0], [0, 0, 1, 0], [], []>} : vector<16x128xf32>, vector<16x128xf32>, vector<16x16xf32> -> vector<16x16xf32>
    %98 = vector.broadcast %31 : vector<1x16xf32> to vector<16x16xf32>
    %99 = arith.subf %97, %98 : vector<16x16xf32>
    %cst_37 = arith.constant dense<0xFF800000> : vector<16xf32>
    %100 = vector.multi_reduction <maximumf>, %99, %cst_37 [1] : vector<16x16xf32> to vector<16xf32>
    %101 = vector.shape_cast %100 : vector<16xf32> to vector<16x1xf32>
    %102 = vector.broadcast %101 : vector<16x1xf32> to vector<16x16xf32>
    %103 = arith.subf %99, %102 : vector<16x16xf32>
    %104 = math.exp %103 : vector<16x16xf32>
    %cst_38 = arith.constant dense<0.000000e+00> : vector<16xf32>
    %105 = vector.multi_reduction <add>, %104, %cst_38 [1] : vector<16x16xf32> to vector<16xf32>
    %106 = vector.shape_cast %105 : vector<16xf32> to vector<16x1xf32>
    %cst_39 = arith.constant dense<0.000000e+00> : vector<16x32xf32>
    %107 = tpu.matmul %104, %1, %cst_39 {dimension_numbers = #tpu.dot_dimension_numbers<[1], [0], [0], [1], [0, 0, 1, 1], [], []>} : vector<16x16xf32>, vector<16x32xf32>, vector<16x32xf32> -> vector<16x32xf32>
    %108 = tpu.reciprocal %106 {approx = true} : vector<16x1xf32> -> vector<16x1xf32>
    %109 = vector.broadcast %108 : vector<16x1xf32> to vector<16x32xf32>
    %110 = arith.mulf %107, %109 : vector<16x32xf32>
    %c3 = arith.constant 3 : index
    %c0_40 = arith.constant 0 : index
    %c0_41 = arith.constant 0 : index
    %111 = vector.load %arg4[%c3, %c0_40, %c0_41] : memref<4x32x32xf32, #tpu.memory_space<vmem>>, vector<1x32x32xf32>
    %112 = vector.shape_cast %111 : vector<1x32x32xf32> to vector<32x32xf32>
    %cst_42 = arith.constant dense<0.000000e+00> : vector<16x32xf32>
    %113 = tpu.matmul %110, %112, %cst_42 {dimension_numbers = #tpu.dot_dimension_numbers<[1], [0], [0], [1], [0, 0, 1, 1], [], []>} : vector<16x32xf32>, vector<32x32xf32>, vector<16x32xf32> -> vector<16x32xf32>
    %114 = arith.addf %94, %113 : vector<16x32xf32>
    %c0_43 = arith.constant 0 : index
    %c0_44 = arith.constant 0 : index
    %115 = vector.load %arg5[%c0_43, %c0_44] : memref<1x32xf32, #tpu.memory_space<vmem>>, vector<1x32xf32>
    %116 = vector.broadcast %115 : vector<1x32xf32> to vector<16x32xf32>
    %117 = arith.addf %114, %116 : vector<16x32xf32>
    %c0_45 = arith.constant 0 : index
    %c0_46 = arith.constant 0 : index
    %c0_47 = arith.constant 0 : index
    %118 = vector.load %arg6[%c0_45, %c0_46, %c0_47] : memref<1x16x32xf32, #tpu.memory_space<vmem>>, vector<1x16x32xf32>
    %119 = vector.shape_cast %118 : vector<1x16x32xf32> to vector<16x32xf32>
    %120 = vector.shape_cast %117 : vector<16x32xf32> to vector<1x16x32xf32>
    tpu.vector_store %arg6[%c0_45, %c0_46, %c0_47], %120 {strides = array<i32>} : memref<1x16x32xf32, #tpu.memory_space<vmem>>, vector<1x16x32xf32>,
    return
  }
  func.func @transform_0(%arg0: i32, %arg1: i32) -> (i32, i32, i32) {
    %c0_i32 = arith.constant 0 : i32
    %c0_i32_0 = arith.constant 0 : i32
    %c0_i32_1 = arith.constant 0 : i32
    return %arg0, %c0_i32, %c0_i32_0 : i32, i32, i32
  }
  func.func @transform_1(%arg0: i32, %arg1: i32) -> (i32, i32) {
    %c0_i32 = arith.constant 0 : i32
    %c0_i32_0 = arith.constant 0 : i32
    %c0_i32_1 = arith.constant 0 : i32
    return %c0_i32, %c0_i32_0 : i32, i32
  }
  func.func @transform_2(%arg0: i32, %arg1: i32) -> (i32, i32, i32) {
    %c0_i32 = arith.constant 0 : i32
    %c0_i32_0 = arith.constant 0 : i32
    %c0_i32_1 = arith.constant 0 : i32
    %c0_i32_2 = arith.constant 0 : i32
    return %c0_i32, %c0_i32_0, %c0_i32_1 : i32, i32, i32
  }
  func.func @transform_3(%arg0: i32, %arg1: i32) -> (i32, i32) {
    %c0_i32 = arith.constant 0 : i32
    %c0_i32_0 = arith.constant 0 : i32
    %c0_i32_1 = arith.constant 0 : i32
    return %c0_i32, %c0_i32_0 : i32, i32
  }
  func.func @transform_4(%arg0: i32, %arg1: i32) -> (i32, i32, i32) {
    %c0_i32 = arith.constant 0 : i32
    %c0_i32_0 = arith.constant 0 : i32
    return %arg0, %arg1, %c0_i32 : i32, i32, i32
  }
}

module attributes {stable_mosaic.version = 11 : i64} {
  func.func @_l2_attn_kernel(%arg0: i32, %arg1: i32, %arg2: memref<1x16x32xf32, #tpu.memory_space<vmem>>, %arg3: memref<32x512xf32, #tpu.memory_space<vmem>>, %arg4: memref<4x32x32xf32, #tpu.memory_space<vmem>>, %arg5: memref<1x32xf32, #tpu.memory_space<vmem>>, %arg6: memref<1x16x32xf32, #tpu.memory_space<vmem>>) attributes {dimension_semantics = [#tpu.dimension_semantics<parallel>, #tpu.dimension_semantics<parallel>], iteration_bounds = array<i64: 2, 1>, scalar_prefetch = 0 : i64, scratch_operands = 0 : i64, tpu.core_type = #tpu.core_type<tc>, window_params = [{transform_indices = @transform_0, window_bounds = array<i64: 1, 16, 32>}, {pipeline_mode = #tpu.pipeline_mode<synchronous>, transform_indices = @transform_1, window_bounds = array<i64: 32, 512>}, {pipeline_mode = #tpu.pipeline_mode<synchronous>, transform_indices = @transform_2, window_bounds = array<i64: 4, 32, 32>}, {pipeline_mode = #tpu.pipeline_mode<synchronous>, transform_indices = @transform_3, window_bounds = array<i64: 1, 32>}, {transform_indices = @transform_4, window_bounds = array<i64: 1, 16, 32>}]} {
    %c0 = arith.constant 0 : index
    %c0_0 = arith.constant 0 : index
    %c0_1 = arith.constant 0 : index
    %0 = vector.load %arg2[%c0, %c0_0, %c0_1] : memref<1x16x32xf32, #tpu.memory_space<vmem>>, vector<1x16x32xf32>
    %1 = vector.shape_cast %0 : vector<1x16x32xf32> to vector<16x32xf32>
    %c0_2 = arith.constant 0 : index
    %c0_3 = arith.constant 0 : index
    %2 = vector.load %arg3[%c0_2, %c0_3] : memref<32x512xf32, #tpu.memory_space<vmem>>, vector<32x512xf32>
    %cst = arith.constant dense<0.000000e+00> : vector<16x512xf32>
    %3 = tpu.matmul %1, %2, %cst {dimension_numbers = #tpu.dot_dimension_numbers<[1], [0], [0], [1], [0, 0, 1, 1], [], []>} : vector<16x32xf32>, vector<32x512xf32>, vector<16x512xf32> -> vector<16x512xf32>
    %4 = vector.extract_strided_slice %3 {offsets = [0, 0], sizes = [16, 128], strides = [1, 1]} : vector<16x512xf32> to vector<16x128xf32>
    %5 = arith.mulf %4, %4 : vector<16x128xf32>
    %cst_4 = arith.constant dense<0.000000e+00> : vector<16xf32>
    %6 = vector.multi_reduction <add>, %5, %cst_4 [1] : vector<16x128xf32> to vector<16xf32>
    %7 = vector.shape_cast %6 : vector<16xf32> to vector<16x1xf32>
    %8 = tpu.transpose %7, [1, 0] : vector<16x1xf32> -> vector<1x16xf32>
    %cst_5 = arith.constant 0.353553385 : f32
    %9 = vector.broadcast %cst_5 : f32 to vector<1x16xf32>
    %10 = arith.mulf %8, %9 : vector<1x16xf32>
    %11 = vector.extract_strided_slice %3 {offsets = [0, 128], sizes = [16, 128], strides = [1, 1]} : vector<16x512xf32> to vector<16x128xf32>
    %12 = arith.mulf %11, %11 : vector<16x128xf32>
    %cst_6 = arith.constant dense<0.000000e+00> : vector<16xf32>
    %13 = vector.multi_reduction <add>, %12, %cst_6 [1] : vector<16x128xf32> to vector<16xf32>
    %14 = vector.shape_cast %13 : vector<16xf32> to vector<16x1xf32>
    %15 = tpu.transpose %14, [1, 0] : vector<16x1xf32> -> vector<1x16xf32>
    %cst_7 = arith.constant 0.353553385 : f32
    %16 = vector.broadcast %cst_7 : f32 to vector<1x16xf32>
    %17 = arith.mulf %15, %16 : vector<1x16xf32>
    %18 = vector.extract_strided_slice %3 {offsets = [0, 256], sizes = [16, 128], strides = [1, 1]} : vector<16x512xf32> to vector<16x128xf32>
    %19 = arith.mulf %18, %18 : vector<16x128xf32>
    %cst_8 = arith.constant dense<0.000000e+00> : vector<16xf32>
    %20 = vector.multi_reduction <add>, %19, %cst_8 [1] : vector<16x128xf32> to vector<16xf32>
    %21 = vector.shape_cast %20 : vector<16xf32> to vector<16x1xf32>
    %22 = tpu.transpose %21, [1, 0] : vector<16x1xf32> -> vector<1x16xf32>
    %cst_9 = arith.constant 0.353553385 : f32
    %23 = vector.broadcast %cst_9 : f32 to vector<1x16xf32>
    %24 = arith.mulf %22, %23 : vector<1x16xf32>
    %25 = vector.extract_strided_slice %3 {offsets = [0, 384], sizes = [16, 128], strides = [1, 1]} : vector<16x512xf32> to vector<16x128xf32>
    %26 = arith.mulf %25, %25 : vector<16x128xf32>
    %cst_10 = arith.constant dense<0.000000e+00> : vector<16xf32>
    %27 = vector.multi_reduction <add>, %26, %cst_10 [1] : vector<16x128xf32> to vector<16xf32>
    %28 = vector.shape_cast %27 : vector<16xf32> to vector<16x1xf32>
    %29 = tpu.transpose %28, [1, 0] : vector<16x1xf32> -> vector<1x16xf32>
    %cst_11 = arith.constant 0.353553385 : f32
    %30 = vector.broadcast %cst_11 : f32 to vector<1x16xf32>
    %31 = arith.mulf %29, %30 : vector<1x16xf32>
    %cst_12 = arith.constant 0.707106769 : f32
    %32 = vector.broadcast %cst_12 : f32 to vector<16x512xf32>
    %33 = arith.mulf %3, %32 : vector<16x512xf32>
    %cst_13 = arith.constant 0.000000e+00 : f32
    %34 = vector.broadcast %cst_13 : f32 to vector<16x32xf32>
    %35 = vector.extract_strided_slice %33 {offsets = [0, 0], sizes = [16, 128], strides = [1, 1]} : vector<16x512xf32> to vector<16x128xf32>
    %36 = vector.extract_strided_slice %3 {offsets = [0, 0], sizes = [16, 128], strides = [1, 1]} : vector<16x512xf32> to vector<16x128xf32>
    %cst_14 = arith.constant dense<0.000000e+00> : vector<16x16xf32>
    %37 = tpu.matmul %35, %36, %cst_14 {dimension_numbers = #tpu.dot_dimension_numbers<[1], [1], [0], [0], [0, 0, 1, 0], [], []>} : vector<16x128xf32>, vector<16x128xf32>, vector<16x16xf32> -> vector<16x16xf32>
    %38 = vector.broadcast %10 : vector<1x16xf32> to vector<16x16xf32>
    %39 = arith.subf %37, %38 : vector<16x16xf32>
    %cst_15 = arith.constant dense<0xFF800000> : vector<16xf32>
    %40 = vector.multi_reduction <maximumf>, %39, %cst_15 [1] : vector<16x16xf32> to vector<16xf32>
    %41 = vector.shape_cast %40 : vector<16xf32> to vector<16x1xf32>
    %42 = vector.broadcast %41 : vector<16x1xf32> to vector<16x16xf32>
    %43 = arith.subf %39, %42 : vector<16x16xf32>
    %44 = math.exp %43 : vector<16x16xf32>
    %cst_16 = arith.constant dense<0.000000e+00> : vector<16xf32>
    %45 = vector.multi_reduction <add>, %44, %cst_16 [1] : vector<16x16xf32> to vector<16xf32>
    %46 = vector.shape_cast %45 : vector<16xf32> to vector<16x1xf32>
    %cst_17 = arith.constant dense<0.000000e+00> : vector<16x32xf32>
    %47 = tpu.matmul %44, %1, %cst_17 {dimension_numbers = #tpu.dot_dimension_numbers<[1], [0], [0], [1], [0, 0, 1, 1], [], []>} : vector<16x16xf32>, vector<16x32xf32>, vector<16x32xf32> -> vector<16x32xf32>
    %48 = tpu.reciprocal %46 {approx = true} : vector<16x1xf32> -> vector<16x1xf32>
    %49 = vector.broadcast %48 : vector<16x1xf32> to vector<16x32xf32>
    %50 = arith.mulf %47, %49 : vector<16x32xf32>
    %c0_18 = arith.constant 0 : index
    %c0_19 = arith.constant 0 : index
    %c0_20 = arith.constant 0 : index
    %51 = vector.load %arg4[%c0_18, %c0_19, %c0_20] : memref<4x32x32xf32, #tpu.memory_space<vmem>>, vector<1x32x32xf32>
    %52 = vector.shape_cast %51 : vector<1x32x32xf32> to vector<32x32xf32>
    %cst_21 = arith.constant dense<0.000000e+00> : vector<16x32xf32>
    %53 = tpu.matmul %50, %52, %cst_21 {dimension_numbers = #tpu.dot_dimension_numbers<[1], [0], [0], [1], [0, 0, 1, 1], [], []>} : vector<16x32xf32>, vector<32x32xf32>, vector<16x32xf32> -> vector<16x32xf32>
    %54 = arith.addf %34, %53 : vector<16x32xf32>
    %55 = vector.extract_strided_slice %33 {offsets = [0, 128], sizes = [16, 128], strides = [1, 1]} : vector<16x512xf32> to vector<16x128xf32>
    %56 = vector.extract_strided_slice %3 {offsets = [0, 128], sizes = [16, 128], strides = [1, 1]} : vector<16x512xf32> to vector<16x128xf32>
    %cst_22 = arith.constant dense<0.000000e+00> : vector<16x16xf32>
    %57 = tpu.matmul %55, %56, %cst_22 {dimension_numbers = #tpu.dot_dimension_numbers<[1], [1], [0], [0], [0, 0, 1, 0], [], []>} : vector<16x128xf32>, vector<16x128xf32>, vector<16x16xf32> -> vector<16x16xf32>
    %58 = vector.broadcast %17 : vector<1x16xf32> to vector<16x16xf32>
    %59 = arith.subf %57, %58 : vector<16x16xf32>
    %cst_23 = arith.constant dense<0xFF800000> : vector<16xf32>
    %60 = vector.multi_reduction <maximumf>, %59, %cst_23 [1] : vector<16x16xf32> to vector<16xf32>
    %61 = vector.shape_cast %60 : vector<16xf32> to vector<16x1xf32>
    %62 = vector.broadcast %61 : vector<16x1xf32> to vector<16x16xf32>
    %63 = arith.subf %59, %62 : vector<16x16xf32>
    %64 = math.exp %63 : vector<16x16xf32>
    %cst_24 = arith.constant dense<0.000000e+00> : vector<16xf32>
    %65 = vector.multi_reduction <add>, %64, %cst_24 [1] : vector<16x16xf32> to vector<16xf32>
    %66 = vector.shape_cast %65 : vector<16xf32> to vector<16x1xf32>
    %cst_25 = arith.constant dense<0.000000e+00> : vector<16x32xf32>
    %67 = tpu.matmul %64, %1, %cst_25 {dimension_numbers = #tpu.dot_dimension_numbers<[1], [0], [0], [1], [0, 0, 1, 1], [], []>} : vector<16x16xf32>, vector<16x32xf32>, vector<16x32xf32> -> vector<16x32xf32>
    %68 = tpu.reciprocal %66 {approx = true} : vector<16x1xf32> -> vector<16x1xf32>
    %69 = vector.broadcast %68 : vector<16x1xf32> to vector<16x32xf32>
    %70 = arith.mulf %67, %69 : vector<16x32xf32>
    %c1 = arith.constant 1 : index
    %c0_26 = arith.constant 0 : index
    %c0_27 = arith.constant 0 : index
    %71 = vector.load %arg4[%c1, %c0_26, %c0_27] : memref<4x32x32xf32, #tpu.memory_space<vmem>>, vector<1x32x32xf32>
    %72 = vector.shape_cast %71 : vector<1x32x32xf32> to vector<32x32xf32>
    %cst_28 = arith.constant dense<0.000000e+00> : vector<16x32xf32>
    %73 = tpu.matmul %70, %72, %cst_28 {dimension_numbers = #tpu.dot_dimension_numbers<[1], [0], [0], [1], [0, 0, 1, 1], [], []>} : vector<16x32xf32>, vector<32x32xf32>, vector<16x32xf32> -> vector<16x32xf32>
    %74 = arith.addf %54, %73 : vector<16x32xf32>
    %75 = vector.extract_strided_slice %33 {offsets = [0, 256], sizes = [16, 128], strides = [1, 1]} : vector<16x512xf32> to vector<16x128xf32>
    %76 = vector.extract_strided_slice %3 {offsets = [0, 256], sizes = [16, 128], strides = [1, 1]} : vector<16x512xf32> to vector<16x128xf32>
    %cst_29 = arith.constant dense<0.000000e+00> : vector<16x16xf32>
    %77 = tpu.matmul %75, %76, %cst_29 {dimension_numbers = #tpu.dot_dimension_numbers<[1], [1], [0], [0], [0, 0, 1, 0], [], []>} : vector<16x128xf32>, vector<16x128xf32>, vector<16x16xf32> -> vector<16x16xf32>
    %78 = vector.broadcast %24 : vector<1x16xf32> to vector<16x16xf32>
    %79 = arith.subf %77, %78 : vector<16x16xf32>
    %cst_30 = arith.constant dense<0xFF800000> : vector<16xf32>
    %80 = vector.multi_reduction <maximumf>, %79, %cst_30 [1] : vector<16x16xf32> to vector<16xf32>
    %81 = vector.shape_cast %80 : vector<16xf32> to vector<16x1xf32>
    %82 = vector.broadcast %81 : vector<16x1xf32> to vector<16x16xf32>
    %83 = arith.subf %79, %82 : vector<16x16xf32>
    %84 = math.exp %83 : vector<16x16xf32>
    %cst_31 = arith.constant dense<0.000000e+00> : vector<16xf32>
    %85 = vector.multi_reduction <add>, %84, %cst_31 [1] : vector<16x16xf32> to vector<16xf32>
    %86 = vector.shape_cast %85 : vector<16xf32> to vector<16x1xf32>
    %cst_32 = arith.constant dense<0.000000e+00> : vector<16x32xf32>
    %87 = tpu.matmul %84, %1, %cst_32 {dimension_numbers = #tpu.dot_dimension_numbers<[1], [0], [0], [1], [0, 0, 1, 1], [], []>} : vector<16x16xf32>, vector<16x32xf32>, vector<16x32xf32> -> vector<16x32xf32>
    %88 = tpu.reciprocal %86 {approx = true} : vector<16x1xf32> -> vector<16x1xf32>
    %89 = vector.broadcast %88 : vector<16x1xf32> to vector<16x32xf32>
    %90 = arith.mulf %87, %89 : vector<16x32xf32>
    %c2 = arith.constant 2 : index
    %c0_33 = arith.constant 0 : index
    %c0_34 = arith.constant 0 : index
    %91 = vector.load %arg4[%c2, %c0_33, %c0_34] : memref<4x32x32xf32, #tpu.memory_space<vmem>>, vector<1x32x32xf32>
    %92 = vector.shape_cast %91 : vector<1x32x32xf32> to vector<32x32xf32>
    %cst_35 = arith.constant dense<0.000000e+00> : vector<16x32xf32>
    %93 = tpu.matmul %90, %92, %cst_35 {dimension_numbers = #tpu.dot_dimension_numbers<[1], [0], [0], [1], [0, 0, 1, 1], [], []>} : vector<16x32xf32>, vector<32x32xf32>, vector<16x32xf32> -> vector<16x32xf32>
    %94 = arith.addf %74, %93 : vector<16x32xf32>
    %95 = vector.extract_strided_slice %33 {offsets = [0, 384], sizes = [16, 128], strides = [1, 1]} : vector<16x512xf32> to vector<16x128xf32>
    %96 = vector.extract_strided_slice %3 {offsets = [0, 384], sizes = [16, 128], strides = [1, 1]} : vector<16x512xf32> to vector<16x128xf32>
    %cst_36 = arith.constant dense<0.000000e+00> : vector<16x16xf32>
    %97 = tpu.matmul %95, %96, %cst_36 {dimension_numbers = #tpu.dot_dimension_numbers<[1], [1], [0], [0], [0, 0, 1, 0], [], []>} : vector<16x128xf32>, vector<16x128xf32>, vector<16x16xf32> -> vector<16x16xf32>
    %98 = vector.broadcast %31 : vector<1x16xf32> to vector<16x16xf32>
    %99 = arith.subf %97, %98 : vector<16x16xf32>
    %cst_37 = arith.constant dense<0xFF800000> : vector<16xf32>
    %100 = vector.multi_reduction <maximumf>, %99, %cst_37 [1] : vector<16x16xf32> to vector<16xf32>
    %101 = vector.shape_cast %100 : vector<16xf32> to vector<16x1xf32>
    %102 = vector.broadcast %101 : vector<16x1xf32> to vector<16x16xf32>
    %103 = arith.subf %99, %102 : vector<16x16xf32>
    %104 = math.exp %103 : vector<16x16xf32>
    %cst_38 = arith.constant dense<0.000000e+00> : vector<16xf32>
    %105 = vector.multi_reduction <add>, %104, %cst_38 [1] : vector<16x16xf32> to vector<16xf32>
    %106 = vector.shape_cast %105 : vector<16xf32> to vector<16x1xf32>
    %cst_39 = arith.constant dense<0.000000e+00> : vector<16x32xf32>
    %107 = tpu.matmul %104, %1, %cst_39 {dimension_numbers = #tpu.dot_dimension_numbers<[1], [0], [0], [1], [0, 0, 1, 1], [], []>} : vector<16x16xf32>, vector<16x32xf32>, vector<16x32xf32> -> vector<16x32xf32>
    %108 = tpu.reciprocal %106 {approx = true} : vector<16x1xf32> -> vector<16x1xf32>
    %109 = vector.broadcast %108 : vector<16x1xf32> to vector<16x32xf32>
    %110 = arith.mulf %107, %109 : vector<16x32xf32>
    %c3 = arith.constant 3 : index
    %c0_40 = arith.constant 0 : index
    %c0_41 = arith.constant 0 : index
    %111 = vector.load %arg4[%c3, %c0_40, %c0_41] : memref<4x32x32xf32, #tpu.memory_space<vmem>>, vector<1x32x32xf32>
    %112 = vector.shape_cast %111 : vector<1x32x32xf32> to vector<32x32xf32>
    %cst_42 = arith.constant dense<0.000000e+00> : vector<16x32xf32>
    %113 = tpu.matmul %110, %112, %cst_42 {dimension_numbers = #tpu.dot_dimension_numbers<[1], [0], [0], [1], [0, 0, 1, 1], [], []>} : vector<16x32xf32>, vector<32x32xf32>, vector<16x32xf32> -> vector<16x32xf32>
    %114 = arith.addf %94, %113 : vector<16x32xf32>
    %c0_43 = arith.constant 0 : index
    %c0_44 = arith.constant 0 : index
    %115 = vector.load %arg5[%c0_43, %c0_44] : memref<1x32xf32, #tpu.memory_space<vmem>>, vector<1x32xf32>
    %116 = vector.broadcast %115 : vector<1x32xf32> to vector<16x32xf32>
    %117 = arith.addf %114, %116 : vector<16x32xf32>
    %c0_45 = arith.constant 0 : index
    %c0_46 = arith.constant 0 : index
    %c0_47 = arith.constant 0 : index
    %118 = vector.load %arg6[%c0_45, %c0_46, %c0_47] : memref<1x16x32xf32, #tpu.memory_space<vmem>>, vector<1x16x32xf32>
    %119 = vector.shape_cast %118 : vector<1x16x32xf32> to vector<16x32xf32>
    %120 = vector.shape_cast %117 : vector<16x32xf32> to vector<1x16x32xf32>
    tpu.vector_store %arg6[%c0_45, %c0_46, %c0_47], %120 {strides = array<i32>} : memref<1x16x32xf32, #tpu.memory_space<vmem>>, vector<1x16x32xf32>,
    return
  }
  func.func @transform_0(%arg0: i32, %arg1: i32) -> (i32, i32, i32) {
    %c0_i32 = arith.constant 0 : i32
    %c0_i32_0 = arith.constant 0 : i32
    %c0_i32_1 = arith.constant 0 : i32
    return %arg0, %c0_i32, %c0_i32_0 : i32, i32, i32
  }
  func.func @transform_1(%arg0: i32, %arg1: i32) -> (i32, i32) {
    %c0_i32 = arith.constant 0 : i32
    %c0_i32_0 = arith.constant 0 : i32
    %c0_i32_1 = arith.constant 0 : i32
    return %c0_i32, %c0_i32_0 : i32, i32
  }
  func.func @transform_2(%arg0: i32, %arg1: i32) -> (i32, i32, i32) {
    %c0_i32 = arith.constant 0 : i32
    %c0_i32_0 = arith.constant 0 : i32
    %c0_i32_1 = arith.constant 0 : i32
    %c0_i32_2 = arith.constant 0 : i32
    return %c0_i32, %c0_i32_0, %c0_i32_1 : i32, i32, i32
  }
  func.func @transform_3(%arg0: i32, %arg1: i32) -> (i32, i32) {
    %c0_i32 = arith.constant 0 : i32
    %c0_i32_0 = arith.constant 0 : i32
    %c0_i32_1 = arith.constant 0 : i32
    return %c0_i32, %c0_i32_0 : i32, i32
  }
  func.func @transform_4(%arg0: i32, %arg1: i32) -> (i32, i32, i32) {
    %c0_i32 = arith.constant 0 : i32
    %c0_i32_0 = arith.constant 0 : i32
    return %arg0, %arg1, %c0_i32 : i32, i32, i32
  }
}

</mosaic_0001>

<llo_original>
// kernel: tpu_custom_call.1
$region0: #{tpu_custom_call.1}
  #allocation0 [shape = 'u32[]', space=smem, size = 0x4, offset = 0x4, fixed_abs, tag = 'smem constant byte address 0x4 - core index']
  #allocation1 [shape = 'u32[144,128]{1,0:T(1,128)}', space=vmem, size = 0x12000, scoped, tag = 'internal scratch']
  %s0 = inlined_call_operand.hbm [shape: f32[2,16,32], index: 0, kind: input, shape index: {}]
  %s1 = inlined_call_operand.hbm [shape: f32[32,512], index: 1, kind: input, shape index: {}]
  %s2 = inlined_call_operand.hbm [shape: f32[4,32,32], index: 2, kind: input, shape index: {}]
  %s3 = inlined_call_operand.vmem [shape: f32[1,32], index: 3, kind: input, shape index: {}]
  %s4 = inlined_call_operand.hbm [shape: f32[2,16,32], index: 4, kind: output, shape index: {}]
  %s5 = sld [smem:[#allocation0]]
  $region61: #{tpu_custom_call.1} parent=0
    _
  %s7 = ssub.s32 1, %s5
  %s8 = scalar_select 0, %s7, %s5
  $region1: #{tpu_custom_call.1} parent=0
    #allocation2 [shape = 'u8[16384]{0}', space=vmem, size = 0x4000, scoped, tag = 'input window, operand 0']
    #allocation3 [shape = 's32[2]{0}', space=sflag, size = 0x8, scoped, tag = 'scoped memory for tpu_custom_call.1']
    #allocation4 [shape = 's32[2]{0}', space=sflag, size = 0x8, scoped, tag = 'scoped memory for tpu_custom_call.1']
    #allocation5 [shape = 'u8[65536]{0}', space=vmem, size = 0x10000, scoped, tag = 'input window, operand 1, single buffered']
    #allocation6 [shape = 's32[1]{0}', space=sflag, size = 0x4, scoped, tag = 'scoped memory for tpu_custom_call.1']
    #allocation7 [shape = 'u8[65536]{0}', space=vmem, size = 0x10000, scoped, tag = 'input window, operand 2, single buffered']
    #allocation8 [shape = 'u8[16384]{0}', space=vmem, size = 0x4000, scoped, tag = 'output window, operand 0']
    %9 = vsyncpa [#allocation3], 0
    %s10 = scalar_lea.sflag [#allocation3], 1
    %11 = vsyncpa %s10, 0
    %12 = vsyncpa [#allocation6], 0
    %13 = vsyncpa [#allocation4], 0
    %s14 = scalar_lea.sflag [#allocation4], 1
    %15 = vsyncpa %s14, 0
    loop: start=0, step=1, limit=4
    $region2: #{tpu_custom_call.1} parent=1 // loop_pre_header
      _
    $region3: #{tpu_custom_call.1} parent=1 // loop_header
      %s17 = sphi 0, %s21
      %p18 = scmp.ge.s32.totalorder %s17, 4
      %s24 = sphi 0, %s36
      %s25 = sphi 0, %s32
      %s26 = sphi 0, %s24
      %s27 = sphi 0, %s25
      %s28 = sphi 0, %s26
      %s29 = sphi 0, %s27
      %s39 = sphi 0, %s41
      %s42 = sphi 0, %s39
      %s43 = sphi 0, %s42
      %s59 = sphi 0, %s43
      %s63 = sphi 0, %s63
      %s65 = sphi 0, %s63
      %s66 = sphi 0, %s65
      %s80 = sphi 0, %s66
      %s84 = sphi 0, %s84
      %s86 = sphi 0, %s84
      %s87 = sphi 0, %s86
      %s101 = sphi 0, %s87
      %s105 = sphi 0, %s105
      %s107 = sphi 0, %s105
      %s108 = sphi 0, %s107
      %s122 = sphi 0, %s108
      %s130 = sphi 0, %s132
      %s133 = sphi 0, %s130
      %s134 = sphi 0, %s133
      %s150 = sphi 0, %s134
    $region4: #{tpu_custom_call.1} parent=1 // loop_header_branch
      %20 = sbr.rel (%p18) target = $region8
    $region5: #{tpu_custom_call.1} parent=1 // loop_body
      %s22 = ssub.s32 %s17, 1
      %s23 = ssub.s32 %s17, 2
      %s30 = sadd.s32 1, %s25
      %p31 = scmp.ge.s32.totalorder %s30, 1
      %s32 = scalar_select %p31, 0, %s30
      %s33 = sadd.s32 1, %s24
      %s34 = scalar_select %p31, %s33, %s24
      %p35 = scmp.ge.s32.totalorder %s34, 2
      %s36 = scalar_select %p35, 0, %s34
      %s37 = ssub.s32 %s24, %s36
      %p38 = scmp.eq.s32.totalorder %s37, 0
      %s40 = sadd.s32 %s39, 1
      %s41 = scalar_select %p38, %s39, %s40
      %p44 = pneg %p38
      %p45 = scmp.eq.s32.totalorder %s17, 1
      %p46 = por %p44, %p45
      %p47 = scmp.ne.s32.totalorder %s39, %s42
      %p48 = scmp.eq.s32.totalorder %s17, 0
      %p49 = por %p47, %p48
      %p50 = scmp.ne.s32.totalorder %s39, %s42
      %p51 = scmp.eq.s32.totalorder %s22, 1
      %p52 = por %p50, %p51
      %p53 = scmp.ne.s32.totalorder %s42, %s43
      %p54 = scmp.eq.s32.totalorder %s22, 0
      %p55 = por %p53, %p54
      %p56 = scmp.ne.s32.totalorder %s42, %s43
      %p57 = scmp.eq.s32.totalorder %s23, 1
      %p58 = por %p56, %p57
      %p60 = scmp.ne.s32.totalorder %s43, %s59
      %p61 = scmp.eq.s32.totalorder %s23, 0
      %p62 = por %p60, %p61
      %s64 = sadd.s32 %s63, 1
      %p67 = scmp.eq.s32.totalorder %s17, 1
      %p68 = scmp.ne.s32.totalorder %s63, %s65
      %p69 = scmp.eq.s32.totalorder %s17, 0
      %p70 = por %p68, %p69
      %p71 = scmp.ne.s32.totalorder %s63, %s65
      %p72 = scmp.eq.s32.totalorder %s22, 1
      %p73 = por %p71, %p72
      %p74 = scmp.ne.s32.totalorder %s65, %s66
      %p75 = scmp.eq.s32.totalorder %s22, 0
      %p76 = por %p74, %p75
      %p77 = scmp.ne.s32.totalorder %s65, %s66
      %p78 = scmp.eq.s32.totalorder %s23, 1
      %p79 = por %p77, %p78
      %p81 = scmp.ne.s32.totalorder %s66, %s80
      %p82 = scmp.eq.s32.totalorder %s23, 0
      %p83 = por %p81, %p82
      %s85 = sadd.s32 %s84, 1
      %p88 = scmp.eq.s32.totalorder %s17, 1
      %p89 = scmp.ne.s32.totalorder %s84, %s86
      %p90 = scmp.eq.s32.totalorder %s17, 0
      %p91 = por %p89, %p90
      %p92 = scmp.ne.s32.totalorder %s84, %s86
      %p93 = scmp.eq.s32.totalorder %s22, 1
      %p94 = por %p92, %p93
      %p95 = scmp.ne.s32.totalorder %s86, %s87
      %p96 = scmp.eq.s32.totalorder %s22, 0
      %p97 = por %p95, %p96
      %p98 = scmp.ne.s32.totalorder %s86, %s87
      %p99 = scmp.eq.s32.totalorder %s23, 1
      %p100 = por %p98, %p99
      %p102 = scmp.ne.s32.totalorder %s87, %s101
      %p103 = scmp.eq.s32.totalorder %s23, 0
      %p104 = por %p102, %p103
      %s106 = sadd.s32 %s105, 1
      %p109 = scmp.eq.s32.totalorder %s17, 1
      %p110 = scmp.ne.s32.totalorder %s105, %s107
      %p111 = scmp.eq.s32.totalorder %s17, 0
      %p112 = por %p110, %p111
      %p113 = scmp.ne.s32.totalorder %s105, %s107
      %p114 = scmp.eq.s32.totalorder %s22, 1
      %p115 = por %p113, %p114
      %p116 = scmp.ne.s32.totalorder %s107, %s108
      %p117 = scmp.eq.s32.totalorder %s22, 0
      %p118 = por %p116, %p117
      %p119 = scmp.ne.s32.totalorder %s107, %s108
      %p120 = scmp.eq.s32.totalorder %s23, 1
      %p121 = por %p119, %p120
      %p123 = scmp.ne.s32.totalorder %s108, %s122
      %p124 = scmp.eq.s32.totalorder %s23, 0
      %p125 = por %p123, %p124
      %s126 = ssub.s32 %s24, %s36
      %s127 = ssub.s32 %s25, %s32
      %s128 = sor.u32 %s126, %s127
      %p129 = scmp.eq.s32.totalorder %s128, 0
      %s131 = sadd.s32 %s130, 1
      %s132 = scalar_select %p129, %s130, %s131
      %p135 = pneg %p129
      %p136 = scmp.eq.s32.totalorder %s17, 1
      %p137 = por %p135, %p136
      %p138 = scmp.ne.s32.totalorder %s130, %s133
      %p139 = scmp.eq.s32.totalorder %s17, 0
      %p140 = por %p138, %p139
      %p141 = scmp.ne.s32.totalorder %s130, %s133
      %p142 = scmp.eq.s32.totalorder %s22, 1
      %p143 = por %p141, %p142
      %p144 = scmp.ne.s32.totalorder %s133, %s134
      %p145 = scmp.eq.s32.totalorder %s22, 0
      %p146 = por %p144, %p145
      %p147 = scmp.ne.s32.totalorder %s133, %s134
      %p148 = scmp.eq.s32.totalorder %s23, 1
      %p149 = por %p147, %p148
      %p151 = scmp.ne.s32.totalorder %s134, %s150
      %p152 = scmp.eq.s32.totalorder %s23, 0
      %p153 = por %p151, %p152
      %p154 = scmp.le.s32.totalorder 1, %s17
      %p155 = scmp.lt.s32.totalorder %s17, 3
      %p156 = pnand %p154, %p155
      %p157 = pneg %p156
      // Predicated region
      $region9: #{tpu_custom_call.1} parent=5 // pred_check
        _
      $region10: #{tpu_custom_call.1} parent=5 // pred_check_branch
        %159 = sbr.rel (%p156) target = $region12
      $region11: #{tpu_custom_call.1} parent=5 // pred_region
        %s160 = ssub.s32 %s17, 1
        // Predicated region
        $region13: #{tpu_custom_call.1} parent=11 // pred_check
          %p161 = pneg %p76
        $region14: #{tpu_custom_call.1} parent=11 // pred_check_branch
          %163 = sbr.rel (%p161) target = $region16
        $region15: #{tpu_custom_call.1} parent=11 // pred_region
          %s165 = ssub.s32 2048, 2048
          %166 = vsyncadd [#allocation6], %s165
          %s167 = sshll.u32 [#allocation5], 4
          %s168 = int_to_ptr.vmem [resolvable:$true] %s167
          %173 = dma.hbm_to_vmem [thread:$0]  %s1, 2048, %s168, [#allocation6], 512, 512, 32
        $region16: #{tpu_custom_call.1} parent=11 // pred_fallthru
          _
        // Predicated region
        $region17: #{tpu_custom_call.1} parent=11 // pred_check
          %p174 = pneg %p97
        $region18: #{tpu_custom_call.1} parent=11 // pred_check_branch
          %176 = sbr.rel (%p174) target = $region20
        $region19: #{tpu_custom_call.1} parent=11 // pred_region
          %s178 = ssub.s32 2048, 2048
          %179 = vsyncadd [#allocation6], %s178
          %s180 = sshll.u32 [#allocation7], 4
          %s181 = int_to_ptr.vmem [resolvable:$true] %s180
          %186 = dma.hbm_to_vmem [thread:$0]  %s2, 2048, %s181, [#allocation6], 128, 128, 8
        $region20: #{tpu_custom_call.1} parent=11 // pred_fallthru
          _
        // Predicated region
        $region21: #{tpu_custom_call.1} parent=11 // pred_check
          %p187 = pneg %p118
        $region22: #{tpu_custom_call.1} parent=11 // pred_check_branch
          %189 = sbr.rel (%p187) target = $region24
        $region23: #{tpu_custom_call.1} parent=11 // pred_region
          _
        $region24: #{tpu_custom_call.1} parent=11 // pred_fallthru
          _
      $region12: #{tpu_custom_call.1} parent=5 // pred_fallthru
        _
      %p190 = scmp.lt.s32.totalorder %s17, 2
      // Predicated region
      $region25: #{tpu_custom_call.1} parent=5 // pred_check
        %p191 = pneg %p190
      $region26: #{tpu_custom_call.1} parent=5 // pred_check_branch
        %193 = sbr.rel (%p191) target = $region28
      $region27: #{tpu_custom_call.1} parent=5 // pred_region
        // Predicated region
        $region29: #{tpu_custom_call.1} parent=27 // pred_check
          %p194 = pneg %p49
        $region30: #{tpu_custom_call.1} parent=27 // pred_check_branch
          %196 = sbr.rel (%p194) target = $region32
        $region31: #{tpu_custom_call.1} parent=27 // pred_region
          %s197 = sand.u32 %s39, 1
          %s198 = scalar_lea.sflag [#allocation3], %s197
          %s199 = sand.u32 %s39, 1
          %s200 = smul.addr %s199, 16
          %s201 = scalar_lea.vmem [#allocation2], %s200
          %s203 = ssub.s32 256, 256
          %204 = vsyncadd %s198, %s203
          %s205 = smul.addr %s24, 2
          %s206 = smul.addr %s205, 128
          %s207 = scalar_lea.hbm %s0, %s206
          %s208 = sshll.u32 %s201, 4
          %s209 = int_to_ptr.vmem [resolvable:$true] %s208
          %214 = dma.hbm_to_vmem [thread:$0]  %s207, 256, %s209, %s198, 128, 128, 8
        $region32: #{tpu_custom_call.1} parent=27 // pred_fallthru
          _
      $region28: #{tpu_custom_call.1} parent=5 // pred_fallthru
        _
      %p215 = scmp.le.s32.totalorder 1, %s17
      %p216 = scmp.lt.s32.totalorder %s17, 3
      %p217 = pnand %p215, %p216
      %p218 = pneg %p217
      // Predicated region
      $region33: #{tpu_custom_call.1} parent=5 // pred_check
        _
      $region34: #{tpu_custom_call.1} parent=5 // pred_check_branch
        %220 = sbr.rel (%p217) target = $region36
      $region35: #{tpu_custom_call.1} parent=5 // pred_region
        %s221 = ssub.s32 %s17, 1
        %s222 = sand.u32 %s42, 1
        %s223 = scalar_lea.sflag [#allocation3], %s222
        %s224 = sand.u32 %s42, 1
        %s225 = smul.addr %s224, 16
        %s226 = scalar_lea.vmem [#allocation2], %s225
        // Predicated region
        $region37: #{tpu_custom_call.1} parent=35 // pred_check
          %p227 = pneg %p55
        $region38: #{tpu_custom_call.1} parent=35 // pred_check_branch
          %229 = sbr.rel (%p227) target = $region40
        $region39: #{tpu_custom_call.1} parent=35 // pred_region
          %230 = dma.done %s223, 256
        $region40: #{tpu_custom_call.1} parent=35 // pred_fallthru
          _
        // Predicated region
        $region41: #{tpu_custom_call.1} parent=35 // pred_check
          %p231 = pneg %p76
        $region42: #{tpu_custom_call.1} parent=35 // pred_check_branch
          %233 = sbr.rel (%p231) target = $region44
        $region43: #{tpu_custom_call.1} parent=35 // pred_region
          %234 = dma.done [#allocation6], 2048
        $region44: #{tpu_custom_call.1} parent=35 // pred_fallthru
          _
        // Predicated region
        $region45: #{tpu_custom_call.1} parent=35 // pred_check
          %p235 = pneg %p97
        $region46: #{tpu_custom_call.1} parent=35 // pred_check_branch
          %237 = sbr.rel (%p235) target = $region48
        $region47: #{tpu_custom_call.1} parent=35 // pred_region
          %238 = dma.done [#allocation6], 2048
        $region48: #{tpu_custom_call.1} parent=35 // pred_fallthru
          _
        %s239 = sand.u32 %s42, 1
        %s240 = scalar_lea.sflag [#allocation3], %s239
        %s241 = sand.u32 %s42, 1
        %s242 = smul.addr %s241, 16
        %s243 = scalar_lea.vmem [#allocation2], %s242
        %p244 = pneg %p55
        %p245 = pneg %p52
        %p246 = pneg %p76
        %p247 = pneg %p73
        %p248 = pneg %p97
        %p249 = pneg %p94
        %p250 = pneg %p118
        %p251 = pneg %p115
        %p252 = pneg %p146
        %p253 = pneg %p143
        %s254 = sand.u32 %s133, 1
        %s255 = scalar_lea.sflag [#allocation4], %s254
        %s256 = sand.u32 %s133, 1
        %s257 = smul.addr %s256, 16
        %s258 = scalar_lea.vmem [#allocation8], %s257
        %s259 = smul.u32 2, %s27
        %v260 = vld [vmem:[%s226] sm:$0xff]
        %v261 = vld [vmem:[%s226 + $0x8] sm:$0xff]
        %v262 = vld [vmem:[#allocation5] sm:$0xff]
        %v263 = vld [vmem:[#allocation5 + $0x8] sm:$0xff]
        %v264 = vld [vmem:[#allocation5 + $0x10] sm:$0xff]
        %v265 = vld [vmem:[#allocation5 + $0x18] sm:$0xff]
        %v266 = vld [vmem:[#allocation5 + $0x20] sm:$0xff]
        %v267 = vld [vmem:[#allocation5 + $0x28] sm:$0xff]
        %v268 = vld [vmem:[#allocation5 + $0x30] sm:$0xff]
        %v269 = vld [vmem:[#allocation5 + $0x38] sm:$0xff]
        %v270 = vld [vmem:[#allocation5 + $0x40] sm:$0xff]
        %v271 = vld [vmem:[#allocation5 + $0x48] sm:$0xff]
        %v272 = vld [vmem:[#allocation5 + $0x50] sm:$0xff]
        %v273 = vld [vmem:[#allocation5 + $0x58] sm:$0xff]
        %v274 = vld [vmem:[#allocation5 + $0x60] sm:$0xff]
        %v275 = vld [vmem:[#allocation5 + $0x68] sm:$0xff]
        %v276 = vld [vmem:[#allocation5 + $0x70] sm:$0xff]
        %v277 = vld [vmem:[#allocation5 + $0x78] sm:$0xff]
        %vm278 = vcmask 261120
        %v280 = vsel %vm278, %v260, 0
        %v283 = vsel %vm278, %v261, 0
        %285 = vmatprep.subr.mxu0 0.0
        %286 = vmatpush1.msra.mxu0 0.0
        %287 = vmatprep.subr.mxu0 0.0
        %288 = vmatpush1.msra.mxu0 0.0
        %289 = vmatprep.subr.mxu0 0.0
        %290 = vmatpush1.msra.mxu0 0.0
        %291 = vmatprep.subr.mxu0 0.0
        %292 = vmatpush1.msra.mxu0 0.0
        %293 = vmatprep.subr.mxu0 0.0
        %294 = vmatpush1.msra.mxu0 0.0
        %295 = vmatprep.subr.mxu0 0.0
        %296 = vmatpush1.msra.mxu0 0.0
        %297 = vmatprep.subr.mxu0 0.0
        %298 = vmatpush1.msra.mxu0 0.0
        %299 = vmatprep.subr.mxu0 0.0
        %300 = vmatpush1.msra.mxu0 0.0
        %301 = vmatprep.subr.mxu0 0.0
        %302 = vmatpush1.msra.mxu0 0.0
        %303 = vmatprep.subr.mxu0 0.0
        %304 = vmatpush1.msra.mxu0 0.0
        %305 = vmatprep.subr.mxu0 0.0
        %306 = vmatpush1.msra.mxu0 0.0
        %307 = vmatprep.subr.mxu0 0.0
        %308 = vmatpush1.msra.mxu0 0.0
        %309 = vmatprep.subr.mxu0 %v275
        %310 = vmatpush1.msra.mxu0 %v274
        %311 = vmatprep.subr.mxu0 %v271
        %312 = vmatpush1.msra.mxu0 %v270
        %313 = vmatprep.subr.mxu0 %v267
        %314 = vmatpush1.msra.mxu0 %v266
        %315 = vmatprep.subr.mxu0 %v263
        %316 = vmatpush1.msra.mxu0 %v262
        %317 = vmatprep.subr.mxu0 0.0
        %318 = vmatpush2.msra.mxu0 0.0
        %319 = vmatprep.subr.mxu0 0.0
        %320 = vmatpush2.msra.mxu0 0.0
        %321 = vmatprep.subr.mxu0 0.0
        %322 = vmatpush2.msra.mxu0 0.0
        %323 = vmatprep.subr.mxu0 0.0
        %324 = vmatpush2.msra.mxu0 0.0
        %325 = vmatprep.subr.mxu0 0.0
        %326 = vmatpush2.msra.mxu0 0.0
        %327 = vmatprep.subr.mxu0 0.0
        %328 = vmatpush2.msra.mxu0 0.0
        %329 = vmatprep.subr.mxu0 0.0
        %330 = vmatpush2.msra.mxu0 0.0
        %331 = vmatprep.subr.mxu0 0.0
        %332 = vmatpush2.msra.mxu0 0.0
        %333 = vmatprep.subr.mxu0 0.0
        %334 = vmatpush2.msra.mxu0 0.0
        %335 = vmatprep.subr.mxu0 0.0
        %336 = vmatpush2.msra.mxu0 0.0
        %337 = vmatprep.subr.mxu0 0.0
        %338 = vmatpush2.msra.mxu0 0.0
        %339 = vmatprep.subr.mxu0 0.0
        %340 = vmatpush2.msra.mxu0 0.0
        %341 = vmatprep.subr.mxu0 0.0
        %342 = vmatpush2.msra.mxu0 0.0
        %343 = vmatprep.subr.mxu0 0.0
        %344 = vmatpush2.msra.mxu0 0.0
        %345 = vmatprep.subr.mxu0 0.0
        %346 = vmatpush2.msra.mxu0 0.0
        %347 = vmatprep.subr.mxu0 0.0
        %348 = vmatpush2.msra.mxu0 0.0
        %349 = vmatprep.mubr.f32.mxu0 0.0
        %350 = vmatmul.mubr.f32.gmra.mxu0 %v280
        %v351 = vpop.f32.mrf.mxu0
        %v352 = vadd.f32 0.0, %v351
        %v353 = vpop.f32.mrf.mxu0
        %v354 = vadd.f32 0.0, %v353
        %355 = vmatprep.mubr.f32.mxu0 0.0
        %356 = vmatmul.mubr.f32.gmra.mxu0 %v283
        %v357 = vpop.f32.mrf.mxu0
        %v358 = vadd.f32 0.0, %v357
        %v359 = vpop.f32.mrf.mxu0
        %v360 = vadd.f32 0.0, %v359
        %361 = vdwg.mxu0
        %362 = vmatprep.subr.mxu0 0.0
        %363 = vmatpush1.msra.mxu0 0.0
        %364 = vmatprep.subr.mxu0 0.0
        %365 = vmatpush1.msra.mxu0 0.0
        %366 = vmatprep.subr.mxu0 0.0
        %367 = vmatpush1.msra.mxu0 0.0
        %368 = vmatprep.subr.mxu0 0.0
        %369 = vmatpush1.msra.mxu0 0.0
        %370 = vmatprep.subr.mxu0 0.0
        %371 = vmatpush1.msra.mxu0 0.0
        %372 = vmatprep.subr.mxu0 0.0
        %373 = vmatpush1.msra.mxu0 0.0
        %374 = vmatprep.subr.mxu0 0.0
        %375 = vmatpush1.msra.mxu0 0.0
        %376 = vmatprep.subr.mxu0 0.0
        %377 = vmatpush1.msra.mxu0 0.0
        %378 = vmatprep.subr.mxu0 0.0
        %379 = vmatpush1.msra.mxu0 0.0
        %380 = vmatprep.subr.mxu0 0.0
        %381 = vmatpush1.msra.mxu0 0.0
        %382 = vmatprep.subr.mxu0 0.0
        %383 = vmatpush1.msra.mxu0 0.0
        %384 = vmatprep.subr.mxu0 0.0
        %385 = vmatpush1.msra.mxu0 0.0
        %386 = vmatprep.subr.mxu0 %v277
        %387 = vmatpush1.msra.mxu0 %v276
        %388 = vmatprep.subr.mxu0 %v273
        %389 = vmatpush1.msra.mxu0 %v272
        %390 = vmatprep.subr.mxu0 %v269
        %391 = vmatpush1.msra.mxu0 %v268
        %392 = vmatprep.subr.mxu0 %v265
        %393 = vmatpush1.msra.mxu0 %v264
        %394 = vmatprep.subr.mxu0 0.0
        %395 = vmatpush2.msra.mxu0 0.0
        %396 = vmatprep.subr.mxu0 0.0
        %397 = vmatpush2.msra.mxu0 0.0
        %398 = vmatprep.subr.mxu0 0.0
        %399 = vmatpush2.msra.mxu0 0.0
        %400 = vmatprep.subr.mxu0 0.0
        %401 = vmatpush2.msra.mxu0 0.0
        %402 = vmatprep.subr.mxu0 0.0
        %403 = vmatpush2.msra.mxu0 0.0
        %404 = vmatprep.subr.mxu0 0.0
        %405 = vmatpush2.msra.mxu0 0.0
        %406 = vmatprep.subr.mxu0 0.0
        %407 = vmatpush2.msra.mxu0 0.0
        %408 = vmatprep.subr.mxu0 0.0
        %409 = vmatpush2.msra.mxu0 0.0
        %410 = vmatprep.subr.mxu0 0.0
        %411 = vmatpush2.msra.mxu0 0.0
        %412 = vmatprep.subr.mxu0 0.0
        %413 = vmatpush2.msra.mxu0 0.0
        %414 = vmatprep.subr.mxu0 0.0
        %415 = vmatpush2.msra.mxu0 0.0
        %416 = vmatprep.subr.mxu0 0.0
        %417 = vmatpush2.msra.mxu0 0.0
        %418 = vmatprep.subr.mxu0 0.0
        %419 = vmatpush2.msra.mxu0 0.0
        %420 = vmatprep.subr.mxu0 0.0
        %421 = vmatpush2.msra.mxu0 0.0
        %422 = vmatprep.subr.mxu0 0.0
        %423 = vmatpush2.msra.mxu0 0.0
        %424 = vmatprep.subr.mxu0 0.0
        %425 = vmatpush2.msra.mxu0 0.0
        %426 = vmatprep.mubr.f32.mxu0 0.0
        %427 = vmatmul.mubr.f32.gmra.mxu0 %v280
        %v428 = vpop.f32.mrf.mxu0
        %v429 = vadd.f32 0.0, %v428
        %v430 = vpop.f32.mrf.mxu0
        %v431 = vadd.f32 0.0, %v430
        %432 = vmatprep.mubr.f32.mxu0 0.0
        %433 = vmatmul.mubr.f32.gmra.mxu0 %v283
        %v434 = vpop.f32.mrf.mxu0
        %v435 = vadd.f32 0.0, %v434
        %v436 = vpop.f32.mrf.mxu0
        %v437 = vadd.f32 0.0, %v436
        %438 = vdwg.mxu0
        %v439 = vmul.f32 %v352, %v352
        %v440 = vmul.f32 %v358, %v358
        %441 = vadd.xlane.f32.xlu0 %v439
        %v442 = vpop.xlane.xlu0 %441
        %443 = vadd.xlane.f32.xlu0 %v440
        %v444 = vpop.xlane.xlu0 %443
        %445 = vxpose.xlu0.b32.start [1/16] %v442, 128
        %446 = vxpose.xlu0.b32.cont [2/16] %v444, 128
        %447 = vxpose.xlu0.b32.cont [3/16] 0.0, 128
        %448 = vxpose.xlu0.b32.cont [4/16] 0.0, 128
        %449 = vxpose.xlu0.b32.cont [5/16] 0.0, 128
        %450 = vxpose.xlu0.b32.cont [6/16] 0.0, 128
        %451 = vxpose.xlu0.b32.cont [7/16] 0.0, 128
        %452 = vxpose.xlu0.b32.cont [8/16] 0.0, 128
        %453 = vxpose.xlu0.b32.cont [9/16] 0.0, 128
        %454 = vxpose.xlu0.b32.cont [10/16] 0.0, 128
        %455 = vxpose.xlu0.b32.cont [11/16] 0.0, 128
        %456 = vxpose.xlu0.b32.cont [12/16] 0.0, 128
        %457 = vxpose.xlu0.b32.cont [13/16] 0.0, 128
        %458 = vxpose.xlu0.b32.cont [14/16] 0.0, 128
        %459 = vxpose.xlu0.b32.cont [15/16] 0.0, 128
        %460 = vxpose.xlu0.b32.end [16/16] 0.0, 128
        %v461 = vpop.trf.xlu0
        %v462 = vpop.trf.xlu0
        %v463 = vpop.trf.xlu0
        %v464 = vpop.trf.xlu0
        %v465 = vpop.trf.xlu0
        %v466 = vpop.trf.xlu0
        %v467 = vpop.trf.xlu0
        %v468 = vpop.trf.xlu0
        %v469 = vpop.trf.xlu0
        %v470 = vpop.trf.xlu0
        %v471 = vpop.trf.xlu0
        %v472 = vpop.trf.xlu0
        %v473 = vpop.trf.xlu0
        %v474 = vpop.trf.xlu0
        %v475 = vpop.trf.xlu0
        %v476 = vpop.trf.xlu0
        %v477 = vmul.f32 %v461, 0.35355338
        %v478 = vmul.f32 %v354, %v354
        %v479 = vmul.f32 %v360, %v360
        %480 = vadd.xlane.f32.xlu0 %v478
        %v481 = vpop.xlane.xlu0 %480
        %482 = vadd.xlane.f32.xlu0 %v479
        %v483 = vpop.xlane.xlu0 %482
        %484 = vxpose.xlu0.b32.start [1/16] %v481, 128
        %485 = vxpose.xlu0.b32.cont [2/16] %v483, 128
        %486 = vxpose.xlu0.b32.cont [3/16] 0.0, 128
        %487 = vxpose.xlu0.b32.cont [4/16] 0.0, 128
        %488 = vxpose.xlu0.b32.cont [5/16] 0.0, 128
        %489 = vxpose.xlu0.b32.cont [6/16] 0.0, 128
        %490 = vxpose.xlu0.b32.cont [7/16] 0.0, 128
        %491 = vxpose.xlu0.b32.cont [8/16] 0.0, 128
        %492 = vxpose.xlu0.b32.cont [9/16] 0.0, 128
        %493 = vxpose.xlu0.b32.cont [10/16] 0.0, 128
        %494 = vxpose.xlu0.b32.cont [11/16] 0.0, 128
        %495 = vxpose.xlu0.b32.cont [12/16] 0.0, 128
        %496 = vxpose.xlu0.b32.cont [13/16] 0.0, 128
        %497 = vxpose.xlu0.b32.cont [14/16] 0.0, 128
        %498 = vxpose.xlu0.b32.cont [15/16] 0.0, 128
        %499 = vxpose.xlu0.b32.end [16/16] 0.0, 128
        %v500 = vpop.trf.xlu0
        %v501 = vpop.trf.xlu0
        %v502 = vpop.trf.xlu0
        %v503 = vpop.trf.xlu0
        %v504 = vpop.trf.xlu0
        %v505 = vpop.trf.xlu0
        %v506 = vpop.trf.xlu0
        %v507 = vpop.trf.xlu0
        %v508 = vpop.trf.xlu0
        %v509 = vpop.trf.xlu0
        %v510 = vpop.trf.xlu0
        %v511 = vpop.trf.xlu0
        %v512 = vpop.trf.xlu0
        %v513 = vpop.trf.xlu0
        %v514 = vpop.trf.xlu0
        %v515 = vpop.trf.xlu0
        %v516 = vmul.f32 %v500, 0.35355338
        %v517 = vmul.f32 %v429, %v429
        %v518 = vmul.f32 %v435, %v435
        %519 = vadd.xlane.f32.xlu0 %v517
        %v520 = vpop.xlane.xlu0 %519
        %521 = vadd.xlane.f32.xlu0 %v518
        %v522 = vpop.xlane.xlu0 %521
        %523 = vxpose.xlu0.b32.start [1/16] %v520, 128
        %524 = vxpose.xlu0.b32.cont [2/16] %v522, 128
        %525 = vxpose.xlu0.b32.cont [3/16] 0.0, 128
        %526 = vxpose.xlu0.b32.cont [4/16] 0.0, 128
        %527 = vxpose.xlu0.b32.cont [5/16] 0.0, 128
        %528 = vxpose.xlu0.b32.cont [6/16] 0.0, 128
        %529 = vxpose.xlu0.b32.cont [7/16] 0.0, 128
        %530 = vxpose.xlu0.b32.cont [8/16] 0.0, 128
        %531 = vxpose.xlu0.b32.cont [9/16] 0.0, 128
        %532 = vxpose.xlu0.b32.cont [10/16] 0.0, 128
        %533 = vxpose.xlu0.b32.cont [11/16] 0.0, 128
        %534 = vxpose.xlu0.b32.cont [12/16] 0.0, 128
        %535 = vxpose.xlu0.b32.cont [13/16] 0.0, 128
        %536 = vxpose.xlu0.b32.cont [14/16] 0.0, 128
        %537 = vxpose.xlu0.b32.cont [15/16] 0.0, 128
        %538 = vxpose.xlu0.b32.end [16/16] 0.0, 128
        %v539 = vpop.trf.xlu0
        %v540 = vpop.trf.xlu0
        %v541 = vpop.trf.xlu0
        %v542 = vpop.trf.xlu0
        %v543 = vpop.trf.xlu0
        %v544 = vpop.trf.xlu0
        %v545 = vpop.trf.xlu0
        %v546 = vpop.trf.xlu0
        %v547 = vpop.trf.xlu0
        %v548 = vpop.trf.xlu0
        %v549 = vpop.trf.xlu0
        %v550 = vpop.trf.xlu0
        %v551 = vpop.trf.xlu0
        %v552 = vpop.trf.xlu0
        %v553 = vpop.trf.xlu0
        %v554 = vpop.trf.xlu0
        %v555 = vmul.f32 %v539, 0.35355338
        %v556 = vmul.f32 %v431, %v431
        %v557 = vmul.f32 %v437, %v437
        %558 = vadd.xlane.f32.xlu0 %v556
        %v559 = vpop.xlane.xlu0 %558
        %560 = vadd.xlane.f32.xlu0 %v557
        %v561 = vpop.xlane.xlu0 %560
        %562 = vxpose.xlu0.b32.start [1/16] %v559, 128
        %563 = vxpose.xlu0.b32.cont [2/16] %v561, 128
        %564 = vxpose.xlu0.b32.cont [3/16] 0.0, 128
        %565 = vxpose.xlu0.b32.cont [4/16] 0.0, 128
        %566 = vxpose.xlu0.b32.cont [5/16] 0.0, 128
        %567 = vxpose.xlu0.b32.cont [6/16] 0.0, 128
        %568 = vxpose.xlu0.b32.cont [7/16] 0.0, 128
        %569 = vxpose.xlu0.b32.cont [8/16] 0.0, 128
        %570 = vxpose.xlu0.b32.cont [9/16] 0.0, 128
        %571 = vxpose.xlu0.b32.cont [10/16] 0.0, 128
        %572 = vxpose.xlu0.b32.cont [11/16] 0.0, 128
        %573 = vxpose.xlu0.b32.cont [12/16] 0.0, 128
        %574 = vxpose.xlu0.b32.cont [13/16] 0.0, 128
        %575 = vxpose.xlu0.b32.cont [14/16] 0.0, 128
        %576 = vxpose.xlu0.b32.cont [15/16] 0.0, 128
        %577 = vxpose.xlu0.b32.end [16/16] 0.0, 128
        %v578 = vpop.trf.xlu0
        %v579 = vpop.trf.xlu0
        %v580 = vpop.trf.xlu0
        %v581 = vpop.trf.xlu0
        %v582 = vpop.trf.xlu0
        %v583 = vpop.trf.xlu0
        %v584 = vpop.trf.xlu0
        %v585 = vpop.trf.xlu0
        %v586 = vpop.trf.xlu0
        %v587 = vpop.trf.xlu0
        %v588 = vpop.trf.xlu0
        %v589 = vpop.trf.xlu0
        %v590 = vpop.trf.xlu0
        %v591 = vpop.trf.xlu0
        %v592 = vpop.trf.xlu0
        %v593 = vpop.trf.xlu0
        %v594 = vmul.f32 %v578, 0.35355338
        %v595 = vmul.f32 %v352, 0.70710677
        %v596 = vmul.f32 %v354, 0.70710677
        %v597 = vmul.f32 %v429, 0.70710677
        %v598 = vmul.f32 %v431, 0.70710677
        %v599 = vmul.f32 %v358, 0.70710677
        %v600 = vmul.f32 %v360, 0.70710677
        %v601 = vmul.f32 %v435, 0.70710677
        %v602 = vmul.f32 %v437, 0.70710677
        %603 = vmatprep.subr.mxu0 0.0
        %604 = vmatpush1.xpose.msra.mxu0 0.0
        %605 = vmatprep.subr.mxu0 0.0
        %606 = vmatpush1.xpose.msra.mxu0 0.0
        %607 = vmatprep.subr.mxu0 0.0
        %608 = vmatpush1.xpose.msra.mxu0 0.0
        %609 = vmatprep.subr.mxu0 0.0
        %610 = vmatpush1.xpose.msra.mxu0 0.0
        %611 = vmatprep.subr.mxu0 0.0
        %612 = vmatpush1.xpose.msra.mxu0 0.0
        %613 = vmatprep.subr.mxu0 0.0
        %614 = vmatpush1.xpose.msra.mxu0 0.0
        %615 = vmatprep.subr.mxu0 0.0
        %616 = vmatpush1.xpose.msra.mxu0 0.0
        %617 = vmatprep.subr.mxu0 0.0
        %618 = vmatpush1.xpose.msra.mxu0 0.0
        %619 = vmatprep.subr.mxu0 0.0
        %620 = vmatpush1.xpose.msra.mxu0 0.0
        %621 = vmatprep.subr.mxu0 0.0
        %622 = vmatpush1.xpose.msra.mxu0 0.0
        %623 = vmatprep.subr.mxu0 0.0
        %624 = vmatpush1.xpose.msra.mxu0 0.0
        %625 = vmatprep.subr.mxu0 0.0
        %626 = vmatpush1.xpose.msra.mxu0 0.0
        %627 = vmatprep.subr.mxu0 0.0
        %628 = vmatpush1.xpose.msra.mxu0 0.0
        %629 = vmatprep.subr.mxu0 0.0
        %630 = vmatpush1.xpose.msra.mxu0 0.0
        %631 = vmatprep.subr.mxu0 0.0
        %632 = vmatpush1.xpose.msra.mxu0 %v358
        %633 = vmatprep.subr.mxu0 0.0
        %634 = vmatpush1.xpose.msra.mxu0 %v352
        %635 = vmatprep.subr.mxu0 0.0
        %636 = vmatpush2.xpose.msra.mxu0 0.0
        %637 = vmatprep.subr.mxu0 0.0
        %638 = vmatpush2.xpose.msra.mxu0 0.0
        %639 = vmatprep.subr.mxu0 0.0
        %640 = vmatpush2.xpose.msra.mxu0 0.0
        %641 = vmatprep.subr.mxu0 0.0
        %642 = vmatpush2.xpose.msra.mxu0 0.0
        %643 = vmatprep.subr.mxu0 0.0
        %644 = vmatpush2.xpose.msra.mxu0 0.0
        %645 = vmatprep.subr.mxu0 0.0
        %646 = vmatpush2.xpose.msra.mxu0 0.0
        %647 = vmatprep.subr.mxu0 0.0
        %648 = vmatpush2.xpose.msra.mxu0 0.0
        %649 = vmatprep.subr.mxu0 0.0
        %650 = vmatpush2.xpose.msra.mxu0 0.0
        %651 = vmatprep.subr.mxu0 0.0
        %652 = vmatpush2.xpose.msra.mxu0 0.0
        %653 = vmatprep.subr.mxu0 0.0
        %654 = vmatpush2.xpose.msra.mxu0 0.0
        %655 = vmatprep.subr.mxu0 0.0
        %656 = vmatpush2.xpose.msra.mxu0 0.0
        %657 = vmatprep.subr.mxu0 0.0
        %658 = vmatpush2.xpose.msra.mxu0 0.0
        %659 = vmatprep.subr.mxu0 0.0
        %660 = vmatpush2.xpose.msra.mxu0 0.0
        %661 = vmatprep.subr.mxu0 0.0
        %662 = vmatpush2.xpose.msra.mxu0 0.0
        %663 = vmatprep.subr.mxu0 0.0
        %664 = vmatpush2.xpose.msra.mxu0 0.0
        %665 = vmatprep.subr.mxu0 0.0
        %666 = vmatpush2.xpose.msra.mxu0 0.0
        %667 = vmatprep.mubr.f32.mxu0 0.0
        %668 = vmatmul.mubr.f32.gmra.mxu0 %v595
        %v669 = vpop.f32.mrf.mxu0
        %v670 = vadd.f32 0.0, %v669
        %v671 = vpop.f32.mrf.mxu0
        %672 = vmatprep.mubr.f32.mxu0 0.0
        %673 = vmatmul.mubr.f32.gmra.mxu0 %v599
        %v674 = vpop.f32.mrf.mxu0
        %v675 = vadd.f32 0.0, %v674
        %v676 = vpop.f32.mrf.mxu0
        %677 = vdwg.mxu0
        %v678 = vlaneseq
        %v679 = vshrl.u32 %v678, 7
        %v680 = vsub.s32 0, %v679
        %v681 = vrot.slane %v477, %v680
        %v682 = vsub.f32 %v670, %v681
        %v683 = vsub.f32 %v675, %v681
        %vm684 = vcmask 130048
        %v685 = vsel %vm684, %v682, -inf
        %686 = vmax.xlane.f32.xlu0 %v685
        %v687 = vpop.xlane.xlu0 %686
        %v688 = vsel %vm684, %v683, -inf
        %689 = vmax.xlane.f32.xlu0 %v688
        %v690 = vpop.xlane.xlu0 %689
        %v691 = vsub.f32 %v682, %v687
        %v692 = vsub.f32 %v683, %v690
        %v693 = vmul.f32 %v691, 1.442695
        %v694 = vpow.pop %v693
        %v695 = vmul.f32 %v692, 1.442695
        %v696 = vpow.pop %v695
        %v697 = vsel %vm684, %v694, 0.0
        %698 = vadd.xlane.f32.xlu0 %v697
        %v699 = vpop.xlane.xlu0 %698
        %v700 = vsel %vm684, %v696, 0.0
        %701 = vadd.xlane.f32.xlu0 %v700
        %v702 = vpop.xlane.xlu0 %701
        %v704 = vsel %vm684, %v694, 0
        %v707 = vsel %vm684, %v696, 0
        %709 = vmatprep.subr.mxu0 0.0
        %710 = vmatpush1.msra.mxu0 0.0
        %711 = vmatprep.subr.mxu0 0.0
        %712 = vmatpush1.msra.mxu0 0.0
        %713 = vmatprep.subr.mxu0 0.0
        %714 = vmatpush1.msra.mxu0 0.0
        %715 = vmatprep.subr.mxu0 0.0
        %716 = vmatpush1.msra.mxu0 0.0
        %717 = vmatprep.subr.mxu0 0.0
        %718 = vmatpush1.msra.mxu0 0.0
        %719 = vmatprep.subr.mxu0 0.0
        %720 = vmatpush1.msra.mxu0 0.0
        %721 = vmatprep.subr.mxu0 0.0
        %722 = vmatpush1.msra.mxu0 0.0
        %723 = vmatprep.subr.mxu0 0.0
        %724 = vmatpush1.msra.mxu0 0.0
        %725 = vmatprep.subr.mxu0 0.0
        %726 = vmatpush1.msra.mxu0 0.0
        %727 = vmatprep.subr.mxu0 0.0
        %728 = vmatpush1.msra.mxu0 0.0
        %729 = vmatprep.subr.mxu0 0.0
        %730 = vmatpush1.msra.mxu0 0.0
        %731 = vmatprep.subr.mxu0 0.0
        %732 = vmatpush1.msra.mxu0 0.0
        %733 = vmatprep.subr.mxu0 0.0
        %734 = vmatpush1.msra.mxu0 0.0
        %735 = vmatprep.subr.mxu0 0.0
        %736 = vmatpush1.msra.mxu0 0.0
        %737 = vmatprep.subr.mxu0 0.0
        %738 = vmatpush1.msra.mxu0 %v261
        %739 = vmatprep.subr.mxu0 0.0
        %740 = vmatpush1.msra.mxu0 %v260
        %741 = vmatprep.subr.mxu0 0.0
        %742 = vmatpush2.msra.mxu0 0.0
        %743 = vmatprep.subr.mxu0 0.0
        %744 = vmatpush2.msra.mxu0 0.0
        %745 = vmatprep.subr.mxu0 0.0
        %746 = vmatpush2.msra.mxu0 0.0
        %747 = vmatprep.subr.mxu0 0.0
        %748 = vmatpush2.msra.mxu0 0.0
        %749 = vmatprep.subr.mxu0 0.0
        %750 = vmatpush2.msra.mxu0 0.0
        %751 = vmatprep.subr.mxu0 0.0
        %752 = vmatpush2.msra.mxu0 0.0
        %753 = vmatprep.subr.mxu0 0.0
        %754 = vmatpush2.msra.mxu0 0.0
        %755 = vmatprep.subr.mxu0 0.0
        %756 = vmatpush2.msra.mxu0 0.0
        %757 = vmatprep.subr.mxu0 0.0
        %758 = vmatpush2.msra.mxu0 0.0
        %759 = vmatprep.subr.mxu0 0.0
        %760 = vmatpush2.msra.mxu0 0.0
        %761 = vmatprep.subr.mxu0 0.0
        %762 = vmatpush2.msra.mxu0 0.0
        %763 = vmatprep.subr.mxu0 0.0
        %764 = vmatpush2.msra.mxu0 0.0
        %765 = vmatprep.subr.mxu0 0.0
        %766 = vmatpush2.msra.mxu0 0.0
        %767 = vmatprep.subr.mxu0 0.0
        %768 = vmatpush2.msra.mxu0 0.0
        %769 = vmatprep.subr.mxu0 0.0
        %770 = vmatpush2.msra.mxu0 0.0
        %771 = vmatprep.subr.mxu0 0.0
        %772 = vmatpush2.msra.mxu0 0.0
        %773 = vmatprep.mubr.f32.mxu0 0.0
        %774 = vmatmul.mubr.f32.gmra.mxu0 %v704
        %v775 = vpop.f32.mrf.mxu0
        %v776 = vadd.f32 0.0, %v775
        %v777 = vpop.f32.mrf.mxu0
        %778 = vmatprep.mubr.f32.mxu0 0.0
        %779 = vmatmul.mubr.f32.gmra.mxu0 %v707
        %v780 = vpop.f32.mrf.mxu0
        %v781 = vadd.f32 0.0, %v780
        %v782 = vpop.f32.mrf.mxu0
        %783 = vdwg.mxu0
        %v784 = vrcp.pop %v699
        %v785 = vrcp.pop %v702
        %v786 = vmul.f32 %v776, %v784
        %v787 = vmul.f32 %v781, %v785
        %v788 = vld [vmem:[#allocation7] sm:$0xff]
        %v789 = vld [vmem:[#allocation7 + $0x8] sm:$0xff]
        %v790 = vld [vmem:[#allocation7 + $0x10] sm:$0xff]
        %v791 = vld [vmem:[#allocation7 + $0x18] sm:$0xff]
        %792 = vmatprep.subr.mxu0 0.0
        %793 = vmatpush1.xpose.msra.mxu0 0.0
        %794 = vmatprep.subr.mxu0 0.0
        %795 = vmatpush1.xpose.msra.mxu0 0.0
        %796 = vmatprep.subr.mxu0 0.0
        %797 = vmatpush1.xpose.msra.mxu0 0.0
        %798 = vmatprep.subr.mxu0 0.0
        %799 = vmatpush1.xpose.msra.mxu0 0.0
        %800 = vmatprep.subr.mxu0 0.0
        %801 = vmatpush1.xpose.msra.mxu0 0.0
        %802 = vmatprep.subr.mxu0 0.0
        %803 = vmatpush1.xpose.msra.mxu0 0.0
        %804 = vmatprep.subr.mxu0 0.0
        %805 = vmatpush1.xpose.msra.mxu0 0.0
        %806 = vmatprep.subr.mxu0 0.0
        %807 = vmatpush1.xpose.msra.mxu0 0.0
        %808 = vmatprep.subr.mxu0 0.0
        %809 = vmatpush1.xpose.msra.mxu0 0.0
        %810 = vmatprep.subr.mxu0 0.0
        %811 = vmatpush1.xpose.msra.mxu0 0.0
        %812 = vmatprep.subr.mxu0 0.0
        %813 = vmatpush1.xpose.msra.mxu0 0.0
        %814 = vmatprep.subr.mxu0 0.0
        %815 = vmatpush1.xpose.msra.mxu0 0.0
        %816 = vmatprep.subr.mxu0 0.0
        %817 = vmatpush1.xpose.msra.mxu0 0.0
        %818 = vmatprep.subr.mxu0 0.0
        %819 = vmatpush1.xpose.msra.mxu0 0.0
        %820 = vmatprep.subr.mxu0 0.0
        %821 = vmatpush1.xpose.msra.mxu0 %v360
        %822 = vmatprep.subr.mxu0 0.0
        %823 = vmatpush1.xpose.msra.mxu0 %v354
        %824 = vmatprep.subr.mxu0 0.0
        %825 = vmatpush2.xpose.msra.mxu0 0.0
        %826 = vmatprep.subr.mxu0 0.0
        %827 = vmatpush2.xpose.msra.mxu0 0.0
        %828 = vmatprep.subr.mxu0 0.0
        %829 = vmatpush2.xpose.msra.mxu0 0.0
        %830 = vmatprep.subr.mxu0 0.0
        %831 = vmatpush2.xpose.msra.mxu0 0.0
        %832 = vmatprep.subr.mxu0 0.0
        %833 = vmatpush2.xpose.msra.mxu0 0.0
        %834 = vmatprep.subr.mxu0 0.0
        %835 = vmatpush2.xpose.msra.mxu0 0.0
        %836 = vmatprep.subr.mxu0 0.0
        %837 = vmatpush2.xpose.msra.mxu0 0.0
        %838 = vmatprep.subr.mxu0 0.0
        %839 = vmatpush2.xpose.msra.mxu0 0.0
        %840 = vmatprep.subr.mxu0 0.0
        %841 = vmatpush2.xpose.msra.mxu0 0.0
        %842 = vmatprep.subr.mxu0 0.0
        %843 = vmatpush2.xpose.msra.mxu0 0.0
        %844 = vmatprep.subr.mxu0 0.0
        %845 = vmatpush2.xpose.msra.mxu0 0.0
        %846 = vmatprep.subr.mxu0 0.0
        %847 = vmatpush2.xpose.msra.mxu0 0.0
        %848 = vmatprep.subr.mxu0 0.0
        %849 = vmatpush2.xpose.msra.mxu0 0.0
        %850 = vmatprep.subr.mxu0 0.0
        %851 = vmatpush2.xpose.msra.mxu0 0.0
        %852 = vmatprep.subr.mxu0 0.0
        %853 = vmatpush2.xpose.msra.mxu0 0.0
        %854 = vmatprep.subr.mxu0 0.0
        %855 = vmatpush2.xpose.msra.mxu0 0.0
        %856 = vmatprep.mubr.f32.mxu0 0.0
        %857 = vmatmul.mubr.f32.gmra.mxu0 %v596
        %v858 = vpop.f32.mrf.mxu0
        %v859 = vadd.f32 0.0, %v858
        %v860 = vpop.f32.mrf.mxu0
        %861 = vmatprep.mubr.f32.mxu0 0.0
        %862 = vmatmul.mubr.f32.gmra.mxu0 %v600
        %v863 = vpop.f32.mrf.mxu0
        %v864 = vadd.f32 0.0, %v863
        %v865 = vpop.f32.mrf.mxu0
        %866 = vdwg.mxu0
        %v867 = vlaneseq
        %v868 = vshrl.u32 %v867, 7
        %v869 = vsub.s32 0, %v868
        %v870 = vrot.slane %v516, %v869
        %v871 = vsub.f32 %v859, %v870
        %v872 = vsub.f32 %v864, %v870
        %v873 = vsel %vm684, %v871, -inf
        %874 = vmax.xlane.f32.xlu0 %v873
        %v875 = vpop.xlane.xlu0 %874
        %v876 = vsel %vm684, %v872, -inf
        %877 = vmax.xlane.f32.xlu0 %v876
        %v878 = vpop.xlane.xlu0 %877
        %v879 = vsub.f32 %v871, %v875
        %v880 = vsub.f32 %v872, %v878
        %v881 = vmul.f32 %v879, 1.442695
        %v882 = vpow.pop %v881
        %v883 = vmul.f32 %v880, 1.442695
        %v884 = vpow.pop %v883
        %v885 = vsel %vm684, %v882, 0.0
        %886 = vadd.xlane.f32.xlu0 %v885
        %v887 = vpop.xlane.xlu0 %886
        %v888 = vsel %vm684, %v884, 0.0
        %889 = vadd.xlane.f32.xlu0 %v888
        %v890 = vpop.xlane.xlu0 %889
        %v892 = vsel %vm684, %v882, 0
        %v895 = vsel %vm684, %v884, 0
        %897 = vmatprep.subr.mxu0 0.0
        %898 = vmatpush1.msra.mxu0 0.0
        %899 = vmatprep.subr.mxu0 0.0
        %900 = vmatpush1.msra.mxu0 0.0
        %901 = vmatprep.subr.mxu0 0.0
        %902 = vmatpush1.msra.mxu0 0.0
        %903 = vmatprep.subr.mxu0 0.0
        %904 = vmatpush1.msra.mxu0 0.0
        %905 = vmatprep.subr.mxu0 0.0
        %906 = vmatpush1.msra.mxu0 0.0
        %907 = vmatprep.subr.mxu0 0.0
        %908 = vmatpush1.msra.mxu0 0.0
        %909 = vmatprep.subr.mxu0 0.0
        %910 = vmatpush1.msra.mxu0 0.0
        %911 = vmatprep.subr.mxu0 0.0
        %912 = vmatpush1.msra.mxu0 0.0
        %913 = vmatprep.subr.mxu0 0.0
        %914 = vmatpush1.msra.mxu0 0.0
        %915 = vmatprep.subr.mxu0 0.0
        %916 = vmatpush1.msra.mxu0 0.0
        %917 = vmatprep.subr.mxu0 0.0
        %918 = vmatpush1.msra.mxu0 0.0
        %919 = vmatprep.subr.mxu0 0.0
        %920 = vmatpush1.msra.mxu0 0.0
        %921 = vmatprep.subr.mxu0 0.0
        %922 = vmatpush1.msra.mxu0 0.0
        %923 = vmatprep.subr.mxu0 0.0
        %924 = vmatpush1.msra.mxu0 0.0
        %925 = vmatprep.subr.mxu0 0.0
        %926 = vmatpush1.msra.mxu0 %v261
        %927 = vmatprep.subr.mxu0 0.0
        %928 = vmatpush1.msra.mxu0 %v260
        %929 = vmatprep.subr.mxu0 0.0
        %930 = vmatpush2.msra.mxu0 0.0
        %931 = vmatprep.subr.mxu0 0.0
        %932 = vmatpush2.msra.mxu0 0.0
        %933 = vmatprep.subr.mxu0 0.0
        %934 = vmatpush2.msra.mxu0 0.0
        %935 = vmatprep.subr.mxu0 0.0
        %936 = vmatpush2.msra.mxu0 0.0
        %937 = vmatprep.subr.mxu0 0.0
        %938 = vmatpush2.msra.mxu0 0.0
        %939 = vmatprep.subr.mxu0 0.0
        %940 = vmatpush2.msra.mxu0 0.0
        %941 = vmatprep.subr.mxu0 0.0
        %942 = vmatpush2.msra.mxu0 0.0
        %943 = vmatprep.subr.mxu0 0.0
        %944 = vmatpush2.msra.mxu0 0.0
        %945 = vmatprep.subr.mxu0 0.0
        %946 = vmatpush2.msra.mxu0 0.0
        %947 = vmatprep.subr.mxu0 0.0
        %948 = vmatpush2.msra.mxu0 0.0
        %949 = vmatprep.subr.mxu0 0.0
        %950 = vmatpush2.msra.mxu0 0.0
        %951 = vmatprep.subr.mxu0 0.0
        %952 = vmatpush2.msra.mxu0 0.0
        %953 = vmatprep.subr.mxu0 0.0
        %954 = vmatpush2.msra.mxu0 0.0
        %955 = vmatprep.subr.mxu0 0.0
        %956 = vmatpush2.msra.mxu0 0.0
        %957 = vmatprep.subr.mxu0 0.0
        %958 = vmatpush2.msra.mxu0 0.0
        %959 = vmatprep.subr.mxu0 0.0
        %960 = vmatpush2.msra.mxu0 0.0
        %961 = vmatprep.mubr.f32.mxu0 0.0
        %962 = vmatmul.mubr.f32.gmra.mxu0 %v892
        %v963 = vpop.f32.mrf.mxu0
        %v964 = vadd.f32 0.0, %v963
        %v965 = vpop.f32.mrf.mxu0
        %966 = vmatprep.mubr.f32.mxu0 0.0
        %967 = vmatmul.mubr.f32.gmra.mxu0 %v895
        %v968 = vpop.f32.mrf.mxu0
        %v969 = vadd.f32 0.0, %v968
        %v970 = vpop.f32.mrf.mxu0
        %971 = vdwg.mxu0
        %v972 = vrcp.pop %v887
        %v973 = vrcp.pop %v890
        %v974 = vmul.f32 %v964, %v972
        %v975 = vmul.f32 %v969, %v973
        %s976 = scalar_lea.vmem [#allocation7], 32
        %v977 = vld [vmem:[%s976] sm:$0xff]
        %v978 = vld [vmem:[%s976 + $0x8] sm:$0xff]
        %v979 = vld [vmem:[%s976 + $0x10] sm:$0xff]
        %v980 = vld [vmem:[%s976 + $0x18] sm:$0xff]
        %v982 = vsel %vm278, %v974, 0
        %v985 = vsel %vm278, %v975, 0
        %987 = vmatprep.subr.mxu0 0.0
        %988 = vmatpush1.msra.mxu0 0.0
        %989 = vmatprep.subr.mxu0 0.0
        %990 = vmatpush1.msra.mxu0 0.0
        %991 = vmatprep.subr.mxu0 0.0
        %992 = vmatpush1.msra.mxu0 0.0
        %993 = vmatprep.subr.mxu0 0.0
        %994 = vmatpush1.msra.mxu0 0.0
        %995 = vmatprep.subr.mxu0 0.0
        %996 = vmatpush1.msra.mxu0 0.0
        %997 = vmatprep.subr.mxu0 0.0
        %998 = vmatpush1.msra.mxu0 0.0
        %999 = vmatprep.subr.mxu0 0.0
        %1000 = vmatpush1.msra.mxu0 0.0
        %1001 = vmatprep.subr.mxu0 0.0
        %1002 = vmatpush1.msra.mxu0 0.0
        %1003 = vmatprep.subr.mxu0 0.0
        %1004 = vmatpush1.msra.mxu0 0.0
        %1005 = vmatprep.subr.mxu0 0.0
        %1006 = vmatpush1.msra.mxu0 0.0
        %1007 = vmatprep.subr.mxu0 0.0
        %1008 = vmatpush1.msra.mxu0 0.0
        %1009 = vmatprep.subr.mxu0 0.0
        %1010 = vmatpush1.msra.mxu0 0.0
        %1011 = vmatprep.subr.mxu0 0.0
        %1012 = vmatpush1.msra.mxu0 %v980
        %1013 = vmatprep.subr.mxu0 0.0
        %1014 = vmatpush1.msra.mxu0 %v979
        %1015 = vmatprep.subr.mxu0 0.0
        %1016 = vmatpush1.msra.mxu0 %v978
        %1017 = vmatprep.subr.mxu0 0.0
        %1018 = vmatpush1.msra.mxu0 %v977
        %1019 = vmatprep.subr.mxu0 0.0
        %1020 = vmatpush2.msra.mxu0 0.0
        %1021 = vmatprep.subr.mxu0 0.0
        %1022 = vmatpush2.msra.mxu0 0.0
        %1023 = vmatprep.subr.mxu0 0.0
        %1024 = vmatpush2.msra.mxu0 0.0
        %1025 = vmatprep.subr.mxu0 0.0
        %1026 = vmatpush2.msra.mxu0 0.0
        %1027 = vmatprep.subr.mxu0 0.0
        %1028 = vmatpush2.msra.mxu0 0.0
        %1029 = vmatprep.subr.mxu0 0.0
        %1030 = vmatpush2.msra.mxu0 0.0
        %1031 = vmatprep.subr.mxu0 0.0
        %1032 = vmatpush2.msra.mxu0 0.0
        %1033 = vmatprep.subr.mxu0 0.0
        %1034 = vmatpush2.msra.mxu0 0.0
        %1035 = vmatprep.subr.mxu0 0.0
        %1036 = vmatpush2.msra.mxu0 0.0
        %1037 = vmatprep.subr.mxu0 0.0
        %1038 = vmatpush2.msra.mxu0 0.0
        %1039 = vmatprep.subr.mxu0 0.0
        %1040 = vmatpush2.msra.mxu0 0.0
        %1041 = vmatprep.subr.mxu0 0.0
        %1042 = vmatpush2.msra.mxu0 0.0
        %1043 = vmatprep.subr.mxu0 0.0
        %1044 = vmatpush2.msra.mxu0 0.0
        %1045 = vmatprep.subr.mxu0 0.0
        %1046 = vmatpush2.msra.mxu0 0.0
        %1047 = vmatprep.subr.mxu0 0.0
        %1048 = vmatpush2.msra.mxu0 0.0
        %1049 = vmatprep.subr.mxu0 0.0
        %1050 = vmatpush2.msra.mxu0 0.0
        %1051 = vmatprep.mubr.f32.mxu0 0.0
        %1052 = vmatmul.mubr.f32.gmra.mxu0 %v982
        %v1053 = vpop.f32.mrf.mxu0
        %v1054 = vadd.f32 0.0, %v1053
        %v1055 = vpop.f32.mrf.mxu0
        %1056 = vmatprep.mubr.f32.mxu0 0.0
        %1057 = vmatmul.mubr.f32.gmra.mxu0 %v985
        %v1058 = vpop.f32.mrf.mxu0
        %v1059 = vadd.f32 0.0, %v1058
        %v1060 = vpop.f32.mrf.mxu0
        %1061 = vdwg.mxu0
        %v1063 = vsel %vm278, %v786, 0
        %v1066 = vsel %vm278, %v787, 0
        %1068 = vmatprep.subr.mxu0 0.0
        %1069 = vmatpush1.msra.mxu0 0.0
        %1070 = vmatprep.subr.mxu0 0.0
        %1071 = vmatpush1.msra.mxu0 0.0
        %1072 = vmatprep.subr.mxu0 0.0
        %1073 = vmatpush1.msra.mxu0 0.0
        %1074 = vmatprep.subr.mxu0 0.0
        %1075 = vmatpush1.msra.mxu0 0.0
        %1076 = vmatprep.subr.mxu0 0.0
        %1077 = vmatpush1.msra.mxu0 0.0
        %1078 = vmatprep.subr.mxu0 0.0
        %1079 = vmatpush1.msra.mxu0 0.0
        %1080 = vmatprep.subr.mxu0 0.0
        %1081 = vmatpush1.msra.mxu0 0.0
        %1082 = vmatprep.subr.mxu0 0.0
        %1083 = vmatpush1.msra.mxu0 0.0
        %1084 = vmatprep.subr.mxu0 0.0
        %1085 = vmatpush1.msra.mxu0 0.0
        %1086 = vmatprep.subr.mxu0 0.0
        %1087 = vmatpush1.msra.mxu0 0.0
        %1088 = vmatprep.subr.mxu0 0.0
        %1089 = vmatpush1.msra.mxu0 0.0
        %1090 = vmatprep.subr.mxu0 0.0
        %1091 = vmatpush1.msra.mxu0 0.0
        %1092 = vmatprep.subr.mxu0 0.0
        %1093 = vmatpush1.msra.mxu0 %v791
        %1094 = vmatprep.subr.mxu0 0.0
        %1095 = vmatpush1.msra.mxu0 %v790
        %1096 = vmatprep.subr.mxu0 0.0
        %1097 = vmatpush1.msra.mxu0 %v789
        %1098 = vmatprep.subr.mxu0 0.0
        %1099 = vmatpush1.msra.mxu0 %v788
        %1100 = vmatprep.subr.mxu0 0.0
        %1101 = vmatpush2.msra.mxu0 0.0
        %1102 = vmatprep.subr.mxu0 0.0
        %1103 = vmatpush2.msra.mxu0 0.0
        %1104 = vmatprep.subr.mxu0 0.0
        %1105 = vmatpush2.msra.mxu0 0.0
        %1106 = vmatprep.subr.mxu0 0.0
        %1107 = vmatpush2.msra.mxu0 0.0
        %1108 = vmatprep.subr.mxu0 0.0
        %1109 = vmatpush2.msra.mxu0 0.0
        %1110 = vmatprep.subr.mxu0 0.0
        %1111 = vmatpush2.msra.mxu0 0.0
        %1112 = vmatprep.subr.mxu0 0.0
        %1113 = vmatpush2.msra.mxu0 0.0
        %1114 = vmatprep.subr.mxu0 0.0
        %1115 = vmatpush2.msra.mxu0 0.0
        %1116 = vmatprep.subr.mxu0 0.0
        %1117 = vmatpush2.msra.mxu0 0.0
        %1118 = vmatprep.subr.mxu0 0.0
        %1119 = vmatpush2.msra.mxu0 0.0
        %1120 = vmatprep.subr.mxu0 0.0
        %1121 = vmatpush2.msra.mxu0 0.0
        %1122 = vmatprep.subr.mxu0 0.0
        %1123 = vmatpush2.msra.mxu0 0.0
        %1124 = vmatprep.subr.mxu0 0.0
        %1125 = vmatpush2.msra.mxu0 0.0
        %1126 = vmatprep.subr.mxu0 0.0
        %1127 = vmatpush2.msra.mxu0 0.0
        %1128 = vmatprep.subr.mxu0 0.0
        %1129 = vmatpush2.msra.mxu0 0.0
        %1130 = vmatprep.subr.mxu0 0.0
        %1131 = vmatpush2.msra.mxu0 0.0
        %1132 = vmatprep.mubr.f32.mxu0 0.0
        %1133 = vmatmul.mubr.f32.gmra.mxu0 %v1063
        %v1134 = vpop.f32.mrf.mxu0
        %v1135 = vadd.f32 %v1054, %v1134
        %v1136 = vpop.f32.mrf.mxu0
        %1137 = vmatprep.mubr.f32.mxu0 0.0
        %1138 = vmatmul.mubr.f32.gmra.mxu0 %v1066
        %v1139 = vpop.f32.mrf.mxu0
        %v1140 = vadd.f32 %v1059, %v1139
        %v1141 = vpop.f32.mrf.mxu0
        %1142 = vdwg.mxu0
        %1143 = vmatprep.subr.mxu0 0.0
        %1144 = vmatpush1.xpose.msra.mxu0 0.0
        %1145 = vmatprep.subr.mxu0 0.0
        %1146 = vmatpush1.xpose.msra.mxu0 0.0
        %1147 = vmatprep.subr.mxu0 0.0
        %1148 = vmatpush1.xpose.msra.mxu0 0.0
        %1149 = vmatprep.subr.mxu0 0.0
        %1150 = vmatpush1.xpose.msra.mxu0 0.0
        %1151 = vmatprep.subr.mxu0 0.0
        %1152 = vmatpush1.xpose.msra.mxu0 0.0
        %1153 = vmatprep.subr.mxu0 0.0
        %1154 = vmatpush1.xpose.msra.mxu0 0.0
        %1155 = vmatprep.subr.mxu0 0.0
        %1156 = vmatpush1.xpose.msra.mxu0 0.0
        %1157 = vmatprep.subr.mxu0 0.0
        %1158 = vmatpush1.xpose.msra.mxu0 0.0
        %1159 = vmatprep.subr.mxu0 0.0
        %1160 = vmatpush1.xpose.msra.mxu0 0.0
        %1161 = vmatprep.subr.mxu0 0.0
        %1162 = vmatpush1.xpose.msra.mxu0 0.0
        %1163 = vmatprep.subr.mxu0 0.0
        %1164 = vmatpush1.xpose.msra.mxu0 0.0
        %1165 = vmatprep.subr.mxu0 0.0
        %1166 = vmatpush1.xpose.msra.mxu0 0.0
        %1167 = vmatprep.subr.mxu0 0.0
        %1168 = vmatpush1.xpose.msra.mxu0 0.0
        %1169 = vmatprep.subr.mxu0 0.0
        %1170 = vmatpush1.xpose.msra.mxu0 0.0
        %1171 = vmatprep.subr.mxu0 0.0
        %1172 = vmatpush1.xpose.msra.mxu0 %v435
        %1173 = vmatprep.subr.mxu0 0.0
        %1174 = vmatpush1.xpose.msra.mxu0 %v429
        %1175 = vmatprep.subr.mxu0 0.0
        %1176 = vmatpush2.xpose.msra.mxu0 0.0
        %1177 = vmatprep.subr.mxu0 0.0
        %1178 = vmatpush2.xpose.msra.mxu0 0.0
        %1179 = vmatprep.subr.mxu0 0.0
        %1180 = vmatpush2.xpose.msra.mxu0 0.0
        %1181 = vmatprep.subr.mxu0 0.0
        %1182 = vmatpush2.xpose.msra.mxu0 0.0
        %1183 = vmatprep.subr.mxu0 0.0
        %1184 = vmatpush2.xpose.msra.mxu0 0.0
        %1185 = vmatprep.subr.mxu0 0.0
        %1186 = vmatpush2.xpose.msra.mxu0 0.0
        %1187 = vmatprep.subr.mxu0 0.0
        %1188 = vmatpush2.xpose.msra.mxu0 0.0
        %1189 = vmatprep.subr.mxu0 0.0
        %1190 = vmatpush2.xpose.msra.mxu0 0.0
        %1191 = vmatprep.subr.mxu0 0.0
        %1192 = vmatpush2.xpose.msra.mxu0 0.0
        %1193 = vmatprep.subr.mxu0 0.0
        %1194 = vmatpush2.xpose.msra.mxu0 0.0
        %1195 = vmatprep.subr.mxu0 0.0
        %1196 = vmatpush2.xpose.msra.mxu0 0.0
        %1197 = vmatprep.subr.mxu0 0.0
        %1198 = vmatpush2.xpose.msra.mxu0 0.0
        %1199 = vmatprep.subr.mxu0 0.0
        %1200 = vmatpush2.xpose.msra.mxu0 0.0
        %1201 = vmatprep.subr.mxu0 0.0
        %1202 = vmatpush2.xpose.msra.mxu0 0.0
        %1203 = vmatprep.subr.mxu0 0.0
        %1204 = vmatpush2.xpose.msra.mxu0 0.0
        %1205 = vmatprep.subr.mxu0 0.0
        %1206 = vmatpush2.xpose.msra.mxu0 0.0
        %1207 = vmatprep.mubr.f32.mxu0 0.0
        %1208 = vmatmul.mubr.f32.gmra.mxu0 %v597
        %v1209 = vpop.f32.mrf.mxu0
        %v1210 = vadd.f32 0.0, %v1209
        %v1211 = vpop.f32.mrf.mxu0
        %1212 = vmatprep.mubr.f32.mxu0 0.0
        %1213 = vmatmul.mubr.f32.gmra.mxu0 %v601
        %v1214 = vpop.f32.mrf.mxu0
        %v1215 = vadd.f32 0.0, %v1214
        %v1216 = vpop.f32.mrf.mxu0
        %1217 = vdwg.mxu0
        %v1218 = vlaneseq
        %v1219 = vshrl.u32 %v1218, 7
        %v1220 = vsub.s32 0, %v1219
        %v1221 = vrot.slane %v555, %v1220
        %v1222 = vsub.f32 %v1210, %v1221
        %v1223 = vsub.f32 %v1215, %v1221
        %v1224 = vsel %vm684, %v1222, -inf
        %1225 = vmax.xlane.f32.xlu0 %v1224
        %v1226 = vpop.xlane.xlu0 %1225
        %v1227 = vsel %vm684, %v1223, -inf
        %1228 = vmax.xlane.f32.xlu0 %v1227
        %v1229 = vpop.xlane.xlu0 %1228
        %v1230 = vsub.f32 %v1222, %v1226
        %v1231 = vsub.f32 %v1223, %v1229
        %v1232 = vmul.f32 %v1230, 1.442695
        %v1233 = vpow.pop %v1232
        %v1234 = vmul.f32 %v1231, 1.442695
        %v1235 = vpow.pop %v1234
        %v1236 = vsel %vm684, %v1233, 0.0
        %1237 = vadd.xlane.f32.xlu0 %v1236
        %v1238 = vpop.xlane.xlu0 %1237
        %v1239 = vsel %vm684, %v1235, 0.0
        %1240 = vadd.xlane.f32.xlu0 %v1239
        %v1241 = vpop.xlane.xlu0 %1240
        %v1243 = vsel %vm684, %v1233, 0
        %v1246 = vsel %vm684, %v1235, 0
        %1248 = vmatprep.subr.mxu0 0.0
        %1249 = vmatpush1.msra.mxu0 0.0
        %1250 = vmatprep.subr.mxu0 0.0
        %1251 = vmatpush1.msra.mxu0 0.0
        %1252 = vmatprep.subr.mxu0 0.0
        %1253 = vmatpush1.msra.mxu0 0.0
        %1254 = vmatprep.subr.mxu0 0.0
        %1255 = vmatpush1.msra.mxu0 0.0
        %1256 = vmatprep.subr.mxu0 0.0
        %1257 = vmatpush1.msra.mxu0 0.0
        %1258 = vmatprep.subr.mxu0 0.0
        %1259 = vmatpush1.msra.mxu0 0.0
        %1260 = vmatprep.subr.mxu0 0.0
        %1261 = vmatpush1.msra.mxu0 0.0
        %1262 = vmatprep.subr.mxu0 0.0
        %1263 = vmatpush1.msra.mxu0 0.0
        %1264 = vmatprep.subr.mxu0 0.0
        %1265 = vmatpush1.msra.mxu0 0.0
        %1266 = vmatprep.subr.mxu0 0.0
        %1267 = vmatpush1.msra.mxu0 0.0
        %1268 = vmatprep.subr.mxu0 0.0
        %1269 = vmatpush1.msra.mxu0 0.0
        %1270 = vmatprep.subr.mxu0 0.0
        %1271 = vmatpush1.msra.mxu0 0.0
        %1272 = vmatprep.subr.mxu0 0.0
        %1273 = vmatpush1.msra.mxu0 0.0
        %1274 = vmatprep.subr.mxu0 0.0
        %1275 = vmatpush1.msra.mxu0 0.0
        %1276 = vmatprep.subr.mxu0 0.0
        %1277 = vmatpush1.msra.mxu0 %v261
        %1278 = vmatprep.subr.mxu0 0.0
        %1279 = vmatpush1.msra.mxu0 %v260
        %1280 = vmatprep.subr.mxu0 0.0
        %1281 = vmatpush2.msra.mxu0 0.0
        %1282 = vmatprep.subr.mxu0 0.0
        %1283 = vmatpush2.msra.mxu0 0.0
        %1284 = vmatprep.subr.mxu0 0.0
        %1285 = vmatpush2.msra.mxu0 0.0
        %1286 = vmatprep.subr.mxu0 0.0
        %1287 = vmatpush2.msra.mxu0 0.0
        %1288 = vmatprep.subr.mxu0 0.0
        %1289 = vmatpush2.msra.mxu0 0.0
        %1290 = vmatprep.subr.mxu0 0.0
        %1291 = vmatpush2.msra.mxu0 0.0
        %1292 = vmatprep.subr.mxu0 0.0
        %1293 = vmatpush2.msra.mxu0 0.0
        %1294 = vmatprep.subr.mxu0 0.0
        %1295 = vmatpush2.msra.mxu0 0.0
        %1296 = vmatprep.subr.mxu0 0.0
        %1297 = vmatpush2.msra.mxu0 0.0
        %1298 = vmatprep.subr.mxu0 0.0
        %1299 = vmatpush2.msra.mxu0 0.0
        %1300 = vmatprep.subr.mxu0 0.0
        %1301 = vmatpush2.msra.mxu0 0.0
        %1302 = vmatprep.subr.mxu0 0.0
        %1303 = vmatpush2.msra.mxu0 0.0
        %1304 = vmatprep.subr.mxu0 0.0
        %1305 = vmatpush2.msra.mxu0 0.0
        %1306 = vmatprep.subr.mxu0 0.0
        %1307 = vmatpush2.msra.mxu0 0.0
        %1308 = vmatprep.subr.mxu0 0.0
        %1309 = vmatpush2.msra.mxu0 0.0
        %1310 = vmatprep.subr.mxu0 0.0
        %1311 = vmatpush2.msra.mxu0 0.0
        %1312 = vmatprep.mubr.f32.mxu0 0.0
        %1313 = vmatmul.mubr.f32.gmra.mxu0 %v1243
        %v1314 = vpop.f32.mrf.mxu0
        %v1315 = vadd.f32 0.0, %v1314
        %v1316 = vpop.f32.mrf.mxu0
        %1317 = vmatprep.mubr.f32.mxu0 0.0
        %1318 = vmatmul.mubr.f32.gmra.mxu0 %v1246
        %v1319 = vpop.f32.mrf.mxu0
        %v1320 = vadd.f32 0.0, %v1319
        %v1321 = vpop.f32.mrf.mxu0
        %1322 = vdwg.mxu0
        %v1323 = vrcp.pop %v1238
        %v1324 = vrcp.pop %v1241
        %v1325 = vmul.f32 %v1315, %v1323
        %v1326 = vmul.f32 %v1320, %v1324
        %s1327 = scalar_lea.vmem [#allocation7], 64
        %v1328 = vld [vmem:[%s1327] sm:$0xff]
        %v1329 = vld [vmem:[%s1327 + $0x8] sm:$0xff]
        %v1330 = vld [vmem:[%s1327 + $0x10] sm:$0xff]
        %v1331 = vld [vmem:[%s1327 + $0x18] sm:$0xff]
        %v1333 = vsel %vm278, %v1325, 0
        %v1336 = vsel %vm278, %v1326, 0
        %1338 = vmatprep.subr.mxu0 0.0
        %1339 = vmatpush1.msra.mxu0 0.0
        %1340 = vmatprep.subr.mxu0 0.0
        %1341 = vmatpush1.msra.mxu0 0.0
        %1342 = vmatprep.subr.mxu0 0.0
        %1343 = vmatpush1.msra.mxu0 0.0
        %1344 = vmatprep.subr.mxu0 0.0
        %1345 = vmatpush1.msra.mxu0 0.0
        %1346 = vmatprep.subr.mxu0 0.0
        %1347 = vmatpush1.msra.mxu0 0.0
        %1348 = vmatprep.subr.mxu0 0.0
        %1349 = vmatpush1.msra.mxu0 0.0
        %1350 = vmatprep.subr.mxu0 0.0
        %1351 = vmatpush1.msra.mxu0 0.0
        %1352 = vmatprep.subr.mxu0 0.0
        %1353 = vmatpush1.msra.mxu0 0.0
        %1354 = vmatprep.subr.mxu0 0.0
        %1355 = vmatpush1.msra.mxu0 0.0
        %1356 = vmatprep.subr.mxu0 0.0
        %1357 = vmatpush1.msra.mxu0 0.0
        %1358 = vmatprep.subr.mxu0 0.0
        %1359 = vmatpush1.msra.mxu0 0.0
        %1360 = vmatprep.subr.mxu0 0.0
        %1361 = vmatpush1.msra.mxu0 0.0
        %1362 = vmatprep.subr.mxu0 0.0
        %1363 = vmatpush1.msra.mxu0 %v1331
        %1364 = vmatprep.subr.mxu0 0.0
        %1365 = vmatpush1.msra.mxu0 %v1330
        %1366 = vmatprep.subr.mxu0 0.0
        %1367 = vmatpush1.msra.mxu0 %v1329
        %1368 = vmatprep.subr.mxu0 0.0
        %1369 = vmatpush1.msra.mxu0 %v1328
        %1370 = vmatprep.subr.mxu0 0.0
        %1371 = vmatpush2.msra.mxu0 0.0
        %1372 = vmatprep.subr.mxu0 0.0
        %1373 = vmatpush2.msra.mxu0 0.0
        %1374 = vmatprep.subr.mxu0 0.0
        %1375 = vmatpush2.msra.mxu0 0.0
        %1376 = vmatprep.subr.mxu0 0.0
        %1377 = vmatpush2.msra.mxu0 0.0
        %1378 = vmatprep.subr.mxu0 0.0
        %1379 = vmatpush2.msra.mxu0 0.0
        %1380 = vmatprep.subr.mxu0 0.0
        %1381 = vmatpush2.msra.mxu0 0.0
        %1382 = vmatprep.subr.mxu0 0.0
        %1383 = vmatpush2.msra.mxu0 0.0
        %1384 = vmatprep.subr.mxu0 0.0
        %1385 = vmatpush2.msra.mxu0 0.0
        %1386 = vmatprep.subr.mxu0 0.0
        %1387 = vmatpush2.msra.mxu0 0.0
        %1388 = vmatprep.subr.mxu0 0.0
        %1389 = vmatpush2.msra.mxu0 0.0
        %1390 = vmatprep.subr.mxu0 0.0
        %1391 = vmatpush2.msra.mxu0 0.0
        %1392 = vmatprep.subr.mxu0 0.0
        %1393 = vmatpush2.msra.mxu0 0.0
        %1394 = vmatprep.subr.mxu0 0.0
        %1395 = vmatpush2.msra.mxu0 0.0
        %1396 = vmatprep.subr.mxu0 0.0
        %1397 = vmatpush2.msra.mxu0 0.0
        %1398 = vmatprep.subr.mxu0 0.0
        %1399 = vmatpush2.msra.mxu0 0.0
        %1400 = vmatprep.subr.mxu0 0.0
        %1401 = vmatpush2.msra.mxu0 0.0
        %1402 = vmatprep.mubr.f32.mxu0 0.0
        %1403 = vmatmul.mubr.f32.gmra.mxu0 %v1333
        %v1404 = vpop.f32.mrf.mxu0
        %v1405 = vadd.f32 0.0, %v1404
        %v1406 = vpop.f32.mrf.mxu0
        %1407 = vmatprep.mubr.f32.mxu0 0.0
        %1408 = vmatmul.mubr.f32.gmra.mxu0 %v1336
        %v1409 = vpop.f32.mrf.mxu0
        %v1410 = vadd.f32 0.0, %v1409
        %v1411 = vpop.f32.mrf.mxu0
        %1412 = vdwg.mxu0
        %v1413 = vadd.f32 %v1135, %v1405
        %v1414 = vadd.f32 %v1140, %v1410
        %1415 = vmatprep.subr.mxu0 0.0
        %1416 = vmatpush1.xpose.msra.mxu0 0.0
        %1417 = vmatprep.subr.mxu0 0.0
        %1418 = vmatpush1.xpose.msra.mxu0 0.0
        %1419 = vmatprep.subr.mxu0 0.0
        %1420 = vmatpush1.xpose.msra.mxu0 0.0
        %1421 = vmatprep.subr.mxu0 0.0
        %1422 = vmatpush1.xpose.msra.mxu0 0.0
        %1423 = vmatprep.subr.mxu0 0.0
        %1424 = vmatpush1.xpose.msra.mxu0 0.0
        %1425 = vmatprep.subr.mxu0 0.0
        %1426 = vmatpush1.xpose.msra.mxu0 0.0
        %1427 = vmatprep.subr.mxu0 0.0
        %1428 = vmatpush1.xpose.msra.mxu0 0.0
        %1429 = vmatprep.subr.mxu0 0.0
        %1430 = vmatpush1.xpose.msra.mxu0 0.0
        %1431 = vmatprep.subr.mxu0 0.0
        %1432 = vmatpush1.xpose.msra.mxu0 0.0
        %1433 = vmatprep.subr.mxu0 0.0
        %1434 = vmatpush1.xpose.msra.mxu0 0.0
        %1435 = vmatprep.subr.mxu0 0.0
        %1436 = vmatpush1.xpose.msra.mxu0 0.0
        %1437 = vmatprep.subr.mxu0 0.0
        %1438 = vmatpush1.xpose.msra.mxu0 0.0
        %1439 = vmatprep.subr.mxu0 0.0
        %1440 = vmatpush1.xpose.msra.mxu0 0.0
        %1441 = vmatprep.subr.mxu0 0.0
        %1442 = vmatpush1.xpose.msra.mxu0 0.0
        %1443 = vmatprep.subr.mxu0 0.0
        %1444 = vmatpush1.xpose.msra.mxu0 %v437
        %1445 = vmatprep.subr.mxu0 0.0
        %1446 = vmatpush1.xpose.msra.mxu0 %v431
        %1447 = vmatprep.subr.mxu0 0.0
        %1448 = vmatpush2.xpose.msra.mxu0 0.0
        %1449 = vmatprep.subr.mxu0 0.0
        %1450 = vmatpush2.xpose.msra.mxu0 0.0
        %1451 = vmatprep.subr.mxu0 0.0
        %1452 = vmatpush2.xpose.msra.mxu0 0.0
        %1453 = vmatprep.subr.mxu0 0.0
        %1454 = vmatpush2.xpose.msra.mxu0 0.0
        %1455 = vmatprep.subr.mxu0 0.0
        %1456 = vmatpush2.xpose.msra.mxu0 0.0
        %1457 = vmatprep.subr.mxu0 0.0
        %1458 = vmatpush2.xpose.msra.mxu0 0.0
        %1459 = vmatprep.subr.mxu0 0.0
        %1460 = vmatpush2.xpose.msra.mxu0 0.0
        %1461 = vmatprep.subr.mxu0 0.0
        %1462 = vmatpush2.xpose.msra.mxu0 0.0
        %1463 = vmatprep.subr.mxu0 0.0
        %1464 = vmatpush2.xpose.msra.mxu0 0.0
        %1465 = vmatprep.subr.mxu0 0.0
        %1466 = vmatpush2.xpose.msra.mxu0 0.0
        %1467 = vmatprep.subr.mxu0 0.0
        %1468 = vmatpush2.xpose.msra.mxu0 0.0
        %1469 = vmatprep.subr.mxu0 0.0
        %1470 = vmatpush2.xpose.msra.mxu0 0.0
        %1471 = vmatprep.subr.mxu0 0.0
        %1472 = vmatpush2.xpose.msra.mxu0 0.0
        %1473 = vmatprep.subr.mxu0 0.0
        %1474 = vmatpush2.xpose.msra.mxu0 0.0
        %1475 = vmatprep.subr.mxu0 0.0
        %1476 = vmatpush2.xpose.msra.mxu0 0.0
        %1477 = vmatprep.subr.mxu0 0.0
        %1478 = vmatpush2.xpose.msra.mxu0 0.0
        %1479 = vmatprep.mubr.f32.mxu0 0.0
        %1480 = vmatmul.mubr.f32.gmra.mxu0 %v598
        %v1481 = vpop.f32.mrf.mxu0
        %v1482 = vadd.f32 0.0, %v1481
        %v1483 = vpop.f32.mrf.mxu0
        %1484 = vmatprep.mubr.f32.mxu0 0.0
        %1485 = vmatmul.mubr.f32.gmra.mxu0 %v602
        %v1486 = vpop.f32.mrf.mxu0
        %v1487 = vadd.f32 0.0, %v1486
        %v1488 = vpop.f32.mrf.mxu0
        %1489 = vdwg.mxu0
        %v1490 = vlaneseq
        %v1491 = vshrl.u32 %v1490, 7
        %v1492 = vsub.s32 0, %v1491
        %v1493 = vrot.slane %v594, %v1492
        %v1494 = vsub.f32 %v1482, %v1493
        %v1495 = vsub.f32 %v1487, %v1493
        %v1496 = vsel %vm684, %v1494, -inf
        %1497 = vmax.xlane.f32.xlu0 %v1496
        %v1498 = vpop.xlane.xlu0 %1497
        %v1499 = vsel %vm684, %v1495, -inf
        %1500 = vmax.xlane.f32.xlu0 %v1499
        %v1501 = vpop.xlane.xlu0 %1500
        %v1502 = vsub.f32 %v1494, %v1498
        %v1503 = vsub.f32 %v1495, %v1501
        %v1504 = vmul.f32 %v1502, 1.442695
        %v1505 = vpow.pop %v1504
        %v1506 = vmul.f32 %v1503, 1.442695
        %v1507 = vpow.pop %v1506
        %v1508 = vsel %vm684, %v1505, 0.0
        %1509 = vadd.xlane.f32.xlu0 %v1508
        %v1510 = vpop.xlane.xlu0 %1509
        %v1511 = vsel %vm684, %v1507, 0.0
        %1512 = vadd.xlane.f32.xlu0 %v1511
        %v1513 = vpop.xlane.xlu0 %1512
        %v1515 = vsel %vm684, %v1505, 0
        %v1518 = vsel %vm684, %v1507, 0
        %1520 = vmatprep.subr.mxu0 0.0
        %1521 = vmatpush1.msra.mxu0 0.0
        %1522 = vmatprep.subr.mxu0 0.0
        %1523 = vmatpush1.msra.mxu0 0.0
        %1524 = vmatprep.subr.mxu0 0.0
        %1525 = vmatpush1.msra.mxu0 0.0
        %1526 = vmatprep.subr.mxu0 0.0
        %1527 = vmatpush1.msra.mxu0 0.0
        %1528 = vmatprep.subr.mxu0 0.0
        %1529 = vmatpush1.msra.mxu0 0.0
        %1530 = vmatprep.subr.mxu0 0.0
        %1531 = vmatpush1.msra.mxu0 0.0
        %1532 = vmatprep.subr.mxu0 0.0
        %1533 = vmatpush1.msra.mxu0 0.0
        %1534 = vmatprep.subr.mxu0 0.0
        %1535 = vmatpush1.msra.mxu0 0.0
        %1536 = vmatprep.subr.mxu0 0.0
        %1537 = vmatpush1.msra.mxu0 0.0
        %1538 = vmatprep.subr.mxu0 0.0
        %1539 = vmatpush1.msra.mxu0 0.0
        %1540 = vmatprep.subr.mxu0 0.0
        %1541 = vmatpush1.msra.mxu0 0.0
        %1542 = vmatprep.subr.mxu0 0.0
        %1543 = vmatpush1.msra.mxu0 0.0
        %1544 = vmatprep.subr.mxu0 0.0
        %1545 = vmatpush1.msra.mxu0 0.0
        %1546 = vmatprep.subr.mxu0 0.0
        %1547 = vmatpush1.msra.mxu0 0.0
        %1548 = vmatprep.subr.mxu0 0.0
        %1549 = vmatpush1.msra.mxu0 %v261
        %1550 = vmatprep.subr.mxu0 0.0
        %1551 = vmatpush1.msra.mxu0 %v260
        %1552 = vmatprep.subr.mxu0 0.0
        %1553 = vmatpush2.msra.mxu0 0.0
        %1554 = vmatprep.subr.mxu0 0.0
        %1555 = vmatpush2.msra.mxu0 0.0
        %1556 = vmatprep.subr.mxu0 0.0
        %1557 = vmatpush2.msra.mxu0 0.0
        %1558 = vmatprep.subr.mxu0 0.0
        %1559 = vmatpush2.msra.mxu0 0.0
        %1560 = vmatprep.subr.mxu0 0.0
        %1561 = vmatpush2.msra.mxu0 0.0
        %1562 = vmatprep.subr.mxu0 0.0
        %1563 = vmatpush2.msra.mxu0 0.0
        %1564 = vmatprep.subr.mxu0 0.0
        %1565 = vmatpush2.msra.mxu0 0.0
        %1566 = vmatprep.subr.mxu0 0.0
        %1567 = vmatpush2.msra.mxu0 0.0
        %1568 = vmatprep.subr.mxu0 0.0
        %1569 = vmatpush2.msra.mxu0 0.0
        %1570 = vmatprep.subr.mxu0 0.0
        %1571 = vmatpush2.msra.mxu0 0.0
        %1572 = vmatprep.subr.mxu0 0.0
        %1573 = vmatpush2.msra.mxu0 0.0
        %1574 = vmatprep.subr.mxu0 0.0
        %1575 = vmatpush2.msra.mxu0 0.0
        %1576 = vmatprep.subr.mxu0 0.0
        %1577 = vmatpush2.msra.mxu0 0.0
        %1578 = vmatprep.subr.mxu0 0.0
        %1579 = vmatpush2.msra.mxu0 0.0
        %1580 = vmatprep.subr.mxu0 0.0
        %1581 = vmatpush2.msra.mxu0 0.0
        %1582 = vmatprep.subr.mxu0 0.0
        %1583 = vmatpush2.msra.mxu0 0.0
        %1584 = vmatprep.mubr.f32.mxu0 0.0
        %1585 = vmatmul.mubr.f32.gmra.mxu0 %v1515
        %v1586 = vpop.f32.mrf.mxu0
        %v1587 = vadd.f32 0.0, %v1586
        %v1588 = vpop.f32.mrf.mxu0
        %1589 = vmatprep.mubr.f32.mxu0 0.0
        %1590 = vmatmul.mubr.f32.gmra.mxu0 %v1518
        %v1591 = vpop.f32.mrf.mxu0
        %v1592 = vadd.f32 0.0, %v1591
        %v1593 = vpop.f32.mrf.mxu0
        %1594 = vdwg.mxu0
        %v1595 = vrcp.pop %v1510
        %v1596 = vrcp.pop %v1513
        %v1597 = vmul.f32 %v1587, %v1595
        %v1598 = vmul.f32 %v1592, %v1596
        %s1599 = scalar_lea.vmem [#allocation7], 96
        %v1600 = vld [vmem:[%s1599] sm:$0xff]
        %v1601 = vld [vmem:[%s1599 + $0x8] sm:$0xff]
        %v1602 = vld [vmem:[%s1599 + $0x10] sm:$0xff]
        %v1603 = vld [vmem:[%s1599 + $0x18] sm:$0xff]
        %v1605 = vsel %vm278, %v1597, 0
        %v1608 = vsel %vm278, %v1598, 0
        %1610 = vmatprep.subr.mxu0 0.0
        %1611 = vmatpush1.msra.mxu0 0.0
        %1612 = vmatprep.subr.mxu0 0.0
        %1613 = vmatpush1.msra.mxu0 0.0
        %1614 = vmatprep.subr.mxu0 0.0
        %1615 = vmatpush1.msra.mxu0 0.0
        %1616 = vmatprep.subr.mxu0 0.0
        %1617 = vmatpush1.msra.mxu0 0.0
        %1618 = vmatprep.subr.mxu0 0.0
        %1619 = vmatpush1.msra.mxu0 0.0
        %1620 = vmatprep.subr.mxu0 0.0
        %1621 = vmatpush1.msra.mxu0 0.0
        %1622 = vmatprep.subr.mxu0 0.0
        %1623 = vmatpush1.msra.mxu0 0.0
        %1624 = vmatprep.subr.mxu0 0.0
        %1625 = vmatpush1.msra.mxu0 0.0
        %1626 = vmatprep.subr.mxu0 0.0
        %1627 = vmatpush1.msra.mxu0 0.0
        %1628 = vmatprep.subr.mxu0 0.0
        %1629 = vmatpush1.msra.mxu0 0.0
        %1630 = vmatprep.subr.mxu0 0.0
        %1631 = vmatpush1.msra.mxu0 0.0
        %1632 = vmatprep.subr.mxu0 0.0
        %1633 = vmatpush1.msra.mxu0 0.0
        %1634 = vmatprep.subr.mxu0 0.0
        %1635 = vmatpush1.msra.mxu0 %v1603
        %1636 = vmatprep.subr.mxu0 0.0
        %1637 = vmatpush1.msra.mxu0 %v1602
        %1638 = vmatprep.subr.mxu0 0.0
        %1639 = vmatpush1.msra.mxu0 %v1601
        %1640 = vmatprep.subr.mxu0 0.0
        %1641 = vmatpush1.msra.mxu0 %v1600
        %1642 = vmatprep.subr.mxu0 0.0
        %1643 = vmatpush2.msra.mxu0 0.0
        %1644 = vmatprep.subr.mxu0 0.0
        %1645 = vmatpush2.msra.mxu0 0.0
        %1646 = vmatprep.subr.mxu0 0.0
        %1647 = vmatpush2.msra.mxu0 0.0
        %1648 = vmatprep.subr.mxu0 0.0
        %1649 = vmatpush2.msra.mxu0 0.0
        %1650 = vmatprep.subr.mxu0 0.0
        %1651 = vmatpush2.msra.mxu0 0.0
        %1652 = vmatprep.subr.mxu0 0.0
        %1653 = vmatpush2.msra.mxu0 0.0
        %1654 = vmatprep.subr.mxu0 0.0
        %1655 = vmatpush2.msra.mxu0 0.0
        %1656 = vmatprep.subr.mxu0 0.0
        %1657 = vmatpush2.msra.mxu0 0.0
        %1658 = vmatprep.subr.mxu0 0.0
        %1659 = vmatpush2.msra.mxu0 0.0
        %1660 = vmatprep.subr.mxu0 0.0
        %1661 = vmatpush2.msra.mxu0 0.0
        %1662 = vmatprep.subr.mxu0 0.0
        %1663 = vmatpush2.msra.mxu0 0.0
        %1664 = vmatprep.subr.mxu0 0.0
        %1665 = vmatpush2.msra.mxu0 0.0
        %1666 = vmatprep.subr.mxu0 0.0
        %1667 = vmatpush2.msra.mxu0 0.0
        %1668 = vmatprep.subr.mxu0 0.0
        %1669 = vmatpush2.msra.mxu0 0.0
        %1670 = vmatprep.subr.mxu0 0.0
        %1671 = vmatpush2.msra.mxu0 0.0
        %1672 = vmatprep.subr.mxu0 0.0
        %1673 = vmatpush2.msra.mxu0 0.0
        %1674 = vmatprep.mubr.f32.mxu0 0.0
        %1675 = vmatmul.mubr.f32.gmra.mxu0 %v1605
        %v1676 = vpop.f32.mrf.mxu0
        %v1677 = vadd.f32 0.0, %v1676
        %v1678 = vpop.f32.mrf.mxu0
        %1679 = vmatprep.mubr.f32.mxu0 0.0
        %1680 = vmatmul.mubr.f32.gmra.mxu0 %v1608
        %v1681 = vpop.f32.mrf.mxu0
        %v1682 = vadd.f32 0.0, %v1681
        %v1683 = vpop.f32.mrf.mxu0
        %1684 = vdwg.mxu0
        %v1685 = vadd.f32 %v1413, %v1677
        %v1686 = vadd.f32 %v1414, %v1682
        %v1687 = vld [vmem:[%s3] sm:$0x1]
        %v1689 = vlaneseq
        %v1690 = vshrl.u32 %v1689, 7
        %v1691 = vsub.s32 0, %v1690
        %v1692 = vrot.slane %v1687, %v1691
        %v1694 = vadd.f32 %v1685, %v1692
        %v1695 = vadd.f32 %v1686, %v1692
        %1696 = vst.msk [vmem:[%s258] sm:$0xff] %vm278, %v1694
        %1697 = vst.msk [vmem:[%s258 + $0x8] sm:$0xff] %vm278, %v1695
        %s1698 = sand.u32 %s133, 1
        %s1699 = scalar_lea.sflag [#allocation4], %s1698
        %s1700 = sand.u32 %s133, 1
        %s1701 = smul.addr %s1700, 16
        %s1702 = scalar_lea.vmem [#allocation8], %s1701
        // Predicated region
        $region49: #{tpu_custom_call.1} parent=35 // pred_check
          %p1703 = pneg %p143
        $region50: #{tpu_custom_call.1} parent=35 // pred_check_branch
          %1705 = sbr.rel (%p1703) target = $region52
        $region51: #{tpu_custom_call.1} parent=35 // pred_region
          %s1706 = smul.u32 2, %s27
          %s1708 = ssub.s32 256, 256
          %1709 = vsyncadd %s1699, %s1708
          %s1710 = smul.addr %s26, 2
          %s1711 = sadd.s32 %s1706, %s1710
          %s1712 = smul.addr %s1711, 128
          %s1713 = scalar_lea.hbm %s4, %s1712
          %s1714 = sshll.u32 %s1702, 4
          %s1715 = int_to_ptr.vmem [resolvable:$true] %s1714
          %1720 = dma.vmem_to_hbm [thread:$0]  %s1715, 256, %s1713, %s1699, 128, 128, 8
        $region52: #{tpu_custom_call.1} parent=35 // pred_fallthru
          _
      $region36: #{tpu_custom_call.1} parent=5 // pred_fallthru
        _
      %p1721 = scmp.le.s32.totalorder 2, %s17
      // Predicated region
      $region53: #{tpu_custom_call.1} parent=5 // pred_check
        %p1722 = pneg %p1721
      $region54: #{tpu_custom_call.1} parent=5 // pred_check_branch
        %1724 = sbr.rel (%p1722) target = $region56
      $region55: #{tpu_custom_call.1} parent=5 // pred_region
        %s1725 = ssub.s32 %s17, 2
        // Predicated region
        $region57: #{tpu_custom_call.1} parent=55 // pred_check
          %p1726 = pneg %p149
        $region58: #{tpu_custom_call.1} parent=55 // pred_check_branch
          %1728 = sbr.rel (%p1726) target = $region60
        $region59: #{tpu_custom_call.1} parent=55 // pred_region
          %s1729 = sand.u32 %s134, 1
          %s1730 = scalar_lea.sflag [#allocation4], %s1729
          %s1731 = sand.u32 %s134, 1
          %s1732 = smul.addr %s1731, 16
          %s1733 = scalar_lea.vmem [#allocation8], %s1732
          %1734 = dma.done %s1730, 256
        $region60: #{tpu_custom_call.1} parent=55 // pred_fallthru
          _
      $region56: #{tpu_custom_call.1} parent=5 // pred_fallthru
        _
    $region6: #{tpu_custom_call.1} parent=1 // loop_footer
      %s21 = sadd.s32 1, %s17
    $region7: #{tpu_custom_call.1} parent=1 // loop_footer_branch
      %16 = sbr.rel target = $region3
    $region8: #{tpu_custom_call.1} parent=1 // loop_exit
      _
    %1735 = vsyncpa [#allocation3], 1
    %s1736 = scalar_lea.sflag [#allocation3], 1
    %1737 = vsyncpa %s1736, 1
    %1738 = vsyncpa [#allocation6], 1
    %1739 = vsyncpa [#allocation4], 1
    %s1740 = scalar_lea.sflag [#allocation4], 1
    %1741 = vsyncpa %s1740, 1

// kernel: tpu_custom_call.1
$region0: #{tpu_custom_call.1}
  #allocation0 [shape = 'u32[]', space=smem, size = 0x4, offset = 0x4, fixed_abs, tag = 'smem constant byte address 0x4 - core index']
  #allocation1 [shape = 'u32[144,128]{1,0:T(1,128)}', space=vmem, size = 0x12000, scoped, tag = 'internal scratch']
  %s0 = inlined_call_operand.hbm [shape: f32[2,16,32], index: 0, kind: input, shape index: {}]
  %s1 = inlined_call_operand.hbm [shape: f32[32,512], index: 1, kind: input, shape index: {}]
  %s2 = inlined_call_operand.hbm [shape: f32[4,32,32], index: 2, kind: input, shape index: {}]
  %s3 = inlined_call_operand.vmem [shape: f32[1,32], index: 3, kind: input, shape index: {}]
  %s4 = inlined_call_operand.hbm [shape: f32[2,16,32], index: 4, kind: output, shape index: {}]
  %s5 = sld [smem:[#allocation0]]
  $region61: #{tpu_custom_call.1} parent=0
    _
  %s7 = ssub.s32 1, %s5
  %s8 = scalar_select 0, %s7, %s5
  $region1: #{tpu_custom_call.1} parent=0
    #allocation2 [shape = 'u8[16384]{0}', space=vmem, size = 0x4000, scoped, tag = 'input window, operand 0']
    #allocation3 [shape = 's32[2]{0}', space=sflag, size = 0x8, scoped, tag = 'scoped memory for tpu_custom_call.1']
    #allocation4 [shape = 's32[2]{0}', space=sflag, size = 0x8, scoped, tag = 'scoped memory for tpu_custom_call.1']
    #allocation5 [shape = 'u8[65536]{0}', space=vmem, size = 0x10000, scoped, tag = 'input window, operand 1, single buffered']
    #allocation6 [shape = 's32[1]{0}', space=sflag, size = 0x4, scoped, tag = 'scoped memory for tpu_custom_call.1']
    #allocation7 [shape = 'u8[65536]{0}', space=vmem, size = 0x10000, scoped, tag = 'input window, operand 2, single buffered']
    #allocation8 [shape = 'u8[16384]{0}', space=vmem, size = 0x4000, scoped, tag = 'output window, operand 0']
    %9 = vsyncpa [#allocation3], 0
    %s10 = scalar_lea.sflag [#allocation3], 1
    %11 = vsyncpa %s10, 0
    %12 = vsyncpa [#allocation6], 0
    %13 = vsyncpa [#allocation4], 0
    %s14 = scalar_lea.sflag [#allocation4], 1
    %15 = vsyncpa %s14, 0
    loop: start=0, step=1, limit=4
    $region2: #{tpu_custom_call.1} parent=1 // loop_pre_header
      _
    $region3: #{tpu_custom_call.1} parent=1 // loop_header
      %s17 = sphi 0, %s21
      %p18 = scmp.ge.s32.totalorder %s17, 4
      %s24 = sphi 0, %s36
      %s25 = sphi 0, %s32
      %s26 = sphi 0, %s24
      %s27 = sphi 0, %s25
      %s28 = sphi 0, %s26
      %s29 = sphi 0, %s27
      %s39 = sphi 0, %s41
      %s42 = sphi 0, %s39
      %s43 = sphi 0, %s42
      %s59 = sphi 0, %s43
      %s63 = sphi 0, %s63
      %s65 = sphi 0, %s63
      %s66 = sphi 0, %s65
      %s80 = sphi 0, %s66
      %s84 = sphi 0, %s84
      %s86 = sphi 0, %s84
      %s87 = sphi 0, %s86
      %s101 = sphi 0, %s87
      %s105 = sphi 0, %s105
      %s107 = sphi 0, %s105
      %s108 = sphi 0, %s107
      %s122 = sphi 0, %s108
      %s130 = sphi 0, %s132
      %s133 = sphi 0, %s130
      %s134 = sphi 0, %s133
      %s150 = sphi 0, %s134
    $region4: #{tpu_custom_call.1} parent=1 // loop_header_branch
      %20 = sbr.rel (%p18) target = $region8
    $region5: #{tpu_custom_call.1} parent=1 // loop_body
      %s22 = ssub.s32 %s17, 1
      %s23 = ssub.s32 %s17, 2
      %s30 = sadd.s32 1, %s25
      %p31 = scmp.ge.s32.totalorder %s30, 1
      %s32 = scalar_select %p31, 0, %s30
      %s33 = sadd.s32 1, %s24
      %s34 = scalar_select %p31, %s33, %s24
      %p35 = scmp.ge.s32.totalorder %s34, 2
      %s36 = scalar_select %p35, 0, %s34
      %s37 = ssub.s32 %s24, %s36
      %p38 = scmp.eq.s32.totalorder %s37, 0
      %s40 = sadd.s32 %s39, 1
      %s41 = scalar_select %p38, %s39, %s40
      %p44 = pneg %p38
      %p45 = scmp.eq.s32.totalorder %s17, 1
      %p46 = por %p44, %p45
      %p47 = scmp.ne.s32.totalorder %s39, %s42
      %p48 = scmp.eq.s32.totalorder %s17, 0
      %p49 = por %p47, %p48
      %p50 = scmp.ne.s32.totalorder %s39, %s42
      %p51 = scmp.eq.s32.totalorder %s22, 1
      %p52 = por %p50, %p51
      %p53 = scmp.ne.s32.totalorder %s42, %s43
      %p54 = scmp.eq.s32.totalorder %s22, 0
      %p55 = por %p53, %p54
      %p56 = scmp.ne.s32.totalorder %s42, %s43
      %p57 = scmp.eq.s32.totalorder %s23, 1
      %p58 = por %p56, %p57
      %p60 = scmp.ne.s32.totalorder %s43, %s59
      %p61 = scmp.eq.s32.totalorder %s23, 0
      %p62 = por %p60, %p61
      %s64 = sadd.s32 %s63, 1
      %p67 = scmp.eq.s32.totalorder %s17, 1
      %p68 = scmp.ne.s32.totalorder %s63, %s65
      %p69 = scmp.eq.s32.totalorder %s17, 0
      %p70 = por %p68, %p69
      %p71 = scmp.ne.s32.totalorder %s63, %s65
      %p72 = scmp.eq.s32.totalorder %s22, 1
      %p73 = por %p71, %p72
      %p74 = scmp.ne.s32.totalorder %s65, %s66
      %p75 = scmp.eq.s32.totalorder %s22, 0
      %p76 = por %p74, %p75
      %p77 = scmp.ne.s32.totalorder %s65, %s66
      %p78 = scmp.eq.s32.totalorder %s23, 1
      %p79 = por %p77, %p78
      %p81 = scmp.ne.s32.totalorder %s66, %s80
      %p82 = scmp.eq.s32.totalorder %s23, 0
      %p83 = por %p81, %p82
      %s85 = sadd.s32 %s84, 1
      %p88 = scmp.eq.s32.totalorder %s17, 1
      %p89 = scmp.ne.s32.totalorder %s84, %s86
      %p90 = scmp.eq.s32.totalorder %s17, 0
      %p91 = por %p89, %p90
      %p92 = scmp.ne.s32.totalorder %s84, %s86
      %p93 = scmp.eq.s32.totalorder %s22, 1
      %p94 = por %p92, %p93
      %p95 = scmp.ne.s32.totalorder %s86, %s87
      %p96 = scmp.eq.s32.totalorder %s22, 0
      %p97 = por %p95, %p96
      %p98 = scmp.ne.s32.totalorder %s86, %s87
      %p99 = scmp.eq.s32.totalorder %s23, 1
      %p100 = por %p98, %p99
      %p102 = scmp.ne.s32.totalorder %s87, %s101
      %p103 = scmp.eq.s32.totalorder %s23, 0
      %p104 = por %p102, %p103
      %s106 = sadd.s32 %s105, 1
      %p109 = scmp.eq.s32.totalorder %s17, 1
      %p110 = scmp.ne.s32.totalorder %s105, %s107
      %p111 = scmp.eq.s32.totalorder %s17, 0
      %p112 = por %p110, %p111
      %p113 = scmp.ne.s32.totalorder %s105, %s107
      %p114 = scmp.eq.s32.totalorder %s22, 1
      %p115 = por %p113, %p114
      %p116 = scmp.ne.s32.totalorder %s107, %s108
      %p117 = scmp.eq.s32.totalorder %s22, 0
      %p118 = por %p116, %p117
      %p119 = scmp.ne.s32.totalorder %s107, %s108
      %p120 = scmp.eq.s32.totalorder %s23, 1
      %p121 = por %p119, %p120
      %p123 = scmp.ne.s32.totalorder %s108, %s122
      %p124 = scmp.eq.s32.totalorder %s23, 0
      %p125 = por %p123, %p124
      %s126 = ssub.s32 %s24, %s36
      %s127 = ssub.s32 %s25, %s32
      %s128 = sor.u32 %s126, %s127
      %p129 = scmp.eq.s32.totalorder %s128, 0
      %s131 = sadd.s32 %s130, 1
      %s132 = scalar_select %p129, %s130, %s131
      %p135 = pneg %p129
      %p136 = scmp.eq.s32.totalorder %s17, 1
      %p137 = por %p135, %p136
      %p138 = scmp.ne.s32.totalorder %s130, %s133
      %p139 = scmp.eq.s32.totalorder %s17, 0
      %p140 = por %p138, %p139
      %p141 = scmp.ne.s32.totalorder %s130, %s133
      %p142 = scmp.eq.s32.totalorder %s22, 1
      %p143 = por %p141, %p142
      %p144 = scmp.ne.s32.totalorder %s133, %s134
      %p145 = scmp.eq.s32.totalorder %s22, 0
      %p146 = por %p144, %p145
      %p147 = scmp.ne.s32.totalorder %s133, %s134
      %p148 = scmp.eq.s32.totalorder %s23, 1
      %p149 = por %p147, %p148
      %p151 = scmp.ne.s32.totalorder %s134, %s150
      %p152 = scmp.eq.s32.totalorder %s23, 0
      %p153 = por %p151, %p152
      %p154 = scmp.le.s32.totalorder 1, %s17
      %p155 = scmp.lt.s32.totalorder %s17, 3
      %p156 = pnand %p154, %p155
      %p157 = pneg %p156
      // Predicated region
      $region9: #{tpu_custom_call.1} parent=5 // pred_check
        _
      $region10: #{tpu_custom_call.1} parent=5 // pred_check_branch
        %159 = sbr.rel (%p156) target = $region12
      $region11: #{tpu_custom_call.1} parent=5 // pred_region
        %s160 = ssub.s32 %s17, 1
        // Predicated region
        $region13: #{tpu_custom_call.1} parent=11 // pred_check
          %p161 = pneg %p76
        $region14: #{tpu_custom_call.1} parent=11 // pred_check_branch
          %163 = sbr.rel (%p161) target = $region16
        $region15: #{tpu_custom_call.1} parent=11 // pred_region
          %s165 = ssub.s32 2048, 2048
          %166 = vsyncadd [#allocation6], %s165
          %s167 = sshll.u32 [#allocation5], 4
          %s168 = int_to_ptr.vmem [resolvable:$true] %s167
          %173 = dma.hbm_to_vmem [thread:$0]  %s1, 2048, %s168, [#allocation6], 512, 512, 32
        $region16: #{tpu_custom_call.1} parent=11 // pred_fallthru
          _
        // Predicated region
        $region17: #{tpu_custom_call.1} parent=11 // pred_check
          %p174 = pneg %p97
        $region18: #{tpu_custom_call.1} parent=11 // pred_check_branch
          %176 = sbr.rel (%p174) target = $region20
        $region19: #{tpu_custom_call.1} parent=11 // pred_region
          %s178 = ssub.s32 2048, 2048
          %179 = vsyncadd [#allocation6], %s178
          %s180 = sshll.u32 [#allocation7], 4
          %s181 = int_to_ptr.vmem [resolvable:$true] %s180
          %186 = dma.hbm_to_vmem [thread:$0]  %s2, 2048, %s181, [#allocation6], 128, 128, 8
        $region20: #{tpu_custom_call.1} parent=11 // pred_fallthru
          _
        // Predicated region
        $region21: #{tpu_custom_call.1} parent=11 // pred_check
          %p187 = pneg %p118
        $region22: #{tpu_custom_call.1} parent=11 // pred_check_branch
          %189 = sbr.rel (%p187) target = $region24
        $region23: #{tpu_custom_call.1} parent=11 // pred_region
          _
        $region24: #{tpu_custom_call.1} parent=11 // pred_fallthru
          _
      $region12: #{tpu_custom_call.1} parent=5 // pred_fallthru
        _
      %p190 = scmp.lt.s32.totalorder %s17, 2
      // Predicated region
      $region25: #{tpu_custom_call.1} parent=5 // pred_check
        %p191 = pneg %p190
      $region26: #{tpu_custom_call.1} parent=5 // pred_check_branch
        %193 = sbr.rel (%p191) target = $region28
      $region27: #{tpu_custom_call.1} parent=5 // pred_region
        // Predicated region
        $region29: #{tpu_custom_call.1} parent=27 // pred_check
          %p194 = pneg %p49
        $region30: #{tpu_custom_call.1} parent=27 // pred_check_branch
          %196 = sbr.rel (%p194) target = $region32
        $region31: #{tpu_custom_call.1} parent=27 // pred_region
          %s197 = sand.u32 %s39, 1
          %s198 = scalar_lea.sflag [#allocation3], %s197
          %s199 = sand.u32 %s39, 1
          %s200 = smul.addr %s199, 16
          %s201 = scalar_lea.vmem [#allocation2], %s200
          %s203 = ssub.s32 256, 256
          %204 = vsyncadd %s198, %s203
          %s205 = smul.addr %s24, 2
          %s206 = smul.addr %s205, 128
          %s207 = scalar_lea.hbm %s0, %s206
          %s208 = sshll.u32 %s201, 4
          %s209 = int_to_ptr.vmem [resolvable:$true] %s208
          %214 = dma.hbm_to_vmem [thread:$0]  %s207, 256, %s209, %s198, 128, 128, 8
        $region32: #{tpu_custom_call.1} parent=27 // pred_fallthru
          _
      $region28: #{tpu_custom_call.1} parent=5 // pred_fallthru
        _
      %p215 = scmp.le.s32.totalorder 1, %s17
      %p216 = scmp.lt.s32.totalorder %s17, 3
      %p217 = pnand %p215, %p216
      %p218 = pneg %p217
      // Predicated region
      $region33: #{tpu_custom_call.1} parent=5 // pred_check
        _
      $region34: #{tpu_custom_call.1} parent=5 // pred_check_branch
        %220 = sbr.rel (%p217) target = $region36
      $region35: #{tpu_custom_call.1} parent=5 // pred_region
        %s221 = ssub.s32 %s17, 1
        %s222 = sand.u32 %s42, 1
        %s223 = scalar_lea.sflag [#allocation3], %s222
        %s224 = sand.u32 %s42, 1
        %s225 = smul.addr %s224, 16
        %s226 = scalar_lea.vmem [#allocation2], %s225
        // Predicated region
        $region37: #{tpu_custom_call.1} parent=35 // pred_check
          %p227 = pneg %p55
        $region38: #{tpu_custom_call.1} parent=35 // pred_check_branch
          %229 = sbr.rel (%p227) target = $region40
        $region39: #{tpu_custom_call.1} parent=35 // pred_region
          %230 = dma.done %s223, 256
        $region40: #{tpu_custom_call.1} parent=35 // pred_fallthru
          _
        // Predicated region
        $region41: #{tpu_custom_call.1} parent=35 // pred_check
          %p231 = pneg %p76
        $region42: #{tpu_custom_call.1} parent=35 // pred_check_branch
          %233 = sbr.rel (%p231) target = $region44
        $region43: #{tpu_custom_call.1} parent=35 // pred_region
          %234 = dma.done [#allocation6], 2048
        $region44: #{tpu_custom_call.1} parent=35 // pred_fallthru
          _
        // Predicated region
        $region45: #{tpu_custom_call.1} parent=35 // pred_check
          %p235 = pneg %p97
        $region46: #{tpu_custom_call.1} parent=35 // pred_check_branch
          %237 = sbr.rel (%p235) target = $region48
        $region47: #{tpu_custom_call.1} parent=35 // pred_region
          %238 = dma.done [#allocation6], 2048
        $region48: #{tpu_custom_call.1} parent=35 // pred_fallthru
          _
        %s239 = sand.u32 %s42, 1
        %s240 = scalar_lea.sflag [#allocation3], %s239
        %s241 = sand.u32 %s42, 1
        %s242 = smul.addr %s241, 16
        %s243 = scalar_lea.vmem [#allocation2], %s242
        %p244 = pneg %p55
        %p245 = pneg %p52
        %p246 = pneg %p76
        %p247 = pneg %p73
        %p248 = pneg %p97
        %p249 = pneg %p94
        %p250 = pneg %p118
        %p251 = pneg %p115
        %p252 = pneg %p146
        %p253 = pneg %p143
        %s254 = sand.u32 %s133, 1
        %s255 = scalar_lea.sflag [#allocation4], %s254
        %s256 = sand.u32 %s133, 1
        %s257 = smul.addr %s256, 16
        %s258 = scalar_lea.vmem [#allocation8], %s257
        %s259 = smul.u32 2, %s27
        %v260 = vld [vmem:[%s226] sm:$0xff]
        %v261 = vld [vmem:[%s226 + $0x8] sm:$0xff]
        %v262 = vld [vmem:[#allocation5] sm:$0xff]
        %v263 = vld [vmem:[#allocation5 + $0x8] sm:$0xff]
        %v264 = vld [vmem:[#allocation5 + $0x10] sm:$0xff]
        %v265 = vld [vmem:[#allocation5 + $0x18] sm:$0xff]
        %v266 = vld [vmem:[#allocation5 + $0x20] sm:$0xff]
        %v267 = vld [vmem:[#allocation5 + $0x28] sm:$0xff]
        %v268 = vld [vmem:[#allocation5 + $0x30] sm:$0xff]
        %v269 = vld [vmem:[#allocation5 + $0x38] sm:$0xff]
        %v270 = vld [vmem:[#allocation5 + $0x40] sm:$0xff]
        %v271 = vld [vmem:[#allocation5 + $0x48] sm:$0xff]
        %v272 = vld [vmem:[#allocation5 + $0x50] sm:$0xff]
        %v273 = vld [vmem:[#allocation5 + $0x58] sm:$0xff]
        %v274 = vld [vmem:[#allocation5 + $0x60] sm:$0xff]
        %v275 = vld [vmem:[#allocation5 + $0x68] sm:$0xff]
        %v276 = vld [vmem:[#allocation5 + $0x70] sm:$0xff]
        %v277 = vld [vmem:[#allocation5 + $0x78] sm:$0xff]
        %vm278 = vcmask 261120
        %v280 = vsel %vm278, %v260, 0
        %v283 = vsel %vm278, %v261, 0
        %285 = vmatprep.subr.mxu0 0.0
        %286 = vmatpush1.msra.mxu0 0.0
        %287 = vmatprep.subr.mxu0 0.0
        %288 = vmatpush1.msra.mxu0 0.0
        %289 = vmatprep.subr.mxu0 0.0
        %290 = vmatpush1.msra.mxu0 0.0
        %291 = vmatprep.subr.mxu0 0.0
        %292 = vmatpush1.msra.mxu0 0.0
        %293 = vmatprep.subr.mxu0 0.0
        %294 = vmatpush1.msra.mxu0 0.0
        %295 = vmatprep.subr.mxu0 0.0
        %296 = vmatpush1.msra.mxu0 0.0
        %297 = vmatprep.subr.mxu0 0.0
        %298 = vmatpush1.msra.mxu0 0.0
        %299 = vmatprep.subr.mxu0 0.0
        %300 = vmatpush1.msra.mxu0 0.0
        %301 = vmatprep.subr.mxu0 0.0
        %302 = vmatpush1.msra.mxu0 0.0
        %303 = vmatprep.subr.mxu0 0.0
        %304 = vmatpush1.msra.mxu0 0.0
        %305 = vmatprep.subr.mxu0 0.0
        %306 = vmatpush1.msra.mxu0 0.0
        %307 = vmatprep.subr.mxu0 0.0
        %308 = vmatpush1.msra.mxu0 0.0
        %309 = vmatprep.subr.mxu0 %v275
        %310 = vmatpush1.msra.mxu0 %v274
        %311 = vmatprep.subr.mxu0 %v271
        %312 = vmatpush1.msra.mxu0 %v270
        %313 = vmatprep.subr.mxu0 %v267
        %314 = vmatpush1.msra.mxu0 %v266
        %315 = vmatprep.subr.mxu0 %v263
        %316 = vmatpush1.msra.mxu0 %v262
        %317 = vmatprep.subr.mxu0 0.0
        %318 = vmatpush2.msra.mxu0 0.0
        %319 = vmatprep.subr.mxu0 0.0
        %320 = vmatpush2.msra.mxu0 0.0
        %321 = vmatprep.subr.mxu0 0.0
        %322 = vmatpush2.msra.mxu0 0.0
        %323 = vmatprep.subr.mxu0 0.0
        %324 = vmatpush2.msra.mxu0 0.0
        %325 = vmatprep.subr.mxu0 0.0
        %326 = vmatpush2.msra.mxu0 0.0
        %327 = vmatprep.subr.mxu0 0.0
        %328 = vmatpush2.msra.mxu0 0.0
        %329 = vmatprep.subr.mxu0 0.0
        %330 = vmatpush2.msra.mxu0 0.0
        %331 = vmatprep.subr.mxu0 0.0
        %332 = vmatpush2.msra.mxu0 0.0
        %333 = vmatprep.subr.mxu0 0.0
        %334 = vmatpush2.msra.mxu0 0.0
        %335 = vmatprep.subr.mxu0 0.0
        %336 = vmatpush2.msra.mxu0 0.0
        %337 = vmatprep.subr.mxu0 0.0
        %338 = vmatpush2.msra.mxu0 0.0
        %339 = vmatprep.subr.mxu0 0.0
        %340 = vmatpush2.msra.mxu0 0.0
        %341 = vmatprep.subr.mxu0 0.0
        %342 = vmatpush2.msra.mxu0 0.0
        %343 = vmatprep.subr.mxu0 0.0
        %344 = vmatpush2.msra.mxu0 0.0
        %345 = vmatprep.subr.mxu0 0.0
        %346 = vmatpush2.msra.mxu0 0.0
        %347 = vmatprep.subr.mxu0 0.0
        %348 = vmatpush2.msra.mxu0 0.0
        %349 = vmatprep.mubr.f32.mxu0 0.0
        %350 = vmatmul.mubr.f32.gmra.mxu0 %v280
        %v351 = vpop.f32.mrf.mxu0
        %v352 = vadd.f32 0.0, %v351
        %v353 = vpop.f32.mrf.mxu0
        %v354 = vadd.f32 0.0, %v353
        %355 = vmatprep.mubr.f32.mxu0 0.0
        %356 = vmatmul.mubr.f32.gmra.mxu0 %v283
        %v357 = vpop.f32.mrf.mxu0
        %v358 = vadd.f32 0.0, %v357
        %v359 = vpop.f32.mrf.mxu0
        %v360 = vadd.f32 0.0, %v359
        %361 = vdwg.mxu0
        %362 = vmatprep.subr.mxu0 0.0
        %363 = vmatpush1.msra.mxu0 0.0
        %364 = vmatprep.subr.mxu0 0.0
        %365 = vmatpush1.msra.mxu0 0.0
        %366 = vmatprep.subr.mxu0 0.0
        %367 = vmatpush1.msra.mxu0 0.0
        %368 = vmatprep.subr.mxu0 0.0
        %369 = vmatpush1.msra.mxu0 0.0
        %370 = vmatprep.subr.mxu0 0.0
        %371 = vmatpush1.msra.mxu0 0.0
        %372 = vmatprep.subr.mxu0 0.0
        %373 = vmatpush1.msra.mxu0 0.0
        %374 = vmatprep.subr.mxu0 0.0
        %375 = vmatpush1.msra.mxu0 0.0
        %376 = vmatprep.subr.mxu0 0.0
        %377 = vmatpush1.msra.mxu0 0.0
        %378 = vmatprep.subr.mxu0 0.0
        %379 = vmatpush1.msra.mxu0 0.0
        %380 = vmatprep.subr.mxu0 0.0
        %381 = vmatpush1.msra.mxu0 0.0
        %382 = vmatprep.subr.mxu0 0.0
        %383 = vmatpush1.msra.mxu0 0.0
        %384 = vmatprep.subr.mxu0 0.0
        %385 = vmatpush1.msra.mxu0 0.0
        %386 = vmatprep.subr.mxu0 %v277
        %387 = vmatpush1.msra.mxu0 %v276
        %388 = vmatprep.subr.mxu0 %v273
        %389 = vmatpush1.msra.mxu0 %v272
        %390 = vmatprep.subr.mxu0 %v269
        %391 = vmatpush1.msra.mxu0 %v268
        %392 = vmatprep.subr.mxu0 %v265
        %393 = vmatpush1.msra.mxu0 %v264
        %394 = vmatprep.subr.mxu0 0.0
        %395 = vmatpush2.msra.mxu0 0.0
        %396 = vmatprep.subr.mxu0 0.0
        %397 = vmatpush2.msra.mxu0 0.0
        %398 = vmatprep.subr.mxu0 0.0
        %399 = vmatpush2.msra.mxu0 0.0
        %400 = vmatprep.subr.mxu0 0.0
        %401 = vmatpush2.msra.mxu0 0.0
        %402 = vmatprep.subr.mxu0 0.0
        %403 = vmatpush2.msra.mxu0 0.0
        %404 = vmatprep.subr.mxu0 0.0
        %405 = vmatpush2.msra.mxu0 0.0
        %406 = vmatprep.subr.mxu0 0.0
        %407 = vmatpush2.msra.mxu0 0.0
        %408 = vmatprep.subr.mxu0 0.0
        %409 = vmatpush2.msra.mxu0 0.0
        %410 = vmatprep.subr.mxu0 0.0
        %411 = vmatpush2.msra.mxu0 0.0
        %412 = vmatprep.subr.mxu0 0.0
        %413 = vmatpush2.msra.mxu0 0.0
        %414 = vmatprep.subr.mxu0 0.0
        %415 = vmatpush2.msra.mxu0 0.0
        %416 = vmatprep.subr.mxu0 0.0
        %417 = vmatpush2.msra.mxu0 0.0
        %418 = vmatprep.subr.mxu0 0.0
        %419 = vmatpush2.msra.mxu0 0.0
        %420 = vmatprep.subr.mxu0 0.0
        %421 = vmatpush2.msra.mxu0 0.0
        %422 = vmatprep.subr.mxu0 0.0
        %423 = vmatpush2.msra.mxu0 0.0
        %424 = vmatprep.subr.mxu0 0.0
        %425 = vmatpush2.msra.mxu0 0.0
        %426 = vmatprep.mubr.f32.mxu0 0.0
        %427 = vmatmul.mubr.f32.gmra.mxu0 %v280
        %v428 = vpop.f32.mrf.mxu0
        %v429 = vadd.f32 0.0, %v428
        %v430 = vpop.f32.mrf.mxu0
        %v431 = vadd.f32 0.0, %v430
        %432 = vmatprep.mubr.f32.mxu0 0.0
        %433 = vmatmul.mubr.f32.gmra.mxu0 %v283
        %v434 = vpop.f32.mrf.mxu0
        %v435 = vadd.f32 0.0, %v434
        %v436 = vpop.f32.mrf.mxu0
        %v437 = vadd.f32 0.0, %v436
        %438 = vdwg.mxu0
        %v439 = vmul.f32 %v352, %v352
        %v440 = vmul.f32 %v358, %v358
        %441 = vadd.xlane.f32.xlu0 %v439
        %v442 = vpop.xlane.xlu0 %441
        %443 = vadd.xlane.f32.xlu0 %v440
        %v444 = vpop.xlane.xlu0 %443
        %445 = vxpose.xlu0.b32.start [1/16] %v442, 128
        %446 = vxpose.xlu0.b32.cont [2/16] %v444, 128
        %447 = vxpose.xlu0.b32.cont [3/16] 0.0, 128
        %448 = vxpose.xlu0.b32.cont [4/16] 0.0, 128
        %449 = vxpose.xlu0.b32.cont [5/16] 0.0, 128
        %450 = vxpose.xlu0.b32.cont [6/16] 0.0, 128
        %451 = vxpose.xlu0.b32.cont [7/16] 0.0, 128
        %452 = vxpose.xlu0.b32.cont [8/16] 0.0, 128
        %453 = vxpose.xlu0.b32.cont [9/16] 0.0, 128
        %454 = vxpose.xlu0.b32.cont [10/16] 0.0, 128
        %455 = vxpose.xlu0.b32.cont [11/16] 0.0, 128
        %456 = vxpose.xlu0.b32.cont [12/16] 0.0, 128
        %457 = vxpose.xlu0.b32.cont [13/16] 0.0, 128
        %458 = vxpose.xlu0.b32.cont [14/16] 0.0, 128
        %459 = vxpose.xlu0.b32.cont [15/16] 0.0, 128
        %460 = vxpose.xlu0.b32.end [16/16] 0.0, 128
        %v461 = vpop.trf.xlu0
        %v462 = vpop.trf.xlu0
        %v463 = vpop.trf.xlu0
        %v464 = vpop.trf.xlu0
        %v465 = vpop.trf.xlu0
        %v466 = vpop.trf.xlu0
        %v467 = vpop.trf.xlu0
        %v468 = vpop.trf.xlu0
        %v469 = vpop.trf.xlu0
        %v470 = vpop.trf.xlu0
        %v471 = vpop.trf.xlu0
        %v472 = vpop.trf.xlu0
        %v473 = vpop.trf.xlu0
        %v474 = vpop.trf.xlu0
        %v475 = vpop.trf.xlu0
        %v476 = vpop.trf.xlu0
        %v477 = vmul.f32 %v461, 0.35355338
        %v478 = vmul.f32 %v354, %v354
        %v479 = vmul.f32 %v360, %v360
        %480 = vadd.xlane.f32.xlu0 %v478
        %v481 = vpop.xlane.xlu0 %480
        %482 = vadd.xlane.f32.xlu0 %v479
        %v483 = vpop.xlane.xlu0 %482
        %484 = vxpose.xlu0.b32.start [1/16] %v481, 128
        %485 = vxpose.xlu0.b32.cont [2/16] %v483, 128
        %486 = vxpose.xlu0.b32.cont [3/16] 0.0, 128
        %487 = vxpose.xlu0.b32.cont [4/16] 0.0, 128
        %488 = vxpose.xlu0.b32.cont [5/16] 0.0, 128
        %489 = vxpose.xlu0.b32.cont [6/16] 0.0, 128
        %490 = vxpose.xlu0.b32.cont [7/16] 0.0, 128
        %491 = vxpose.xlu0.b32.cont [8/16] 0.0, 128
        %492 = vxpose.xlu0.b32.cont [9/16] 0.0, 128
        %493 = vxpose.xlu0.b32.cont [10/16] 0.0, 128
        %494 = vxpose.xlu0.b32.cont [11/16] 0.0, 128
        %495 = vxpose.xlu0.b32.cont [12/16] 0.0, 128
        %496 = vxpose.xlu0.b32.cont [13/16] 0.0, 128
        %497 = vxpose.xlu0.b32.cont [14/16] 0.0, 128
        %498 = vxpose.xlu0.b32.cont [15/16] 0.0, 128
        %499 = vxpose.xlu0.b32.end [16/16] 0.0, 128
        %v500 = vpop.trf.xlu0
        %v501 = vpop.trf.xlu0
        %v502 = vpop.trf.xlu0
        %v503 = vpop.trf.xlu0
        %v504 = vpop.trf.xlu0
        %v505 = vpop.trf.xlu0
        %v506 = vpop.trf.xlu0
        %v507 = vpop.trf.xlu0
        %v508 = vpop.trf.xlu0
        %v509 = vpop.trf.xlu0
        %v510 = vpop.trf.xlu0
        %v511 = vpop.trf.xlu0
        %v512 = vpop.trf.xlu0
        %v513 = vpop.trf.xlu0
        %v514 = vpop.trf.xlu0
        %v515 = vpop.trf.xlu0
        %v516 = vmul.f32 %v500, 0.35355338
        %v517 = vmul.f32 %v429, %v429
        %v518 = vmul.f32 %v435, %v435
        %519 = vadd.xlane.f32.xlu0 %v517
        %v520 = vpop.xlane.xlu0 %519
        %521 = vadd.xlane.f32.xlu0 %v518
        %v522 = vpop.xlane.xlu0 %521
        %523 = vxpose.xlu0.b32.start [1/16] %v520, 128
        %524 = vxpose.xlu0.b32.cont [2/16] %v522, 128
        %525 = vxpose.xlu0.b32.cont [3/16] 0.0, 128
        %526 = vxpose.xlu0.b32.cont [4/16] 0.0, 128
        %527 = vxpose.xlu0.b32.cont [5/16] 0.0, 128
        %528 = vxpose.xlu0.b32.cont [6/16] 0.0, 128
        %529 = vxpose.xlu0.b32.cont [7/16] 0.0, 128
        %530 = vxpose.xlu0.b32.cont [8/16] 0.0, 128
        %531 = vxpose.xlu0.b32.cont [9/16] 0.0, 128
        %532 = vxpose.xlu0.b32.cont [10/16] 0.0, 128
        %533 = vxpose.xlu0.b32.cont [11/16] 0.0, 128
        %534 = vxpose.xlu0.b32.cont [12/16] 0.0, 128
        %535 = vxpose.xlu0.b32.cont [13/16] 0.0, 128
        %536 = vxpose.xlu0.b32.cont [14/16] 0.0, 128
        %537 = vxpose.xlu0.b32.cont [15/16] 0.0, 128
        %538 = vxpose.xlu0.b32.end [16/16] 0.0, 128
        %v539 = vpop.trf.xlu0
        %v540 = vpop.trf.xlu0
        %v541 = vpop.trf.xlu0
        %v542 = vpop.trf.xlu0
        %v543 = vpop.trf.xlu0
        %v544 = vpop.trf.xlu0
        %v545 = vpop.trf.xlu0
        %v546 = vpop.trf.xlu0
        %v547 = vpop.trf.xlu0
        %v548 = vpop.trf.xlu0
        %v549 = vpop.trf.xlu0
        %v550 = vpop.trf.xlu0
        %v551 = vpop.trf.xlu0
        %v552 = vpop.trf.xlu0
        %v553 = vpop.trf.xlu0
        %v554 = vpop.trf.xlu0
        %v555 = vmul.f32 %v539, 0.35355338
        %v556 = vmul.f32 %v431, %v431
        %v557 = vmul.f32 %v437, %v437
        %558 = vadd.xlane.f32.xlu0 %v556
        %v559 = vpop.xlane.xlu0 %558
        %560 = vadd.xlane.f32.xlu0 %v557
        %v561 = vpop.xlane.xlu0 %560
        %562 = vxpose.xlu0.b32.start [1/16] %v559, 128
        %563 = vxpose.xlu0.b32.cont [2/16] %v561, 128
        %564 = vxpose.xlu0.b32.cont [3/16] 0.0, 128
        %565 = vxpose.xlu0.b32.cont [4/16] 0.0, 128
        %566 = vxpose.xlu0.b32.cont [5/16] 0.0, 128
        %567 = vxpose.xlu0.b32.cont [6/16] 0.0, 128
        %568 = vxpose.xlu0.b32.cont [7/16] 0.0, 128
        %569 = vxpose.xlu0.b32.cont [8/16] 0.0, 128
        %570 = vxpose.xlu0.b32.cont [9/16] 0.0, 128
        %571 = vxpose.xlu0.b32.cont [10/16] 0.0, 128
        %572 = vxpose.xlu0.b32.cont [11/16] 0.0, 128
        %573 = vxpose.xlu0.b32.cont [12/16] 0.0, 128
        %574 = vxpose.xlu0.b32.cont [13/16] 0.0, 128
        %575 = vxpose.xlu0.b32.cont [14/16] 0.0, 128
        %576 = vxpose.xlu0.b32.cont [15/16] 0.0, 128
        %577 = vxpose.xlu0.b32.end [16/16] 0.0, 128
        %v578 = vpop.trf.xlu0
        %v579 = vpop.trf.xlu0
        %v580 = vpop.trf.xlu0
        %v581 = vpop.trf.xlu0
        %v582 = vpop.trf.xlu0
        %v583 = vpop.trf.xlu0
        %v584 = vpop.trf.xlu0
        %v585 = vpop.trf.xlu0
        %v586 = vpop.trf.xlu0
        %v587 = vpop.trf.xlu0
        %v588 = vpop.trf.xlu0
        %v589 = vpop.trf.xlu0
        %v590 = vpop.trf.xlu0
        %v591 = vpop.trf.xlu0
        %v592 = vpop.trf.xlu0
        %v593 = vpop.trf.xlu0
        %v594 = vmul.f32 %v578, 0.35355338
        %v595 = vmul.f32 %v352, 0.70710677
        %v596 = vmul.f32 %v354, 0.70710677
        %v597 = vmul.f32 %v429, 0.70710677
        %v598 = vmul.f32 %v431, 0.70710677
        %v599 = vmul.f32 %v358, 0.70710677
        %v600 = vmul.f32 %v360, 0.70710677
        %v601 = vmul.f32 %v435, 0.70710677
        %v602 = vmul.f32 %v437, 0.70710677
        %603 = vmatprep.subr.mxu0 0.0
        %604 = vmatpush1.xpose.msra.mxu0 0.0
        %605 = vmatprep.subr.mxu0 0.0
        %606 = vmatpush1.xpose.msra.mxu0 0.0
        %607 = vmatprep.subr.mxu0 0.0
        %608 = vmatpush1.xpose.msra.mxu0 0.0
        %609 = vmatprep.subr.mxu0 0.0
        %610 = vmatpush1.xpose.msra.mxu0 0.0
        %611 = vmatprep.subr.mxu0 0.0
        %612 = vmatpush1.xpose.msra.mxu0 0.0
        %613 = vmatprep.subr.mxu0 0.0
        %614 = vmatpush1.xpose.msra.mxu0 0.0
        %615 = vmatprep.subr.mxu0 0.0
        %616 = vmatpush1.xpose.msra.mxu0 0.0
        %617 = vmatprep.subr.mxu0 0.0
        %618 = vmatpush1.xpose.msra.mxu0 0.0
        %619 = vmatprep.subr.mxu0 0.0
        %620 = vmatpush1.xpose.msra.mxu0 0.0
        %621 = vmatprep.subr.mxu0 0.0
        %622 = vmatpush1.xpose.msra.mxu0 0.0
        %623 = vmatprep.subr.mxu0 0.0
        %624 = vmatpush1.xpose.msra.mxu0 0.0
        %625 = vmatprep.subr.mxu0 0.0
        %626 = vmatpush1.xpose.msra.mxu0 0.0
        %627 = vmatprep.subr.mxu0 0.0
        %628 = vmatpush1.xpose.msra.mxu0 0.0
        %629 = vmatprep.subr.mxu0 0.0
        %630 = vmatpush1.xpose.msra.mxu0 0.0
        %631 = vmatprep.subr.mxu0 0.0
        %632 = vmatpush1.xpose.msra.mxu0 %v358
        %633 = vmatprep.subr.mxu0 0.0
        %634 = vmatpush1.xpose.msra.mxu0 %v352
        %635 = vmatprep.subr.mxu0 0.0
        %636 = vmatpush2.xpose.msra.mxu0 0.0
        %637 = vmatprep.subr.mxu0 0.0
        %638 = vmatpush2.xpose.msra.mxu0 0.0
        %639 = vmatprep.subr.mxu0 0.0
        %640 = vmatpush2.xpose.msra.mxu0 0.0
        %641 = vmatprep.subr.mxu0 0.0
        %642 = vmatpush2.xpose.msra.mxu0 0.0
        %643 = vmatprep.subr.mxu0 0.0
        %644 = vmatpush2.xpose.msra.mxu0 0.0
        %645 = vmatprep.subr.mxu0 0.0
        %646 = vmatpush2.xpose.msra.mxu0 0.0
        %647 = vmatprep.subr.mxu0 0.0
        %648 = vmatpush2.xpose.msra.mxu0 0.0
        %649 = vmatprep.subr.mxu0 0.0
        %650 = vmatpush2.xpose.msra.mxu0 0.0
        %651 = vmatprep.subr.mxu0 0.0
        %652 = vmatpush2.xpose.msra.mxu0 0.0
        %653 = vmatprep.subr.mxu0 0.0
        %654 = vmatpush2.xpose.msra.mxu0 0.0
        %655 = vmatprep.subr.mxu0 0.0
        %656 = vmatpush2.xpose.msra.mxu0 0.0
        %657 = vmatprep.subr.mxu0 0.0
        %658 = vmatpush2.xpose.msra.mxu0 0.0
        %659 = vmatprep.subr.mxu0 0.0
        %660 = vmatpush2.xpose.msra.mxu0 0.0
        %661 = vmatprep.subr.mxu0 0.0
        %662 = vmatpush2.xpose.msra.mxu0 0.0
        %663 = vmatprep.subr.mxu0 0.0
        %664 = vmatpush2.xpose.msra.mxu0 0.0
        %665 = vmatprep.subr.mxu0 0.0
        %666 = vmatpush2.xpose.msra.mxu0 0.0
        %667 = vmatprep.mubr.f32.mxu0 0.0
        %668 = vmatmul.mubr.f32.gmra.mxu0 %v595
        %v669 = vpop.f32.mrf.mxu0
        %v670 = vadd.f32 0.0, %v669
        %v671 = vpop.f32.mrf.mxu0
        %672 = vmatprep.mubr.f32.mxu0 0.0
        %673 = vmatmul.mubr.f32.gmra.mxu0 %v599
        %v674 = vpop.f32.mrf.mxu0
        %v675 = vadd.f32 0.0, %v674
        %v676 = vpop.f32.mrf.mxu0
        %677 = vdwg.mxu0
        %v678 = vlaneseq
        %v679 = vshrl.u32 %v678, 7
        %v680 = vsub.s32 0, %v679
        %v681 = vrot.slane %v477, %v680
        %v682 = vsub.f32 %v670, %v681
        %v683 = vsub.f32 %v675, %v681
        %vm684 = vcmask 130048
        %v685 = vsel %vm684, %v682, -inf
        %686 = vmax.xlane.f32.xlu0 %v685
        %v687 = vpop.xlane.xlu0 %686
        %v688 = vsel %vm684, %v683, -inf
        %689 = vmax.xlane.f32.xlu0 %v688
        %v690 = vpop.xlane.xlu0 %689
        %v691 = vsub.f32 %v682, %v687
        %v692 = vsub.f32 %v683, %v690
        %v693 = vmul.f32 %v691, 1.442695
        %v694 = vpow.pop %v693
        %v695 = vmul.f32 %v692, 1.442695
        %v696 = vpow.pop %v695
        %v697 = vsel %vm684, %v694, 0.0
        %698 = vadd.xlane.f32.xlu0 %v697
        %v699 = vpop.xlane.xlu0 %698
        %v700 = vsel %vm684, %v696, 0.0
        %701 = vadd.xlane.f32.xlu0 %v700
        %v702 = vpop.xlane.xlu0 %701
        %v704 = vsel %vm684, %v694, 0
        %v707 = vsel %vm684, %v696, 0
        %709 = vmatprep.subr.mxu0 0.0
        %710 = vmatpush1.msra.mxu0 0.0
        %711 = vmatprep.subr.mxu0 0.0
        %712 = vmatpush1.msra.mxu0 0.0
        %713 = vmatprep.subr.mxu0 0.0
        %714 = vmatpush1.msra.mxu0 0.0
        %715 = vmatprep.subr.mxu0 0.0
        %716 = vmatpush1.msra.mxu0 0.0
        %717 = vmatprep.subr.mxu0 0.0
        %718 = vmatpush1.msra.mxu0 0.0
        %719 = vmatprep.subr.mxu0 0.0
        %720 = vmatpush1.msra.mxu0 0.0
        %721 = vmatprep.subr.mxu0 0.0
        %722 = vmatpush1.msra.mxu0 0.0
        %723 = vmatprep.subr.mxu0 0.0
        %724 = vmatpush1.msra.mxu0 0.0
        %725 = vmatprep.subr.mxu0 0.0
        %726 = vmatpush1.msra.mxu0 0.0
        %727 = vmatprep.subr.mxu0 0.0
        %728 = vmatpush1.msra.mxu0 0.0
        %729 = vmatprep.subr.mxu0 0.0
        %730 = vmatpush1.msra.mxu0 0.0
        %731 = vmatprep.subr.mxu0 0.0
        %732 = vmatpush1.msra.mxu0 0.0
        %733 = vmatprep.subr.mxu0 0.0
        %734 = vmatpush1.msra.mxu0 0.0
        %735 = vmatprep.subr.mxu0 0.0
        %736 = vmatpush1.msra.mxu0 0.0
        %737 = vmatprep.subr.mxu0 0.0
        %738 = vmatpush1.msra.mxu0 %v261
        %739 = vmatprep.subr.mxu0 0.0
        %740 = vmatpush1.msra.mxu0 %v260
        %741 = vmatprep.subr.mxu0 0.0
        %742 = vmatpush2.msra.mxu0 0.0
        %743 = vmatprep.subr.mxu0 0.0
        %744 = vmatpush2.msra.mxu0 0.0
        %745 = vmatprep.subr.mxu0 0.0
        %746 = vmatpush2.msra.mxu0 0.0
        %747 = vmatprep.subr.mxu0 0.0
        %748 = vmatpush2.msra.mxu0 0.0
        %749 = vmatprep.subr.mxu0 0.0
        %750 = vmatpush2.msra.mxu0 0.0
        %751 = vmatprep.subr.mxu0 0.0
        %752 = vmatpush2.msra.mxu0 0.0
        %753 = vmatprep.subr.mxu0 0.0
        %754 = vmatpush2.msra.mxu0 0.0
        %755 = vmatprep.subr.mxu0 0.0
        %756 = vmatpush2.msra.mxu0 0.0
        %757 = vmatprep.subr.mxu0 0.0
        %758 = vmatpush2.msra.mxu0 0.0
        %759 = vmatprep.subr.mxu0 0.0
        %760 = vmatpush2.msra.mxu0 0.0
        %761 = vmatprep.subr.mxu0 0.0
        %762 = vmatpush2.msra.mxu0 0.0
        %763 = vmatprep.subr.mxu0 0.0
        %764 = vmatpush2.msra.mxu0 0.0
        %765 = vmatprep.subr.mxu0 0.0
        %766 = vmatpush2.msra.mxu0 0.0
        %767 = vmatprep.subr.mxu0 0.0
        %768 = vmatpush2.msra.mxu0 0.0
        %769 = vmatprep.subr.mxu0 0.0
        %770 = vmatpush2.msra.mxu0 0.0
        %771 = vmatprep.subr.mxu0 0.0
        %772 = vmatpush2.msra.mxu0 0.0
        %773 = vmatprep.mubr.f32.mxu0 0.0
        %774 = vmatmul.mubr.f32.gmra.mxu0 %v704
        %v775 = vpop.f32.mrf.mxu0
        %v776 = vadd.f32 0.0, %v775
        %v777 = vpop.f32.mrf.mxu0
        %778 = vmatprep.mubr.f32.mxu0 0.0
        %779 = vmatmul.mubr.f32.gmra.mxu0 %v707
        %v780 = vpop.f32.mrf.mxu0
        %v781 = vadd.f32 0.0, %v780
        %v782 = vpop.f32.mrf.mxu0
        %783 = vdwg.mxu0
        %v784 = vrcp.pop %v699
        %v785 = vrcp.pop %v702
        %v786 = vmul.f32 %v776, %v784
        %v787 = vmul.f32 %v781, %v785
        %v788 = vld [vmem:[#allocation7] sm:$0xff]
        %v789 = vld [vmem:[#allocation7 + $0x8] sm:$0xff]
        %v790 = vld [vmem:[#allocation7 + $0x10] sm:$0xff]
        %v791 = vld [vmem:[#allocation7 + $0x18] sm:$0xff]
        %792 = vmatprep.subr.mxu0 0.0
        %793 = vmatpush1.xpose.msra.mxu0 0.0
        %794 = vmatprep.subr.mxu0 0.0
        %795 = vmatpush1.xpose.msra.mxu0 0.0
        %796 = vmatprep.subr.mxu0 0.0
        %797 = vmatpush1.xpose.msra.mxu0 0.0
        %798 = vmatprep.subr.mxu0 0.0
        %799 = vmatpush1.xpose.msra.mxu0 0.0
        %800 = vmatprep.subr.mxu0 0.0
        %801 = vmatpush1.xpose.msra.mxu0 0.0
        %802 = vmatprep.subr.mxu0 0.0
        %803 = vmatpush1.xpose.msra.mxu0 0.0
        %804 = vmatprep.subr.mxu0 0.0
        %805 = vmatpush1.xpose.msra.mxu0 0.0
        %806 = vmatprep.subr.mxu0 0.0
        %807 = vmatpush1.xpose.msra.mxu0 0.0
        %808 = vmatprep.subr.mxu0 0.0
        %809 = vmatpush1.xpose.msra.mxu0 0.0
        %810 = vmatprep.subr.mxu0 0.0
        %811 = vmatpush1.xpose.msra.mxu0 0.0
        %812 = vmatprep.subr.mxu0 0.0
        %813 = vmatpush1.xpose.msra.mxu0 0.0
        %814 = vmatprep.subr.mxu0 0.0
        %815 = vmatpush1.xpose.msra.mxu0 0.0
        %816 = vmatprep.subr.mxu0 0.0
        %817 = vmatpush1.xpose.msra.mxu0 0.0
        %818 = vmatprep.subr.mxu0 0.0
        %819 = vmatpush1.xpose.msra.mxu0 0.0
        %820 = vmatprep.subr.mxu0 0.0
        %821 = vmatpush1.xpose.msra.mxu0 %v360
        %822 = vmatprep.subr.mxu0 0.0
        %823 = vmatpush1.xpose.msra.mxu0 %v354
        %824 = vmatprep.subr.mxu0 0.0
        %825 = vmatpush2.xpose.msra.mxu0 0.0
        %826 = vmatprep.subr.mxu0 0.0
        %827 = vmatpush2.xpose.msra.mxu0 0.0
        %828 = vmatprep.subr.mxu0 0.0
        %829 = vmatpush2.xpose.msra.mxu0 0.0
        %830 = vmatprep.subr.mxu0 0.0
        %831 = vmatpush2.xpose.msra.mxu0 0.0
        %832 = vmatprep.subr.mxu0 0.0
        %833 = vmatpush2.xpose.msra.mxu0 0.0
        %834 = vmatprep.subr.mxu0 0.0
        %835 = vmatpush2.xpose.msra.mxu0 0.0
        %836 = vmatprep.subr.mxu0 0.0
        %837 = vmatpush2.xpose.msra.mxu0 0.0
        %838 = vmatprep.subr.mxu0 0.0
        %839 = vmatpush2.xpose.msra.mxu0 0.0
        %840 = vmatprep.subr.mxu0 0.0
        %841 = vmatpush2.xpose.msra.mxu0 0.0
        %842 = vmatprep.subr.mxu0 0.0
        %843 = vmatpush2.xpose.msra.mxu0 0.0
        %844 = vmatprep.subr.mxu0 0.0
        %845 = vmatpush2.xpose.msra.mxu0 0.0
        %846 = vmatprep.subr.mxu0 0.0
        %847 = vmatpush2.xpose.msra.mxu0 0.0
        %848 = vmatprep.subr.mxu0 0.0
        %849 = vmatpush2.xpose.msra.mxu0 0.0
        %850 = vmatprep.subr.mxu0 0.0
        %851 = vmatpush2.xpose.msra.mxu0 0.0
        %852 = vmatprep.subr.mxu0 0.0
        %853 = vmatpush2.xpose.msra.mxu0 0.0
        %854 = vmatprep.subr.mxu0 0.0
        %855 = vmatpush2.xpose.msra.mxu0 0.0
        %856 = vmatprep.mubr.f32.mxu0 0.0
        %857 = vmatmul.mubr.f32.gmra.mxu0 %v596
        %v858 = vpop.f32.mrf.mxu0
        %v859 = vadd.f32 0.0, %v858
        %v860 = vpop.f32.mrf.mxu0
        %861 = vmatprep.mubr.f32.mxu0 0.0
        %862 = vmatmul.mubr.f32.gmra.mxu0 %v600
        %v863 = vpop.f32.mrf.mxu0
        %v864 = vadd.f32 0.0, %v863
        %v865 = vpop.f32.mrf.mxu0
        %866 = vdwg.mxu0
        %v867 = vlaneseq
        %v868 = vshrl.u32 %v867, 7
        %v869 = vsub.s32 0, %v868
        %v870 = vrot.slane %v516, %v869
        %v871 = vsub.f32 %v859, %v870
        %v872 = vsub.f32 %v864, %v870
        %v873 = vsel %vm684, %v871, -inf
        %874 = vmax.xlane.f32.xlu0 %v873
        %v875 = vpop.xlane.xlu0 %874
        %v876 = vsel %vm684, %v872, -inf
        %877 = vmax.xlane.f32.xlu0 %v876
        %v878 = vpop.xlane.xlu0 %877
        %v879 = vsub.f32 %v871, %v875
        %v880 = vsub.f32 %v872, %v878
        %v881 = vmul.f32 %v879, 1.442695
        %v882 = vpow.pop %v881
        %v883 = vmul.f32 %v880, 1.442695
        %v884 = vpow.pop %v883
        %v885 = vsel %vm684, %v882, 0.0
        %886 = vadd.xlane.f32.xlu0 %v885
        %v887 = vpop.xlane.xlu0 %886
        %v888 = vsel %vm684, %v884, 0.0
        %889 = vadd.xlane.f32.xlu0 %v888
        %v890 = vpop.xlane.xlu0 %889
        %v892 = vsel %vm684, %v882, 0
        %v895 = vsel %vm684, %v884, 0
        %897 = vmatprep.subr.mxu0 0.0
        %898 = vmatpush1.msra.mxu0 0.0
        %899 = vmatprep.subr.mxu0 0.0
        %900 = vmatpush1.msra.mxu0 0.0
        %901 = vmatprep.subr.mxu0 0.0
        %902 = vmatpush1.msra.mxu0 0.0
        %903 = vmatprep.subr.mxu0 0.0
        %904 = vmatpush1.msra.mxu0 0.0
        %905 = vmatprep.subr.mxu0 0.0
        %906 = vmatpush1.msra.mxu0 0.0
        %907 = vmatprep.subr.mxu0 0.0
        %908 = vmatpush1.msra.mxu0 0.0
        %909 = vmatprep.subr.mxu0 0.0
        %910 = vmatpush1.msra.mxu0 0.0
        %911 = vmatprep.subr.mxu0 0.0
        %912 = vmatpush1.msra.mxu0 0.0
        %913 = vmatprep.subr.mxu0 0.0
        %914 = vmatpush1.msra.mxu0 0.0
        %915 = vmatprep.subr.mxu0 0.0
        %916 = vmatpush1.msra.mxu0 0.0
        %917 = vmatprep.subr.mxu0 0.0
        %918 = vmatpush1.msra.mxu0 0.0
        %919 = vmatprep.subr.mxu0 0.0
        %920 = vmatpush1.msra.mxu0 0.0
        %921 = vmatprep.subr.mxu0 0.0
        %922 = vmatpush1.msra.mxu0 0.0
        %923 = vmatprep.subr.mxu0 0.0
        %924 = vmatpush1.msra.mxu0 0.0
        %925 = vmatprep.subr.mxu0 0.0
        %926 = vmatpush1.msra.mxu0 %v261
        %927 = vmatprep.subr.mxu0 0.0
        %928 = vmatpush1.msra.mxu0 %v260
        %929 = vmatprep.subr.mxu0 0.0
        %930 = vmatpush2.msra.mxu0 0.0
        %931 = vmatprep.subr.mxu0 0.0
        %932 = vmatpush2.msra.mxu0 0.0
        %933 = vmatprep.subr.mxu0 0.0
        %934 = vmatpush2.msra.mxu0 0.0
        %935 = vmatprep.subr.mxu0 0.0
        %936 = vmatpush2.msra.mxu0 0.0
        %937 = vmatprep.subr.mxu0 0.0
        %938 = vmatpush2.msra.mxu0 0.0
        %939 = vmatprep.subr.mxu0 0.0
        %940 = vmatpush2.msra.mxu0 0.0
        %941 = vmatprep.subr.mxu0 0.0
        %942 = vmatpush2.msra.mxu0 0.0
        %943 = vmatprep.subr.mxu0 0.0
        %944 = vmatpush2.msra.mxu0 0.0
        %945 = vmatprep.subr.mxu0 0.0
        %946 = vmatpush2.msra.mxu0 0.0
        %947 = vmatprep.subr.mxu0 0.0
        %948 = vmatpush2.msra.mxu0 0.0
        %949 = vmatprep.subr.mxu0 0.0
        %950 = vmatpush2.msra.mxu0 0.0
        %951 = vmatprep.subr.mxu0 0.0
        %952 = vmatpush2.msra.mxu0 0.0
        %953 = vmatprep.subr.mxu0 0.0
        %954 = vmatpush2.msra.mxu0 0.0
        %955 = vmatprep.subr.mxu0 0.0
        %956 = vmatpush2.msra.mxu0 0.0
        %957 = vmatprep.subr.mxu0 0.0
        %958 = vmatpush2.msra.mxu0 0.0
        %959 = vmatprep.subr.mxu0 0.0
        %960 = vmatpush2.msra.mxu0 0.0
        %961 = vmatprep.mubr.f32.mxu0 0.0
        %962 = vmatmul.mubr.f32.gmra.mxu0 %v892
        %v963 = vpop.f32.mrf.mxu0
        %v964 = vadd.f32 0.0, %v963
        %v965 = vpop.f32.mrf.mxu0
        %966 = vmatprep.mubr.f32.mxu0 0.0
        %967 = vmatmul.mubr.f32.gmra.mxu0 %v895
        %v968 = vpop.f32.mrf.mxu0
        %v969 = vadd.f32 0.0, %v968
        %v970 = vpop.f32.mrf.mxu0
        %971 = vdwg.mxu0
        %v972 = vrcp.pop %v887
        %v973 = vrcp.pop %v890
        %v974 = vmul.f32 %v964, %v972
        %v975 = vmul.f32 %v969, %v973
        %s976 = scalar_lea.vmem [#allocation7], 32
        %v977 = vld [vmem:[%s976] sm:$0xff]
        %v978 = vld [vmem:[%s976 + $0x8] sm:$0xff]
        %v979 = vld [vmem:[%s976 + $0x10] sm:$0xff]
        %v980 = vld [vmem:[%s976 + $0x18] sm:$0xff]
        %v982 = vsel %vm278, %v974, 0
        %v985 = vsel %vm278, %v975, 0
        %987 = vmatprep.subr.mxu0 0.0
        %988 = vmatpush1.msra.mxu0 0.0
        %989 = vmatprep.subr.mxu0 0.0
        %990 = vmatpush1.msra.mxu0 0.0
        %991 = vmatprep.subr.mxu0 0.0
        %992 = vmatpush1.msra.mxu0 0.0
        %993 = vmatprep.subr.mxu0 0.0
        %994 = vmatpush1.msra.mxu0 0.0
        %995 = vmatprep.subr.mxu0 0.0
        %996 = vmatpush1.msra.mxu0 0.0
        %997 = vmatprep.subr.mxu0 0.0
        %998 = vmatpush1.msra.mxu0 0.0
        %999 = vmatprep.subr.mxu0 0.0
        %1000 = vmatpush1.msra.mxu0 0.0
        %1001 = vmatprep.subr.mxu0 0.0
        %1002 = vmatpush1.msra.mxu0 0.0
        %1003 = vmatprep.subr.mxu0 0.0
        %1004 = vmatpush1.msra.mxu0 0.0
        %1005 = vmatprep.subr.mxu0 0.0
        %1006 = vmatpush1.msra.mxu0 0.0
        %1007 = vmatprep.subr.mxu0 0.0
        %1008 = vmatpush1.msra.mxu0 0.0
        %1009 = vmatprep.subr.mxu0 0.0
        %1010 = vmatpush1.msra.mxu0 0.0
        %1011 = vmatprep.subr.mxu0 0.0
        %1012 = vmatpush1.msra.mxu0 %v980
        %1013 = vmatprep.subr.mxu0 0.0
        %1014 = vmatpush1.msra.mxu0 %v979
        %1015 = vmatprep.subr.mxu0 0.0
        %1016 = vmatpush1.msra.mxu0 %v978
        %1017 = vmatprep.subr.mxu0 0.0
        %1018 = vmatpush1.msra.mxu0 %v977
        %1019 = vmatprep.subr.mxu0 0.0
        %1020 = vmatpush2.msra.mxu0 0.0
        %1021 = vmatprep.subr.mxu0 0.0
        %1022 = vmatpush2.msra.mxu0 0.0
        %1023 = vmatprep.subr.mxu0 0.0
        %1024 = vmatpush2.msra.mxu0 0.0
        %1025 = vmatprep.subr.mxu0 0.0
        %1026 = vmatpush2.msra.mxu0 0.0
        %1027 = vmatprep.subr.mxu0 0.0
        %1028 = vmatpush2.msra.mxu0 0.0
        %1029 = vmatprep.subr.mxu0 0.0
        %1030 = vmatpush2.msra.mxu0 0.0
        %1031 = vmatprep.subr.mxu0 0.0
        %1032 = vmatpush2.msra.mxu0 0.0
        %1033 = vmatprep.subr.mxu0 0.0
        %1034 = vmatpush2.msra.mxu0 0.0
        %1035 = vmatprep.subr.mxu0 0.0
        %1036 = vmatpush2.msra.mxu0 0.0
        %1037 = vmatprep.subr.mxu0 0.0
        %1038 = vmatpush2.msra.mxu0 0.0
        %1039 = vmatprep.subr.mxu0 0.0
        %1040 = vmatpush2.msra.mxu0 0.0
        %1041 = vmatprep.subr.mxu0 0.0
        %1042 = vmatpush2.msra.mxu0 0.0
        %1043 = vmatprep.subr.mxu0 0.0
        %1044 = vmatpush2.msra.mxu0 0.0
        %1045 = vmatprep.subr.mxu0 0.0
        %1046 = vmatpush2.msra.mxu0 0.0
        %1047 = vmatprep.subr.mxu0 0.0
        %1048 = vmatpush2.msra.mxu0 0.0
        %1049 = vmatprep.subr.mxu0 0.0
        %1050 = vmatpush2.msra.mxu0 0.0
        %1051 = vmatprep.mubr.f32.mxu0 0.0
        %1052 = vmatmul.mubr.f32.gmra.mxu0 %v982
        %v1053 = vpop.f32.mrf.mxu0
        %v1054 = vadd.f32 0.0, %v1053
        %v1055 = vpop.f32.mrf.mxu0
        %1056 = vmatprep.mubr.f32.mxu0 0.0
        %1057 = vmatmul.mubr.f32.gmra.mxu0 %v985
        %v1058 = vpop.f32.mrf.mxu0
        %v1059 = vadd.f32 0.0, %v1058
        %v1060 = vpop.f32.mrf.mxu0
        %1061 = vdwg.mxu0
        %v1063 = vsel %vm278, %v786, 0
        %v1066 = vsel %vm278, %v787, 0
        %1068 = vmatprep.subr.mxu0 0.0
        %1069 = vmatpush1.msra.mxu0 0.0
        %1070 = vmatprep.subr.mxu0 0.0
        %1071 = vmatpush1.msra.mxu0 0.0
        %1072 = vmatprep.subr.mxu0 0.0
        %1073 = vmatpush1.msra.mxu0 0.0
        %1074 = vmatprep.subr.mxu0 0.0
        %1075 = vmatpush1.msra.mxu0 0.0
        %1076 = vmatprep.subr.mxu0 0.0
        %1077 = vmatpush1.msra.mxu0 0.0
        %1078 = vmatprep.subr.mxu0 0.0
        %1079 = vmatpush1.msra.mxu0 0.0
        %1080 = vmatprep.subr.mxu0 0.0
        %1081 = vmatpush1.msra.mxu0 0.0
        %1082 = vmatprep.subr.mxu0 0.0
        %1083 = vmatpush1.msra.mxu0 0.0
        %1084 = vmatprep.subr.mxu0 0.0
        %1085 = vmatpush1.msra.mxu0 0.0
        %1086 = vmatprep.subr.mxu0 0.0
        %1087 = vmatpush1.msra.mxu0 0.0
        %1088 = vmatprep.subr.mxu0 0.0
        %1089 = vmatpush1.msra.mxu0 0.0
        %1090 = vmatprep.subr.mxu0 0.0
        %1091 = vmatpush1.msra.mxu0 0.0
        %1092 = vmatprep.subr.mxu0 0.0
        %1093 = vmatpush1.msra.mxu0 %v791
        %1094 = vmatprep.subr.mxu0 0.0
        %1095 = vmatpush1.msra.mxu0 %v790
        %1096 = vmatprep.subr.mxu0 0.0
        %1097 = vmatpush1.msra.mxu0 %v789
        %1098 = vmatprep.subr.mxu0 0.0
        %1099 = vmatpush1.msra.mxu0 %v788
        %1100 = vmatprep.subr.mxu0 0.0
        %1101 = vmatpush2.msra.mxu0 0.0
        %1102 = vmatprep.subr.mxu0 0.0
        %1103 = vmatpush2.msra.mxu0 0.0
        %1104 = vmatprep.subr.mxu0 0.0
        %1105 = vmatpush2.msra.mxu0 0.0
        %1106 = vmatprep.subr.mxu0 0.0
        %1107 = vmatpush2.msra.mxu0 0.0
        %1108 = vmatprep.subr.mxu0 0.0
        %1109 = vmatpush2.msra.mxu0 0.0
        %1110 = vmatprep.subr.mxu0 0.0
        %1111 = vmatpush2.msra.mxu0 0.0
        %1112 = vmatprep.subr.mxu0 0.0
        %1113 = vmatpush2.msra.mxu0 0.0
        %1114 = vmatprep.subr.mxu0 0.0
        %1115 = vmatpush2.msra.mxu0 0.0
        %1116 = vmatprep.subr.mxu0 0.0
        %1117 = vmatpush2.msra.mxu0 0.0
        %1118 = vmatprep.subr.mxu0 0.0
        %1119 = vmatpush2.msra.mxu0 0.0
        %1120 = vmatprep.subr.mxu0 0.0
        %1121 = vmatpush2.msra.mxu0 0.0
        %1122 = vmatprep.subr.mxu0 0.0
        %1123 = vmatpush2.msra.mxu0 0.0
        %1124 = vmatprep.subr.mxu0 0.0
        %1125 = vmatpush2.msra.mxu0 0.0
        %1126 = vmatprep.subr.mxu0 0.0
        %1127 = vmatpush2.msra.mxu0 0.0
        %1128 = vmatprep.subr.mxu0 0.0
        %1129 = vmatpush2.msra.mxu0 0.0
        %1130 = vmatprep.subr.mxu0 0.0
        %1131 = vmatpush2.msra.mxu0 0.0
        %1132 = vmatprep.mubr.f32.mxu0 0.0
        %1133 = vmatmul.mubr.f32.gmra.mxu0 %v1063
        %v1134 = vpop.f32.mrf.mxu0
        %v1135 = vadd.f32 %v1054, %v1134
        %v1136 = vpop.f32.mrf.mxu0
        %1137 = vmatprep.mubr.f32.mxu0 0.0
        %1138 = vmatmul.mubr.f32.gmra.mxu0 %v1066
        %v1139 = vpop.f32.mrf.mxu0
        %v1140 = vadd.f32 %v1059, %v1139
        %v1141 = vpop.f32.mrf.mxu0
        %1142 = vdwg.mxu0
        %1143 = vmatprep.subr.mxu0 0.0
        %1144 = vmatpush1.xpose.msra.mxu0 0.0
        %1145 = vmatprep.subr.mxu0 0.0
        %1146 = vmatpush1.xpose.msra.mxu0 0.0
        %1147 = vmatprep.subr.mxu0 0.0
        %1148 = vmatpush1.xpose.msra.mxu0 0.0
        %1149 = vmatprep.subr.mxu0 0.0
        %1150 = vmatpush1.xpose.msra.mxu0 0.0
        %1151 = vmatprep.subr.mxu0 0.0
        %1152 = vmatpush1.xpose.msra.mxu0 0.0
        %1153 = vmatprep.subr.mxu0 0.0
        %1154 = vmatpush1.xpose.msra.mxu0 0.0
        %1155 = vmatprep.subr.mxu0 0.0
        %1156 = vmatpush1.xpose.msra.mxu0 0.0
        %1157 = vmatprep.subr.mxu0 0.0
        %1158 = vmatpush1.xpose.msra.mxu0 0.0
        %1159 = vmatprep.subr.mxu0 0.0
        %1160 = vmatpush1.xpose.msra.mxu0 0.0
        %1161 = vmatprep.subr.mxu0 0.0
        %1162 = vmatpush1.xpose.msra.mxu0 0.0
        %1163 = vmatprep.subr.mxu0 0.0
        %1164 = vmatpush1.xpose.msra.mxu0 0.0
        %1165 = vmatprep.subr.mxu0 0.0
        %1166 = vmatpush1.xpose.msra.mxu0 0.0
        %1167 = vmatprep.subr.mxu0 0.0
        %1168 = vmatpush1.xpose.msra.mxu0 0.0
        %1169 = vmatprep.subr.mxu0 0.0
        %1170 = vmatpush1.xpose.msra.mxu0 0.0
        %1171 = vmatprep.subr.mxu0 0.0
        %1172 = vmatpush1.xpose.msra.mxu0 %v435
        %1173 = vmatprep.subr.mxu0 0.0
        %1174 = vmatpush1.xpose.msra.mxu0 %v429
        %1175 = vmatprep.subr.mxu0 0.0
        %1176 = vmatpush2.xpose.msra.mxu0 0.0
        %1177 = vmatprep.subr.mxu0 0.0
        %1178 = vmatpush2.xpose.msra.mxu0 0.0
        %1179 = vmatprep.subr.mxu0 0.0
        %1180 = vmatpush2.xpose.msra.mxu0 0.0
        %1181 = vmatprep.subr.mxu0 0.0
        %1182 = vmatpush2.xpose.msra.mxu0 0.0
        %1183 = vmatprep.subr.mxu0 0.0
        %1184 = vmatpush2.xpose.msra.mxu0 0.0
        %1185 = vmatprep.subr.mxu0 0.0
        %1186 = vmatpush2.xpose.msra.mxu0 0.0
        %1187 = vmatprep.subr.mxu0 0.0
        %1188 = vmatpush2.xpose.msra.mxu0 0.0
        %1189 = vmatprep.subr.mxu0 0.0
        %1190 = vmatpush2.xpose.msra.mxu0 0.0
        %1191 = vmatprep.subr.mxu0 0.0
        %1192 = vmatpush2.xpose.msra.mxu0 0.0
        %1193 = vmatprep.subr.mxu0 0.0
        %1194 = vmatpush2.xpose.msra.mxu0 0.0
        %1195 = vmatprep.subr.mxu0 0.0
        %1196 = vmatpush2.xpose.msra.mxu0 0.0
        %1197 = vmatprep.subr.mxu0 0.0
        %1198 = vmatpush2.xpose.msra.mxu0 0.0
        %1199 = vmatprep.subr.mxu0 0.0
        %1200 = vmatpush2.xpose.msra.mxu0 0.0
        %1201 = vmatprep.subr.mxu0 0.0
        %1202 = vmatpush2.xpose.msra.mxu0 0.0
        %1203 = vmatprep.subr.mxu0 0.0
        %1204 = vmatpush2.xpose.msra.mxu0 0.0
        %1205 = vmatprep.subr.mxu0 0.0
        %1206 = vmatpush2.xpose.msra.mxu0 0.0
        %1207 = vmatprep.mubr.f32.mxu0 0.0
        %1208 = vmatmul.mubr.f32.gmra.mxu0 %v597
        %v1209 = vpop.f32.mrf.mxu0
        %v1210 = vadd.f32 0.0, %v1209
        %v1211 = vpop.f32.mrf.mxu0
        %1212 = vmatprep.mubr.f32.mxu0 0.0
        %1213 = vmatmul.mubr.f32.gmra.mxu0 %v601
        %v1214 = vpop.f32.mrf.mxu0
        %v1215 = vadd.f32 0.0, %v1214
        %v1216 = vpop.f32.mrf.mxu0
        %1217 = vdwg.mxu0
        %v1218 = vlaneseq
        %v1219 = vshrl.u32 %v1218, 7
        %v1220 = vsub.s32 0, %v1219
        %v1221 = vrot.slane %v555, %v1220
        %v1222 = vsub.f32 %v1210, %v1221
        %v1223 = vsub.f32 %v1215, %v1221
        %v1224 = vsel %vm684, %v1222, -inf
        %1225 = vmax.xlane.f32.xlu0 %v1224
        %v1226 = vpop.xlane.xlu0 %1225
        %v1227 = vsel %vm684, %v1223, -inf
        %1228 = vmax.xlane.f32.xlu0 %v1227
        %v1229 = vpop.xlane.xlu0 %1228
        %v1230 = vsub.f32 %v1222, %v1226
        %v1231 = vsub.f32 %v1223, %v1229
        %v1232 = vmul.f32 %v1230, 1.442695
        %v1233 = vpow.pop %v1232
        %v1234 = vmul.f32 %v1231, 1.442695
        %v1235 = vpow.pop %v1234
        %v1236 = vsel %vm684, %v1233, 0.0
        %1237 = vadd.xlane.f32.xlu0 %v1236
        %v1238 = vpop.xlane.xlu0 %1237
        %v1239 = vsel %vm684, %v1235, 0.0
        %1240 = vadd.xlane.f32.xlu0 %v1239
        %v1241 = vpop.xlane.xlu0 %1240
        %v1243 = vsel %vm684, %v1233, 0
        %v1246 = vsel %vm684, %v1235, 0
        %1248 = vmatprep.subr.mxu0 0.0
        %1249 = vmatpush1.msra.mxu0 0.0
        %1250 = vmatprep.subr.mxu0 0.0
        %1251 = vmatpush1.msra.mxu0 0.0
        %1252 = vmatprep.subr.mxu0 0.0
        %1253 = vmatpush1.msra.mxu0 0.0
        %1254 = vmatprep.subr.mxu0 0.0
        %1255 = vmatpush1.msra.mxu0 0.0
        %1256 = vmatprep.subr.mxu0 0.0
        %1257 = vmatpush1.msra.mxu0 0.0
        %1258 = vmatprep.subr.mxu0 0.0
        %1259 = vmatpush1.msra.mxu0 0.0
        %1260 = vmatprep.subr.mxu0 0.0
        %1261 = vmatpush1.msra.mxu0 0.0
        %1262 = vmatprep.subr.mxu0 0.0
        %1263 = vmatpush1.msra.mxu0 0.0
        %1264 = vmatprep.subr.mxu0 0.0
        %1265 = vmatpush1.msra.mxu0 0.0
        %1266 = vmatprep.subr.mxu0 0.0
        %1267 = vmatpush1.msra.mxu0 0.0
        %1268 = vmatprep.subr.mxu0 0.0
        %1269 = vmatpush1.msra.mxu0 0.0
        %1270 = vmatprep.subr.mxu0 0.0
        %1271 = vmatpush1.msra.mxu0 0.0
        %1272 = vmatprep.subr.mxu0 0.0
        %1273 = vmatpush1.msra.mxu0 0.0
        %1274 = vmatprep.subr.mxu0 0.0
        %1275 = vmatpush1.msra.mxu0 0.0
        %1276 = vmatprep.subr.mxu0 0.0
        %1277 = vmatpush1.msra.mxu0 %v261
        %1278 = vmatprep.subr.mxu0 0.0
        %1279 = vmatpush1.msra.mxu0 %v260
        %1280 = vmatprep.subr.mxu0 0.0
        %1281 = vmatpush2.msra.mxu0 0.0
        %1282 = vmatprep.subr.mxu0 0.0
        %1283 = vmatpush2.msra.mxu0 0.0
        %1284 = vmatprep.subr.mxu0 0.0
        %1285 = vmatpush2.msra.mxu0 0.0
        %1286 = vmatprep.subr.mxu0 0.0
        %1287 = vmatpush2.msra.mxu0 0.0
        %1288 = vmatprep.subr.mxu0 0.0
        %1289 = vmatpush2.msra.mxu0 0.0
        %1290 = vmatprep.subr.mxu0 0.0
        %1291 = vmatpush2.msra.mxu0 0.0
        %1292 = vmatprep.subr.mxu0 0.0
        %1293 = vmatpush2.msra.mxu0 0.0
        %1294 = vmatprep.subr.mxu0 0.0
        %1295 = vmatpush2.msra.mxu0 0.0
        %1296 = vmatprep.subr.mxu0 0.0
        %1297 = vmatpush2.msra.mxu0 0.0
        %1298 = vmatprep.subr.mxu0 0.0
        %1299 = vmatpush2.msra.mxu0 0.0
        %1300 = vmatprep.subr.mxu0 0.0
        %1301 = vmatpush2.msra.mxu0 0.0
        %1302 = vmatprep.subr.mxu0 0.0
        %1303 = vmatpush2.msra.mxu0 0.0
        %1304 = vmatprep.subr.mxu0 0.0
        %1305 = vmatpush2.msra.mxu0 0.0
        %1306 = vmatprep.subr.mxu0 0.0
        %1307 = vmatpush2.msra.mxu0 0.0
        %1308 = vmatprep.subr.mxu0 0.0
        %1309 = vmatpush2.msra.mxu0 0.0
        %1310 = vmatprep.subr.mxu0 0.0
        %1311 = vmatpush2.msra.mxu0 0.0
        %1312 = vmatprep.mubr.f32.mxu0 0.0
        %1313 = vmatmul.mubr.f32.gmra.mxu0 %v1243
        %v1314 = vpop.f32.mrf.mxu0
        %v1315 = vadd.f32 0.0, %v1314
        %v1316 = vpop.f32.mrf.mxu0
        %1317 = vmatprep.mubr.f32.mxu0 0.0
        %1318 = vmatmul.mubr.f32.gmra.mxu0 %v1246
        %v1319 = vpop.f32.mrf.mxu0
        %v1320 = vadd.f32 0.0, %v1319
        %v1321 = vpop.f32.mrf.mxu0
        %1322 = vdwg.mxu0
        %v1323 = vrcp.pop %v1238
        %v1324 = vrcp.pop %v1241
        %v1325 = vmul.f32 %v1315, %v1323
        %v1326 = vmul.f32 %v1320, %v1324
        %s1327 = scalar_lea.vmem [#allocation7], 64
        %v1328 = vld [vmem:[%s1327] sm:$0xff]
        %v1329 = vld [vmem:[%s1327 + $0x8] sm:$0xff]
        %v1330 = vld [vmem:[%s1327 + $0x10] sm:$0xff]
        %v1331 = vld [vmem:[%s1327 + $0x18] sm:$0xff]
        %v1333 = vsel %vm278, %v1325, 0
        %v1336 = vsel %vm278, %v1326, 0
        %1338 = vmatprep.subr.mxu0 0.0
        %1339 = vmatpush1.msra.mxu0 0.0
        %1340 = vmatprep.subr.mxu0 0.0
        %1341 = vmatpush1.msra.mxu0 0.0
        %1342 = vmatprep.subr.mxu0 0.0
        %1343 = vmatpush1.msra.mxu0 0.0
        %1344 = vmatprep.subr.mxu0 0.0
        %1345 = vmatpush1.msra.mxu0 0.0
        %1346 = vmatprep.subr.mxu0 0.0
        %1347 = vmatpush1.msra.mxu0 0.0
        %1348 = vmatprep.subr.mxu0 0.0
        %1349 = vmatpush1.msra.mxu0 0.0
        %1350 = vmatprep.subr.mxu0 0.0
        %1351 = vmatpush1.msra.mxu0 0.0
        %1352 = vmatprep.subr.mxu0 0.0
        %1353 = vmatpush1.msra.mxu0 0.0
        %1354 = vmatprep.subr.mxu0 0.0
        %1355 = vmatpush1.msra.mxu0 0.0
        %1356 = vmatprep.subr.mxu0 0.0
        %1357 = vmatpush1.msra.mxu0 0.0
        %1358 = vmatprep.subr.mxu0 0.0
        %1359 = vmatpush1.msra.mxu0 0.0
        %1360 = vmatprep.subr.mxu0 0.0
        %1361 = vmatpush1.msra.mxu0 0.0
        %1362 = vmatprep.subr.mxu0 0.0
        %1363 = vmatpush1.msra.mxu0 %v1331
        %1364 = vmatprep.subr.mxu0 0.0
        %1365 = vmatpush1.msra.mxu0 %v1330
        %1366 = vmatprep.subr.mxu0 0.0
        %1367 = vmatpush1.msra.mxu0 %v1329
        %1368 = vmatprep.subr.mxu0 0.0
        %1369 = vmatpush1.msra.mxu0 %v1328
        %1370 = vmatprep.subr.mxu0 0.0
        %1371 = vmatpush2.msra.mxu0 0.0
        %1372 = vmatprep.subr.mxu0 0.0
        %1373 = vmatpush2.msra.mxu0 0.0
        %1374 = vmatprep.subr.mxu0 0.0
        %1375 = vmatpush2.msra.mxu0 0.0
        %1376 = vmatprep.subr.mxu0 0.0
        %1377 = vmatpush2.msra.mxu0 0.0
        %1378 = vmatprep.subr.mxu0 0.0
        %1379 = vmatpush2.msra.mxu0 0.0
        %1380 = vmatprep.subr.mxu0 0.0
        %1381 = vmatpush2.msra.mxu0 0.0
        %1382 = vmatprep.subr.mxu0 0.0
        %1383 = vmatpush2.msra.mxu0 0.0
        %1384 = vmatprep.subr.mxu0 0.0
        %1385 = vmatpush2.msra.mxu0 0.0
        %1386 = vmatprep.subr.mxu0 0.0
        %1387 = vmatpush2.msra.mxu0 0.0
        %1388 = vmatprep.subr.mxu0 0.0
        %1389 = vmatpush2.msra.mxu0 0.0
        %1390 = vmatprep.subr.mxu0 0.0
        %1391 = vmatpush2.msra.mxu0 0.0
        %1392 = vmatprep.subr.mxu0 0.0
        %1393 = vmatpush2.msra.mxu0 0.0
        %1394 = vmatprep.subr.mxu0 0.0
        %1395 = vmatpush2.msra.mxu0 0.0
        %1396 = vmatprep.subr.mxu0 0.0
        %1397 = vmatpush2.msra.mxu0 0.0
        %1398 = vmatprep.subr.mxu0 0.0
        %1399 = vmatpush2.msra.mxu0 0.0
        %1400 = vmatprep.subr.mxu0 0.0
        %1401 = vmatpush2.msra.mxu0 0.0
        %1402 = vmatprep.mubr.f32.mxu0 0.0
        %1403 = vmatmul.mubr.f32.gmra.mxu0 %v1333
        %v1404 = vpop.f32.mrf.mxu0
        %v1405 = vadd.f32 0.0, %v1404
        %v1406 = vpop.f32.mrf.mxu0
        %1407 = vmatprep.mubr.f32.mxu0 0.0
        %1408 = vmatmul.mubr.f32.gmra.mxu0 %v1336
        %v1409 = vpop.f32.mrf.mxu0
        %v1410 = vadd.f32 0.0, %v1409
        %v1411 = vpop.f32.mrf.mxu0
        %1412 = vdwg.mxu0
        %v1413 = vadd.f32 %v1135, %v1405
        %v1414 = vadd.f32 %v1140, %v1410
        %1415 = vmatprep.subr.mxu0 0.0
        %1416 = vmatpush1.xpose.msra.mxu0 0.0
        %1417 = vmatprep.subr.mxu0 0.0
        %1418 = vmatpush1.xpose.msra.mxu0 0.0
        %1419 = vmatprep.subr.mxu0 0.0
        %1420 = vmatpush1.xpose.msra.mxu0 0.0
        %1421 = vmatprep.subr.mxu0 0.0
        %1422 = vmatpush1.xpose.msra.mxu0 0.0
        %1423 = vmatprep.subr.mxu0 0.0
        %1424 = vmatpush1.xpose.msra.mxu0 0.0
        %1425 = vmatprep.subr.mxu0 0.0
        %1426 = vmatpush1.xpose.msra.mxu0 0.0
        %1427 = vmatprep.subr.mxu0 0.0
        %1428 = vmatpush1.xpose.msra.mxu0 0.0
        %1429 = vmatprep.subr.mxu0 0.0
        %1430 = vmatpush1.xpose.msra.mxu0 0.0
        %1431 = vmatprep.subr.mxu0 0.0
        %1432 = vmatpush1.xpose.msra.mxu0 0.0
        %1433 = vmatprep.subr.mxu0 0.0
        %1434 = vmatpush1.xpose.msra.mxu0 0.0
        %1435 = vmatprep.subr.mxu0 0.0
        %1436 = vmatpush1.xpose.msra.mxu0 0.0
        %1437 = vmatprep.subr.mxu0 0.0
        %1438 = vmatpush1.xpose.msra.mxu0 0.0
        %1439 = vmatprep.subr.mxu0 0.0
        %1440 = vmatpush1.xpose.msra.mxu0 0.0
        %1441 = vmatprep.subr.mxu0 0.0
        %1442 = vmatpush1.xpose.msra.mxu0 0.0
        %1443 = vmatprep.subr.mxu0 0.0
        %1444 = vmatpush1.xpose.msra.mxu0 %v437
        %1445 = vmatprep.subr.mxu0 0.0
        %1446 = vmatpush1.xpose.msra.mxu0 %v431
        %1447 = vmatprep.subr.mxu0 0.0
        %1448 = vmatpush2.xpose.msra.mxu0 0.0
        %1449 = vmatprep.subr.mxu0 0.0
        %1450 = vmatpush2.xpose.msra.mxu0 0.0
        %1451 = vmatprep.subr.mxu0 0.0
        %1452 = vmatpush2.xpose.msra.mxu0 0.0
        %1453 = vmatprep.subr.mxu0 0.0
        %1454 = vmatpush2.xpose.msra.mxu0 0.0
        %1455 = vmatprep.subr.mxu0 0.0
        %1456 = vmatpush2.xpose.msra.mxu0 0.0
        %1457 = vmatprep.subr.mxu0 0.0
        %1458 = vmatpush2.xpose.msra.mxu0 0.0
        %1459 = vmatprep.subr.mxu0 0.0
        %1460 = vmatpush2.xpose.msra.mxu0 0.0
        %1461 = vmatprep.subr.mxu0 0.0
        %1462 = vmatpush2.xpose.msra.mxu0 0.0
        %1463 = vmatprep.subr.mxu0 0.0
        %1464 = vmatpush2.xpose.msra.mxu0 0.0
        %1465 = vmatprep.subr.mxu0 0.0
        %1466 = vmatpush2.xpose.msra.mxu0 0.0
        %1467 = vmatprep.subr.mxu0 0.0
        %1468 = vmatpush2.xpose.msra.mxu0 0.0
        %1469 = vmatprep.subr.mxu0 0.0
        %1470 = vmatpush2.xpose.msra.mxu0 0.0
        %1471 = vmatprep.subr.mxu0 0.0
        %1472 = vmatpush2.xpose.msra.mxu0 0.0
        %1473 = vmatprep.subr.mxu0 0.0
        %1474 = vmatpush2.xpose.msra.mxu0 0.0
        %1475 = vmatprep.subr.mxu0 0.0
        %1476 = vmatpush2.xpose.msra.mxu0 0.0
        %1477 = vmatprep.subr.mxu0 0.0
        %1478 = vmatpush2.xpose.msra.mxu0 0.0
        %1479 = vmatprep.mubr.f32.mxu0 0.0
        %1480 = vmatmul.mubr.f32.gmra.mxu0 %v598
        %v1481 = vpop.f32.mrf.mxu0
        %v1482 = vadd.f32 0.0, %v1481
        %v1483 = vpop.f32.mrf.mxu0
        %1484 = vmatprep.mubr.f32.mxu0 0.0
        %1485 = vmatmul.mubr.f32.gmra.mxu0 %v602
        %v1486 = vpop.f32.mrf.mxu0
        %v1487 = vadd.f32 0.0, %v1486
        %v1488 = vpop.f32.mrf.mxu0
        %1489 = vdwg.mxu0
        %v1490 = vlaneseq
        %v1491 = vshrl.u32 %v1490, 7
        %v1492 = vsub.s32 0, %v1491
        %v1493 = vrot.slane %v594, %v1492
        %v1494 = vsub.f32 %v1482, %v1493
        %v1495 = vsub.f32 %v1487, %v1493
        %v1496 = vsel %vm684, %v1494, -inf
        %1497 = vmax.xlane.f32.xlu0 %v1496
        %v1498 = vpop.xlane.xlu0 %1497
        %v1499 = vsel %vm684, %v1495, -inf
        %1500 = vmax.xlane.f32.xlu0 %v1499
        %v1501 = vpop.xlane.xlu0 %1500
        %v1502 = vsub.f32 %v1494, %v1498
        %v1503 = vsub.f32 %v1495, %v1501
        %v1504 = vmul.f32 %v1502, 1.442695
        %v1505 = vpow.pop %v1504
        %v1506 = vmul.f32 %v1503, 1.442695
        %v1507 = vpow.pop %v1506
        %v1508 = vsel %vm684, %v1505, 0.0
        %1509 = vadd.xlane.f32.xlu0 %v1508
        %v1510 = vpop.xlane.xlu0 %1509
        %v1511 = vsel %vm684, %v1507, 0.0
        %1512 = vadd.xlane.f32.xlu0 %v1511
        %v1513 = vpop.xlane.xlu0 %1512
        %v1515 = vsel %vm684, %v1505, 0
        %v1518 = vsel %vm684, %v1507, 0
        %1520 = vmatprep.subr.mxu0 0.0
        %1521 = vmatpush1.msra.mxu0 0.0
        %1522 = vmatprep.subr.mxu0 0.0
        %1523 = vmatpush1.msra.mxu0 0.0
        %1524 = vmatprep.subr.mxu0 0.0
        %1525 = vmatpush1.msra.mxu0 0.0
        %1526 = vmatprep.subr.mxu0 0.0
        %1527 = vmatpush1.msra.mxu0 0.0
        %1528 = vmatprep.subr.mxu0 0.0
        %1529 = vmatpush1.msra.mxu0 0.0
        %1530 = vmatprep.subr.mxu0 0.0
        %1531 = vmatpush1.msra.mxu0 0.0
        %1532 = vmatprep.subr.mxu0 0.0
        %1533 = vmatpush1.msra.mxu0 0.0
        %1534 = vmatprep.subr.mxu0 0.0
        %1535 = vmatpush1.msra.mxu0 0.0
        %1536 = vmatprep.subr.mxu0 0.0
        %1537 = vmatpush1.msra.mxu0 0.0
        %1538 = vmatprep.subr.mxu0 0.0
        %1539 = vmatpush1.msra.mxu0 0.0
        %1540 = vmatprep.subr.mxu0 0.0
        %1541 = vmatpush1.msra.mxu0 0.0
        %1542 = vmatprep.subr.mxu0 0.0
        %1543 = vmatpush1.msra.mxu0 0.0
        %1544 = vmatprep.subr.mxu0 0.0
        %1545 = vmatpush1.msra.mxu0 0.0
        %1546 = vmatprep.subr.mxu0 0.0
        %1547 = vmatpush1.msra.mxu0 0.0
        %1548 = vmatprep.subr.mxu0 0.0
        %1549 = vmatpush1.msra.mxu0 %v261
        %1550 = vmatprep.subr.mxu0 0.0
        %1551 = vmatpush1.msra.mxu0 %v260
        %1552 = vmatprep.subr.mxu0 0.0
        %1553 = vmatpush2.msra.mxu0 0.0
        %1554 = vmatprep.subr.mxu0 0.0
        %1555 = vmatpush2.msra.mxu0 0.0
        %1556 = vmatprep.subr.mxu0 0.0
        %1557 = vmatpush2.msra.mxu0 0.0
        %1558 = vmatprep.subr.mxu0 0.0
        %1559 = vmatpush2.msra.mxu0 0.0
        %1560 = vmatprep.subr.mxu0 0.0
        %1561 = vmatpush2.msra.mxu0 0.0
        %1562 = vmatprep.subr.mxu0 0.0
        %1563 = vmatpush2.msra.mxu0 0.0
        %1564 = vmatprep.subr.mxu0 0.0
        %1565 = vmatpush2.msra.mxu0 0.0
        %1566 = vmatprep.subr.mxu0 0.0
        %1567 = vmatpush2.msra.mxu0 0.0
        %1568 = vmatprep.subr.mxu0 0.0
        %1569 = vmatpush2.msra.mxu0 0.0
        %1570 = vmatprep.subr.mxu0 0.0
        %1571 = vmatpush2.msra.mxu0 0.0
        %1572 = vmatprep.subr.mxu0 0.0
        %1573 = vmatpush2.msra.mxu0 0.0
        %1574 = vmatprep.subr.mxu0 0.0
        %1575 = vmatpush2.msra.mxu0 0.0
        %1576 = vmatprep.subr.mxu0 0.0
        %1577 = vmatpush2.msra.mxu0 0.0
        %1578 = vmatprep.subr.mxu0 0.0
        %1579 = vmatpush2.msra.mxu0 0.0
        %1580 = vmatprep.subr.mxu0 0.0
        %1581 = vmatpush2.msra.mxu0 0.0
        %1582 = vmatprep.subr.mxu0 0.0
        %1583 = vmatpush2.msra.mxu0 0.0
        %1584 = vmatprep.mubr.f32.mxu0 0.0
        %1585 = vmatmul.mubr.f32.gmra.mxu0 %v1515
        %v1586 = vpop.f32.mrf.mxu0
        %v1587 = vadd.f32 0.0, %v1586
        %v1588 = vpop.f32.mrf.mxu0
        %1589 = vmatprep.mubr.f32.mxu0 0.0
        %1590 = vmatmul.mubr.f32.gmra.mxu0 %v1518
        %v1591 = vpop.f32.mrf.mxu0
        %v1592 = vadd.f32 0.0, %v1591
        %v1593 = vpop.f32.mrf.mxu0
        %1594 = vdwg.mxu0
        %v1595 = vrcp.pop %v1510
        %v1596 = vrcp.pop %v1513
        %v1597 = vmul.f32 %v1587, %v1595
        %v1598 = vmul.f32 %v1592, %v1596
        %s1599 = scalar_lea.vmem [#allocation7], 96
        %v1600 = vld [vmem:[%s1599] sm:$0xff]
        %v1601 = vld [vmem:[%s1599 + $0x8] sm:$0xff]
        %v1602 = vld [vmem:[%s1599 + $0x10] sm:$0xff]
        %v1603 = vld [vmem:[%s1599 + $0x18] sm:$0xff]
        %v1605 = vsel %vm278, %v1597, 0
        %v1608 = vsel %vm278, %v1598, 0
        %1610 = vmatprep.subr.mxu0 0.0
        %1611 = vmatpush1.msra.mxu0 0.0
        %1612 = vmatprep.subr.mxu0 0.0
        %1613 = vmatpush1.msra.mxu0 0.0
        %1614 = vmatprep.subr.mxu0 0.0
        %1615 = vmatpush1.msra.mxu0 0.0
        %1616 = vmatprep.subr.mxu0 0.0
        %1617 = vmatpush1.msra.mxu0 0.0
        %1618 = vmatprep.subr.mxu0 0.0
        %1619 = vmatpush1.msra.mxu0 0.0
        %1620 = vmatprep.subr.mxu0 0.0
        %1621 = vmatpush1.msra.mxu0 0.0
        %1622 = vmatprep.subr.mxu0 0.0
        %1623 = vmatpush1.msra.mxu0 0.0
        %1624 = vmatprep.subr.mxu0 0.0
        %1625 = vmatpush1.msra.mxu0 0.0
        %1626 = vmatprep.subr.mxu0 0.0
        %1627 = vmatpush1.msra.mxu0 0.0
        %1628 = vmatprep.subr.mxu0 0.0
        %1629 = vmatpush1.msra.mxu0 0.0
        %1630 = vmatprep.subr.mxu0 0.0
        %1631 = vmatpush1.msra.mxu0 0.0
        %1632 = vmatprep.subr.mxu0 0.0
        %1633 = vmatpush1.msra.mxu0 0.0
        %1634 = vmatprep.subr.mxu0 0.0
        %1635 = vmatpush1.msra.mxu0 %v1603
        %1636 = vmatprep.subr.mxu0 0.0
        %1637 = vmatpush1.msra.mxu0 %v1602
        %1638 = vmatprep.subr.mxu0 0.0
        %1639 = vmatpush1.msra.mxu0 %v1601
        %1640 = vmatprep.subr.mxu0 0.0
        %1641 = vmatpush1.msra.mxu0 %v1600
        %1642 = vmatprep.subr.mxu0 0.0
        %1643 = vmatpush2.msra.mxu0 0.0
        %1644 = vmatprep.subr.mxu0 0.0
        %1645 = vmatpush2.msra.mxu0 0.0
        %1646 = vmatprep.subr.mxu0 0.0
        %1647 = vmatpush2.msra.mxu0 0.0
        %1648 = vmatprep.subr.mxu0 0.0
        %1649 = vmatpush2.msra.mxu0 0.0
        %1650 = vmatprep.subr.mxu0 0.0
        %1651 = vmatpush2.msra.mxu0 0.0
        %1652 = vmatprep.subr.mxu0 0.0
        %1653 = vmatpush2.msra.mxu0 0.0
        %1654 = vmatprep.subr.mxu0 0.0
        %1655 = vmatpush2.msra.mxu0 0.0
        %1656 = vmatprep.subr.mxu0 0.0
        %1657 = vmatpush2.msra.mxu0 0.0
        %1658 = vmatprep.subr.mxu0 0.0
        %1659 = vmatpush2.msra.mxu0 0.0
        %1660 = vmatprep.subr.mxu0 0.0
        %1661 = vmatpush2.msra.mxu0 0.0
        %1662 = vmatprep.subr.mxu0 0.0
        %1663 = vmatpush2.msra.mxu0 0.0
        %1664 = vmatprep.subr.mxu0 0.0
        %1665 = vmatpush2.msra.mxu0 0.0
        %1666 = vmatprep.subr.mxu0 0.0
        %1667 = vmatpush2.msra.mxu0 0.0
        %1668 = vmatprep.subr.mxu0 0.0
        %1669 = vmatpush2.msra.mxu0 0.0
        %1670 = vmatprep.subr.mxu0 0.0
        %1671 = vmatpush2.msra.mxu0 0.0
        %1672 = vmatprep.subr.mxu0 0.0
        %1673 = vmatpush2.msra.mxu0 0.0
        %1674 = vmatprep.mubr.f32.mxu0 0.0
        %1675 = vmatmul.mubr.f32.gmra.mxu0 %v1605
        %v1676 = vpop.f32.mrf.mxu0
        %v1677 = vadd.f32 0.0, %v1676
        %v1678 = vpop.f32.mrf.mxu0
        %1679 = vmatprep.mubr.f32.mxu0 0.0
        %1680 = vmatmul.mubr.f32.gmra.mxu0 %v1608
        %v1681 = vpop.f32.mrf.mxu0
        %v1682 = vadd.f32 0.0, %v1681
        %v1683 = vpop.f32.mrf.mxu0
        %1684 = vdwg.mxu0
        %v1685 = vadd.f32 %v1413, %v1677
        %v1686 = vadd.f32 %v1414, %v1682
        %v1687 = vld [vmem:[%s3] sm:$0x1]
        %v1689 = vlaneseq
        %v1690 = vshrl.u32 %v1689, 7
        %v1691 = vsub.s32 0, %v1690
        %v1692 = vrot.slane %v1687, %v1691
        %v1694 = vadd.f32 %v1685, %v1692
        %v1695 = vadd.f32 %v1686, %v1692
        %1696 = vst.msk [vmem:[%s258] sm:$0xff] %vm278, %v1694
        %1697 = vst.msk [vmem:[%s258 + $0x8] sm:$0xff] %vm278, %v1695
        %s1698 = sand.u32 %s133, 1
        %s1699 = scalar_lea.sflag [#allocation4], %s1698
        %s1700 = sand.u32 %s133, 1
        %s1701 = smul.addr %s1700, 16
        %s1702 = scalar_lea.vmem [#allocation8], %s1701
        // Predicated region
        $region49: #{tpu_custom_call.1} parent=35 // pred_check
          %p1703 = pneg %p143
        $region50: #{tpu_custom_call.1} parent=35 // pred_check_branch
          %1705 = sbr.rel (%p1703) target = $region52
        $region51: #{tpu_custom_call.1} parent=35 // pred_region
          %s1706 = smul.u32 2, %s27
          %s1708 = ssub.s32 256, 256
          %1709 = vsyncadd %s1699, %s1708
          %s1710 = smul.addr %s26, 2
          %s1711 = sadd.s32 %s1706, %s1710
          %s1712 = smul.addr %s1711, 128
          %s1713 = scalar_lea.hbm %s4, %s1712
          %s1714 = sshll.u32 %s1702, 4
          %s1715 = int_to_ptr.vmem [resolvable:$true] %s1714
          %1720 = dma.vmem_to_hbm [thread:$0]  %s1715, 256, %s1713, %s1699, 128, 128, 8
        $region52: #{tpu_custom_call.1} parent=35 // pred_fallthru
          _
      $region36: #{tpu_custom_call.1} parent=5 // pred_fallthru
        _
      %p1721 = scmp.le.s32.totalorder 2, %s17
      // Predicated region
      $region53: #{tpu_custom_call.1} parent=5 // pred_check
        %p1722 = pneg %p1721
      $region54: #{tpu_custom_call.1} parent=5 // pred_check_branch
        %1724 = sbr.rel (%p1722) target = $region56
      $region55: #{tpu_custom_call.1} parent=5 // pred_region
        %s1725 = ssub.s32 %s17, 2
        // Predicated region
        $region57: #{tpu_custom_call.1} parent=55 // pred_check
          %p1726 = pneg %p149
        $region58: #{tpu_custom_call.1} parent=55 // pred_check_branch
          %1728 = sbr.rel (%p1726) target = $region60
        $region59: #{tpu_custom_call.1} parent=55 // pred_region
          %s1729 = sand.u32 %s134, 1
          %s1730 = scalar_lea.sflag [#allocation4], %s1729
          %s1731 = sand.u32 %s134, 1
          %s1732 = smul.addr %s1731, 16
          %s1733 = scalar_lea.vmem [#allocation8], %s1732
          %1734 = dma.done %s1730, 256
        $region60: #{tpu_custom_call.1} parent=55 // pred_fallthru
          _
      $region56: #{tpu_custom_call.1} parent=5 // pred_fallthru
        _
    $region6: #{tpu_custom_call.1} parent=1 // loop_footer
      %s21 = sadd.s32 1, %s17
    $region7: #{tpu_custom_call.1} parent=1 // loop_footer_branch
      %16 = sbr.rel target = $region3
    $region8: #{tpu_custom_call.1} parent=1 // loop_exit
      _
    %1735 = vsyncpa [#allocation3], 1
    %s1736 = scalar_lea.sflag [#allocation3], 1
    %1737 = vsyncpa %s1736, 1
    %1738 = vsyncpa [#allocation6], 1
    %1739 = vsyncpa [#allocation4], 1
    %s1740 = scalar_lea.sflag [#allocation4], 1
    %1741 = vsyncpa %s1740, 1

</llo_original>
